<compile_context>
chip_gen: v7x
topology: tpu7x:2x2x1
jax: 0.10.0
libtpu: 0.0.40
codegen_flags: <defaults>
</compile_context>

<pallas_src>
import functools

import jax
import jax.numpy as jnp
import numpy as np
from jax import lax
from jax.experimental import pallas as pl
from jax.experimental.pallas import tpu as pltpu

LN_EPS = 1e-5
LANE = 128

PARAM_ORDER = [
    "w_in", "b_in", "g1", "be1",
    "w_h1", "b_h1", "g2", "be2",
    "w_ih", "w_hh", "b_lstm",
    "g3", "be3",
    "w_hid", "b_hid", "g4", "be4",
    "w_pr", "b_pr",
]


def _layernorm(v, g, b):
    mu = jnp.mean(v, axis=-1, keepdims=True)
    var = jnp.mean((v - mu) ** 2, axis=-1, keepdims=True)
    return (v - mu) * lax.rsqrt(var + LN_EPS) * g + b


def _swish(v):
    return v * jax.nn.sigmoid(v)


def selfsup_kernel(mask_ref,                          # (1, T*Bt, 1)   f32
                   x_ref,                             # (1, T*Bt, D_in) bf16
                   w_in, b_in, g1, be1,
                   w_h1, b_h1, g2, be2,
                   w_ih, w_hh, b_lstm,                # gate order (i,f,o,g), H2P stride
                   g3, be3,
                   w_hid, b_hid, g4, be4,
                   w_pr, b_pr,                        # padded to OUT_PAD lanes
                   out_ref,                           # (1, T*Bt, OUT_PAD) f32
                   gates_scr, lstm_scr,               # VMEM (T*Bt, 4*H2P), (T*Bt, H2P)
                   *, bt, seq_len, h2, h2_pad):
    bf16 = jnp.bfloat16
    f32 = jnp.float32

    x = x_ref[0]                                      # (T*Bt, D_in), rows ordered (t, b)

    # --- front MLP: Linear -> LN -> swish, twice (M = T*Bt bf16 matmuls) ----
    h = _swish(_layernorm(
        jnp.dot(x, w_in[...], preferred_element_type=f32) + b_in[...],
        g1[...], be1[...]))
    h = _swish(_layernorm(
        jnp.dot(h.astype(bf16), w_h1[...], preferred_element_type=f32) + b_h1[...],
        g2[...], be2[...]))                           # (T*Bt, H)

    # --- LSTM: precompute all input gates once, stage in VMEM scratch -------
    gates_scr[...] = (jnp.dot(h.astype(bf16), w_ih[...], preferred_element_type=f32)
                      + b_lstm[...])                  # (T*Bt, 4*H2P)

    def step(t, carry):
        h_prev, c_prev = carry                        # (Bt, H2P) f32, in vregs
        r0 = pl.multiple_of(t * bt, bt)
        g_t = gates_scr[pl.ds(r0, bt), :] + jnp.dot(
            h_prev.astype(bf16), w_hh[...], preferred_element_type=f32)  # (Bt, 4*H2P)
        # gate order (i | f | o | g): one sigmoid dispatch on a contiguous,
        # lane-aligned 3*H2P slice, one tanh on the trailing H2P slice.
        sig = jax.nn.sigmoid(g_t[:, 0:3 * h2_pad])
        i_g = sig[:, 0:h2_pad]
        f_g = sig[:, h2_pad:2 * h2_pad]
        o_g = sig[:, 2 * h2_pad:3 * h2_pad]
        c_g = jnp.tanh(g_t[:, 3 * h2_pad:4 * h2_pad])
        c_new = f_g * c_prev + i_g * c_g
        h_new = o_g * jnp.tanh(c_new)
        lstm_scr[pl.ds(r0, bt), :] = h_new            # full-vreg, unmasked store
        return h_new, c_new

    h0 = jnp.zeros((bt, h2_pad), f32)
    c0 = jnp.zeros((bt, h2_pad), f32)
    lax.fori_loop(0, seq_len, step, (h0, c0),
                  unroll=(True if seq_len <= 32 else 8))

    # packed-sequence semantics: zero outputs past lengths, one VPU pass.
    ls = lstm_scr[...][:, 0:h2] * mask_ref[0]         # (T*Bt, H2)

    # --- head: LN -> swish, Linear -> LN -> swish, Linear (lane-dense) ------
    h = _swish(_layernorm(ls, g3[...], be3[...]))
    h = _swish(_layernorm(
        jnp.dot(h.astype(bf16), w_hid[...], preferred_element_type=f32) + b_hid[...],
        g4[...], be4[...]))
    out = jnp.dot(h.astype(bf16), w_pr[...], preferred_element_type=f32) + b_pr[...]
    out_ref[0] = out                                  # (T*Bt, OUT_PAD) unmasked store


def _round_up(x, m):
    return ((x + m - 1) // m) * m


def _round_down8(x):
    return max(8, (x // 8) * 8)


def _choose_bt(batch, seq_len, h2_pad):
    b8 = _round_up(batch, 8)
    bt = min(256, b8)                                        # MXU row-fill target
    # keep the fori_loop carries (h, c) register-resident: 2*Bt*H2P*4B <= ~96 KiB
    bt = min(bt, _round_down8((96 * 1024) // (2 * h2_pad * 4)))
    # keep gates + lstm VMEM scratch under ~20 MiB (portable to v7x's 64 MiB VMEM)
    bt = min(bt, _round_down8((20 * 1024 * 1024) // (seq_len * 5 * h2_pad * 4)))
    # megacore: keep >= 2 batch groups whenever the batch allows (v7x: 2 TCs/chip)
    if b8 >= 16:
        bt = min(bt, _round_down8(b8 // 2))
    return max(8, bt)


def _prep_gates(w, h2, h2_pad):
    """(…,4*H2) in PyTorch (i,f,g,o) order -> (…,4*H2P) in (i,f,o,g) order,
    each gate block zero-padded from H2 to H2P lanes (lane-aligned slices)."""
    i = w[..., 0:h2]
    f = w[..., h2:2 * h2]
    g = w[..., 2 * h2:3 * h2]
    o = w[..., 3 * h2:4 * h2]
    pad = [(0, 0)] * (w.ndim - 1) + [(0, h2_pad - h2)]
    return jnp.concatenate([jnp.pad(blk, pad) for blk in (i, f, o, g)], axis=-1)


@jax.jit
def self_supervised_forward(arrays, lengths, params):
    B, T, D_in = arrays.shape
    H2 = params["w_hh"].shape[0]
    H2P = _round_up(H2, LANE)
    OUT = params["w_pr"].shape[1]
    OUT_PAD = _round_up(OUT, LANE)

    Bt = _choose_bt(B, T, H2P)
    B_pad = _round_up(B, Bt)
    G = B_pad // Bt

    bf16 = jnp.bfloat16

    # ---- repack activations: (B, T, D) -> (G, T*Bt, D), row order (t, b) ----
    # bf16 halves the HBM traffic of this copy and of the x input block.
    x = jnp.pad(arrays.astype(bf16), ((0, B_pad - B), (0, 0), (0, 0)))
    x = x.transpose(1, 0, 2).reshape(T, G, Bt, D_in).transpose(1, 0, 2, 3)
    x = x.reshape(G, T * Bt, D_in)
    # TODO(synk): the (b,t)<->(t,b) repack/unpack copies could be removed with a
    # sublane-strided pl.ds(t, Bt, stride=T) access pattern inside the kernel.

    # ---- precompute the length mask (padded rows get length 0) -------------
    lens = jnp.pad(lengths.astype(jnp.int32), (0, B_pad - B))
    mask = (jnp.arange(T, dtype=jnp.int32)[:, None] < lens[None, :]).astype(jnp.float32)
    mask = mask.reshape(T, G, Bt).transpose(1, 0, 2).reshape(G, T * Bt, 1)

    # ---- weight prep (trace time): gate reorder/pad, lane-dense head, bf16 --
    pp = dict(params)
    pp["w_ih"] = _prep_gates(params["w_ih"], H2, H2P).astype(bf16)
    w_hh_rowpad = jnp.pad(params["w_hh"], ((0, H2P - H2), (0, 0)))
    pp["w_hh"] = _prep_gates(w_hh_rowpad, H2, H2P).astype(bf16)
    pp["b_lstm"] = _prep_gates(params["b_lstm"], H2, H2P)
    pp["w_pr"] = jnp.pad(params["w_pr"], ((0, 0), (0, OUT_PAD - OUT))).astype(bf16)
    pp["b_pr"] = jnp.pad(params["b_pr"], ((0, 0), (0, OUT_PAD - OUT)))
    for k in ("w_in", "w_h1", "w_hid"):
        pp[k] = params[k].astype(bf16)
    weights = [pp[k] for k in PARAM_ORDER]

    def per_group(g):
        return (g, 0, 0)

    def const_map(ndim):
        return lambda g: (0,) * ndim

    in_specs = [pl.BlockSpec((1, T * Bt, 1), per_group),
                pl.BlockSpec((1, T * Bt, D_in), per_group)]
    in_specs += [pl.BlockSpec(w.shape, const_map(w.ndim)) for w in weights]

    # ---- VMEM budget derived from the actual buffers (+ headroom) ----------
    scr_bytes = T * Bt * (4 * H2P + H2P) * 4
    io_bytes = 2 * T * Bt * (D_in * 2 + 1 * 4 + OUT_PAD * 4)   # double-buffered blocks
    w_bytes = 2 * sum(int(np.prod(w.shape)) * w.dtype.itemsize for w in weights)
    vmem_limit = int(min(64 * 2**20, max(16 * 2**20, 2 * (scr_bytes + io_bytes + w_bytes))))

    grid_spec = pltpu.PrefetchScalarGridSpec(
        num_scalar_prefetch=0,
        grid=(G,),
        in_specs=in_specs,
        out_specs=pl.BlockSpec((1, T * Bt, OUT_PAD), per_group),
        scratch_shapes=[
            pltpu.VMEM((T * Bt, 4 * H2P), jnp.float32),   # precomputed input gates
            pltpu.VMEM((T * Bt, H2P), jnp.float32),       # LSTM outputs
        ],
    )

    kernel = functools.partial(selfsup_kernel, bt=Bt, seq_len=T, h2=H2, h2_pad=H2P)
    out = pl.pallas_call(
        kernel,
        out_shape=jax.ShapeDtypeStruct((G, T * Bt, OUT_PAD), jnp.float32),
        grid_spec=grid_spec,
        compiler_params=pltpu.CompilerParams(
            dimension_semantics=("parallel",),
            vmem_limit_bytes=vmem_limit),
    )(mask, x, *weights)

    # ---- unpack: (G, T*Bt, OUT_PAD) -> (B, T, OUT) --------------------------
    out = out.reshape(G, T, Bt, OUT_PAD).transpose(1, 0, 2, 3)
    out = out.reshape(T, B_pad, OUT_PAD)[:, :B, :OUT].transpose(1, 0, 2)
    return out


# ---------------------------------------------------------------------------
# Deterministic parameter initialization (shapes dictated by __init__).
# Gate layout of w_ih / w_hh / b_lstm follows PyTorch: (i, f, g, o).
# ---------------------------------------------------------------------------
def init_params(key, input_dim, hidden_dim, output_dim):
    hh = hidden_dim // 2
    H2 = hidden_dim * 2  # LSTM hidden size (ln3 is LayerNorm(2*hidden_dim))
    keys = jax.random.split(key, 8)

    def lin(k, fan_in, fan_out):
        bound = 1.0 / np.sqrt(fan_in)
        kw, kb = jax.random.split(k)
        w = jax.random.uniform(kw, (fan_in, fan_out), jnp.float32, -bound, bound)
        b = jax.random.uniform(kb, (1, fan_out), jnp.float32, -bound, bound)
        return w, b

    p = {}
    p["w_in"], p["b_in"] = lin(keys[0], input_dim, hh)
    p["g1"], p["be1"] = jnp.ones((1, hh), jnp.float32), jnp.zeros((1, hh), jnp.float32)
    p["w_h1"], p["b_h1"] = lin(keys[1], hh, hidden_dim)
    p["g2"], p["be2"] = jnp.ones((1, hidden_dim), jnp.float32), jnp.zeros((1, hidden_dim), jnp.float32)
    # LSTM (feature_dim == hidden_dim feeds the LSTM); gate order i, f, g, o.
    p["w_ih"], b_ih = lin(keys[2], hidden_dim, 4 * H2)
    p["w_hh"], b_hh = lin(keys[3], H2, 4 * H2)
    p["b_lstm"] = b_ih + b_hh
    p["g3"], p["be3"] = jnp.ones((1, H2), jnp.float32), jnp.zeros((1, H2), jnp.float32)
    p["w_hid"], p["b_hid"] = lin(keys[4], H2, hidden_dim)
    p["g4"], p["be4"] = jnp.ones((1, hidden_dim), jnp.float32), jnp.zeros((1, hidden_dim), jnp.float32)
    p["w_pr"], p["b_pr"] = lin(keys[5], hidden_dim, output_dim)
    return p


# ---------------------------------------------------------------------------
# Pure-JAX f32 reference (same math) for a correctness sanity check.
# ---------------------------------------------------------------------------
def reference_forward(arrays, lengths, params):
    p = params
    H2 = p["w_hh"].shape[0]

    def ln(v, g, b):
        mu = v.mean(-1, keepdims=True)
        var = ((v - mu) ** 2).mean(-1, keepdims=True)
        return (v - mu) / jnp.sqrt(var + LN_EPS) * g + b

    sw = lambda v: v * jax.nn.sigmoid(v)

    h = sw(ln(arrays @ p["w_in"] + p["b_in"], p["g1"], p["be1"]))
    h = sw(ln(h @ p["w_h1"] + p["b_h1"], p["g2"], p["be2"]))          # (B, T, H)

    gates_x = h @ p["w_ih"] + p["b_lstm"]                             # (B, T, 4H2)
    gx = jnp.transpose(gates_x, (1, 0, 2))                            # (T, B, 4H2)
    B, T = arrays.shape[0], arrays.shape[1]

    def step(carry, inp):
        hp, cp = carry
        gx_t, t = inp
        g = gx_t + hp @ p["w_hh"]
        i_g = jax.nn.sigmoid(g[:, 0:H2])
        f_g = jax.nn.sigmoid(g[:, H2:2 * H2])
        c_g = jnp.tanh(g[:, 2 * H2:3 * H2])
        o_g = jax.nn.sigmoid(g[:, 3 * H2:4 * H2])
        c_n = f_g * cp + i_g * c_g
        h_n = o_g * jnp.tanh(c_n)
        out = jnp.where((t < lengths)[:, None], h_n, 0.0)
        return (h_n, c_n), out

    h0 = jnp.zeros((B, H2), jnp.float32)
    c0 = jnp.zeros((B, H2), jnp.float32)
    _, outs = lax.scan(step, (h0, c0), (gx, jnp.arange(T)))
    ls = jnp.transpose(outs, (1, 0, 2))                               # (B, T, H2)

    h = sw(ln(ls, p["g3"], p["be3"]))
    h = sw(ln(h @ p["w_hid"] + p["b_hid"], p["g4"], p["be4"]))
    return h @ p["w_pr"] + p["b_pr"]


if __name__ == "__main__":
    # Small shapes consistent with the module: B=2, T=8 (seq), input_dim=16,
    # hidden_dim=32 (so H/2=16, LSTM hidden=64), output_dim=20 (len(dic)).
    B, T = 2, 8
    INPUT_DIM, HIDDEN_DIM, OUTPUT_DIM = 16, 32, 20

    key = jax.random.PRNGKey(0)
    k_x, k_p = jax.random.split(key)
    arrays = jax.random.normal(k_x, (B, T, INPUT_DIM), jnp.float32)
    lengths = jnp.array([T, 5], dtype=jnp.int32)
    params = init_params(k_p, INPUT_DIM, HIDDEN_DIM, OUTPUT_DIM)

    out = self_supervised_forward(arrays, lengths, params)
    out = jax.block_until_ready(out)

    ref = jax.block_until_ready(reference_forward(arrays, lengths, params))
    # Tolerance loosened vs. the pure-f32 version: MXU operands are bf16
    # (f32 accumulation), per the performance review.
    np.testing.assert_allclose(np.asarray(out), np.asarray(ref),
                               rtol=3e-2, atol=3e-2)

    # TODO(synk): deeppbs.BatchLSTM source is unavailable; implemented as a
    # standard unidirectional LSTM whose outputs are zero-padded past `lengths`
    # (hidden/cell state keeps evolving over padded steps, matching the
    # reference above rather than pack_padded_sequence state-freezing).
    print("KERNEL_OK")
</pallas_src>

<mosaic_0001>
module attributes {stable_mosaic.version = 11 : i64} {
  func.func @selfsup_kernel(%arg0: i32, %arg1: memref<1x64x1xf32, #tpu.memory_space<vmem>>, %arg2: memref<1x64x16xbf16, #tpu.memory_space<vmem>>, %arg3: memref<16x16xbf16, #tpu.memory_space<vmem>>, %arg4: memref<1x16xf32, #tpu.memory_space<vmem>>, %arg5: memref<1x16xf32, #tpu.memory_space<vmem>>, %arg6: memref<1x16xf32, #tpu.memory_space<vmem>>, %arg7: memref<16x32xbf16, #tpu.memory_space<vmem>>, %arg8: memref<1x32xf32, #tpu.memory_space<vmem>>, %arg9: memref<1x32xf32, #tpu.memory_space<vmem>>, %arg10: memref<1x32xf32, #tpu.memory_space<vmem>>, %arg11: memref<32x512xbf16, #tpu.memory_space<vmem>>, %arg12: memref<128x512xbf16, #tpu.memory_space<vmem>>, %arg13: memref<1x512xf32, #tpu.memory_space<vmem>>, %arg14: memref<1x64xf32, #tpu.memory_space<vmem>>, %arg15: memref<1x64xf32, #tpu.memory_space<vmem>>, %arg16: memref<64x32xbf16, #tpu.memory_space<vmem>>, %arg17: memref<1x32xf32, #tpu.memory_space<vmem>>, %arg18: memref<1x32xf32, #tpu.memory_space<vmem>>, %arg19: memref<1x32xf32, #tpu.memory_space<vmem>>, %arg20: memref<32x128xbf16, #tpu.memory_space<vmem>>, %arg21: memref<1x128xf32, #tpu.memory_space<vmem>>, %arg22: memref<1x64x128xf32, #tpu.memory_space<vmem>>, %arg23: memref<64x512xf32, #tpu.memory_space<vmem>>, %arg24: memref<64x128xf32, #tpu.memory_space<vmem>>) attributes {dimension_semantics = [#tpu.dimension_semantics<parallel>], iteration_bounds = array<i64: 1>, scalar_prefetch = 0 : i64, scratch_operands = 2 : i64, tpu.core_type = #tpu.core_type<tc>, window_params = [{transform_indices = @transform_0, window_bounds = array<i64: 1, 64, 1>}, {transform_indices = @transform_1, window_bounds = array<i64: 1, 64, 16>}, {pipeline_mode = #tpu.pipeline_mode<synchronous>, transform_indices = @transform_2, window_bounds = array<i64: 16, 16>}, {pipeline_mode = #tpu.pipeline_mode<synchronous>, transform_indices = @transform_3, window_bounds = array<i64: 1, 16>}, {pipeline_mode = #tpu.pipeline_mode<synchronous>, transform_indices = @transform_4, window_bounds = array<i64: 1, 16>}, {pipeline_mode = #tpu.pipeline_mode<synchronous>, transform_indices = @transform_5, window_bounds = array<i64: 1, 16>}, {pipeline_mode = #tpu.pipeline_mode<synchronous>, transform_indices = @transform_6, window_bounds = array<i64: 16, 32>}, {pipeline_mode = #tpu.pipeline_mode<synchronous>, transform_indices = @transform_7, window_bounds = array<i64: 1, 32>}, {pipeline_mode = #tpu.pipeline_mode<synchronous>, transform_indices = @transform_8, window_bounds = array<i64: 1, 32>}, {pipeline_mode = #tpu.pipeline_mode<synchronous>, transform_indices = @transform_9, window_bounds = array<i64: 1, 32>}, {pipeline_mode = #tpu.pipeline_mode<synchronous>, transform_indices = @transform_10, window_bounds = array<i64: 32, 512>}, {pipeline_mode = #tpu.pipeline_mode<synchronous>, transform_indices = @transform_11, window_bounds = array<i64: 128, 512>}, {pipeline_mode = #tpu.pipeline_mode<synchronous>, transform_indices = @transform_12, window_bounds = array<i64: 1, 512>}, {pipeline_mode = #tpu.pipeline_mode<synchronous>, transform_indices = @transform_13, window_bounds = array<i64: 1, 64>}, {pipeline_mode = #tpu.pipeline_mode<synchronous>, transform_indices = @transform_14, window_bounds = array<i64: 1, 64>}, {pipeline_mode = #tpu.pipeline_mode<synchronous>, transform_indices = @transform_15, window_bounds = array<i64: 64, 32>}, {pipeline_mode = #tpu.pipeline_mode<synchronous>, transform_indices = @transform_16, window_bounds = array<i64: 1, 32>}, {pipeline_mode = #tpu.pipeline_mode<synchronous>, transform_indices = @transform_17, window_bounds = array<i64: 1, 32>}, {pipeline_mode = #tpu.pipeline_mode<synchronous>, transform_indices = @transform_18, window_bounds = array<i64: 1, 32>}, {pipeline_mode = #tpu.pipeline_mode<synchronous>, transform_indices = @transform_19, window_bounds = array<i64: 32, 128>}, {pipeline_mode = #tpu.pipeline_mode<synchronous>, transform_indices = @transform_20, window_bounds = array<i64: 1, 128>}, {transform_indices = @transform_21, window_bounds = array<i64: 1, 64, 128>}]} {
    %c0 = arith.constant 0 : index
    %c0_0 = arith.constant 0 : index
    %c0_1 = arith.constant 0 : index
    %0 = vector.load %arg2[%c0, %c0_0, %c0_1] : memref<1x64x16xbf16, #tpu.memory_space<vmem>>, vector<1x64x16xbf16>
    %1 = vector.shape_cast %0 : vector<1x64x16xbf16> to vector<64x16xbf16>
    %c0_2 = arith.constant 0 : index
    %c0_3 = arith.constant 0 : index
    %2 = vector.load %arg3[%c0_2, %c0_3] : memref<16x16xbf16, #tpu.memory_space<vmem>>, vector<16x16xbf16>
    %cst = arith.constant dense<0.000000e+00> : vector<64x16xf32>
    %3 = tpu.matmul %1, %2, %cst {dimension_numbers = #tpu.dot_dimension_numbers<[1], [0], [0], [1], [0, 0, 1, 1], [], []>} : vector<64x16xbf16>, vector<16x16xbf16>, vector<64x16xf32> -> vector<64x16xf32>
    %c0_4 = arith.constant 0 : index
    %c0_5 = arith.constant 0 : index
    %4 = vector.load %arg4[%c0_4, %c0_5] : memref<1x16xf32, #tpu.memory_space<vmem>>, vector<1x16xf32>
    %5 = vector.broadcast %4 : vector<1x16xf32> to vector<64x16xf32>
    %6 = arith.addf %3, %5 : vector<64x16xf32>
    %c0_6 = arith.constant 0 : index
    %c0_7 = arith.constant 0 : index
    %7 = vector.load %arg5[%c0_6, %c0_7] : memref<1x16xf32, #tpu.memory_space<vmem>>, vector<1x16xf32>
    %c0_8 = arith.constant 0 : index
    %c0_9 = arith.constant 0 : index
    %8 = vector.load %arg6[%c0_8, %c0_9] : memref<1x16xf32, #tpu.memory_space<vmem>>, vector<1x16xf32>
    %cst_10 = arith.constant dense<0.000000e+00> : vector<64xf32>
    %9 = vector.multi_reduction <add>, %6, %cst_10 [1] : vector<64x16xf32> to vector<64xf32>
    %10 = vector.shape_cast %9 : vector<64xf32> to vector<64x1xf32>
    %cst_11 = arith.constant 1.600000e+01 : f32
    %11 = vector.broadcast %cst_11 : f32 to vector<64x1xf32>
    %12 = arith.divf %10, %11 : vector<64x1xf32>
    %13 = vector.broadcast %12 : vector<64x1xf32> to vector<64x16xf32>
    %14 = arith.subf %6, %13 : vector<64x16xf32>
    %15 = arith.mulf %14, %14 : vector<64x16xf32>
    %cst_12 = arith.constant dense<0.000000e+00> : vector<64xf32>
    %16 = vector.multi_reduction <add>, %15, %cst_12 [1] : vector<64x16xf32> to vector<64xf32>
    %17 = vector.shape_cast %16 : vector<64xf32> to vector<64x1xf32>
    %cst_13 = arith.constant 1.600000e+01 : f32
    %18 = vector.broadcast %cst_13 : f32 to vector<64x1xf32>
    %19 = arith.divf %17, %18 : vector<64x1xf32>
    %20 = vector.broadcast %12 : vector<64x1xf32> to vector<64x16xf32>
    %21 = arith.subf %6, %20 : vector<64x16xf32>
    %cst_14 = arith.constant 9.99999974E-6 : f32
    %22 = vector.broadcast %cst_14 : f32 to vector<64x1xf32>
    %23 = arith.addf %19, %22 : vector<64x1xf32>
    %24 = math.rsqrt %23 : vector<64x1xf32>
    %25 = vector.broadcast %24 : vector<64x1xf32> to vector<64x16xf32>
    %26 = arith.mulf %21, %25 : vector<64x16xf32>
    %27 = vector.broadcast %7 : vector<1x16xf32> to vector<64x16xf32>
    %28 = arith.mulf %26, %27 : vector<64x16xf32>
    %29 = vector.broadcast %8 : vector<1x16xf32> to vector<64x16xf32>
    %30 = arith.addf %28, %29 : vector<64x16xf32>
    %31 = arith.negf %30 : vector<64x16xf32>
    %32 = math.exp %31 : vector<64x16xf32>
    %cst_15 = arith.constant 1.000000e+00 : f32
    %33 = vector.broadcast %cst_15 : f32 to vector<64x16xf32>
    %34 = arith.addf %33, %32 : vector<64x16xf32>
    %35 = arith.divf %33, %34 : vector<64x16xf32>
    %36 = arith.mulf %30, %35 : vector<64x16xf32>
    %37 = arith.truncf %36 : vector<64x16xf32> to vector<64x16xbf16>
    %c0_16 = arith.constant 0 : index
    %c0_17 = arith.constant 0 : index
    %38 = vector.load %arg7[%c0_16, %c0_17] : memref<16x32xbf16, #tpu.memory_space<vmem>>, vector<16x32xbf16>
    %cst_18 = arith.constant dense<0.000000e+00> : vector<64x32xf32>
    %39 = tpu.matmul %37, %38, %cst_18 {dimension_numbers = #tpu.dot_dimension_numbers<[1], [0], [0], [1], [0, 0, 1, 1], [], []>} : vector<64x16xbf16>, vector<16x32xbf16>, vector<64x32xf32> -> vector<64x32xf32>
    %c0_19 = arith.constant 0 : index
    %c0_20 = arith.constant 0 : index
    %40 = vector.load %arg8[%c0_19, %c0_20] : memref<1x32xf32, #tpu.memory_space<vmem>>, vector<1x32xf32>
    %41 = vector.broadcast %40 : vector<1x32xf32> to vector<64x32xf32>
    %42 = arith.addf %39, %41 : vector<64x32xf32>
    %c0_21 = arith.constant 0 : index
    %c0_22 = arith.constant 0 : index
    %43 = vector.load %arg9[%c0_21, %c0_22] : memref<1x32xf32, #tpu.memory_space<vmem>>, vector<1x32xf32>
    %c0_23 = arith.constant 0 : index
    %c0_24 = arith.constant 0 : index
    %44 = vector.load %arg10[%c0_23, %c0_24] : memref<1x32xf32, #tpu.memory_space<vmem>>, vector<1x32xf32>
    %cst_25 = arith.constant dense<0.000000e+00> : vector<64xf32>
    %45 = vector.multi_reduction <add>, %42, %cst_25 [1] : vector<64x32xf32> to vector<64xf32>
    %46 = vector.shape_cast %45 : vector<64xf32> to vector<64x1xf32>
    %cst_26 = arith.constant 3.200000e+01 : f32
    %47 = vector.broadcast %cst_26 : f32 to vector<64x1xf32>
    %48 = arith.divf %46, %47 : vector<64x1xf32>
    %49 = vector.broadcast %48 : vector<64x1xf32> to vector<64x32xf32>
    %50 = arith.subf %42, %49 : vector<64x32xf32>
    %51 = arith.mulf %50, %50 : vector<64x32xf32>
    %cst_27 = arith.constant dense<0.000000e+00> : vector<64xf32>
    %52 = vector.multi_reduction <add>, %51, %cst_27 [1] : vector<64x32xf32> to vector<64xf32>
    %53 = vector.shape_cast %52 : vector<64xf32> to vector<64x1xf32>
    %cst_28 = arith.constant 3.200000e+01 : f32
    %54 = vector.broadcast %cst_28 : f32 to vector<64x1xf32>
    %55 = arith.divf %53, %54 : vector<64x1xf32>
    %56 = vector.broadcast %48 : vector<64x1xf32> to vector<64x32xf32>
    %57 = arith.subf %42, %56 : vector<64x32xf32>
    %cst_29 = arith.constant 9.99999974E-6 : f32
    %58 = vector.broadcast %cst_29 : f32 to vector<64x1xf32>
    %59 = arith.addf %55, %58 : vector<64x1xf32>
    %60 = math.rsqrt %59 : vector<64x1xf32>
    %61 = vector.broadcast %60 : vector<64x1xf32> to vector<64x32xf32>
    %62 = arith.mulf %57, %61 : vector<64x32xf32>
    %63 = vector.broadcast %43 : vector<1x32xf32> to vector<64x32xf32>
    %64 = arith.mulf %62, %63 : vector<64x32xf32>
    %65 = vector.broadcast %44 : vector<1x32xf32> to vector<64x32xf32>
    %66 = arith.addf %64, %65 : vector<64x32xf32>
    %67 = arith.negf %66 : vector<64x32xf32>
    %68 = math.exp %67 : vector<64x32xf32>
    %cst_30 = arith.constant 1.000000e+00 : f32
    %69 = vector.broadcast %cst_30 : f32 to vector<64x32xf32>
    %70 = arith.addf %69, %68 : vector<64x32xf32>
    %71 = arith.divf %69, %70 : vector<64x32xf32>
    %72 = arith.mulf %66, %71 : vector<64x32xf32>
    %73 = arith.truncf %72 : vector<64x32xf32> to vector<64x32xbf16>
    %c0_31 = arith.constant 0 : index
    %c0_32 = arith.constant 0 : index
    %74 = vector.load %arg11[%c0_31, %c0_32] : memref<32x512xbf16, #tpu.memory_space<vmem>>, vector<32x512xbf16>
    %cst_33 = arith.constant dense<0.000000e+00> : vector<64x512xf32>
    %75 = tpu.matmul %73, %74, %cst_33 {dimension_numbers = #tpu.dot_dimension_numbers<[1], [0], [0], [1], [0, 0, 1, 1], [], []>} : vector<64x32xbf16>, vector<32x512xbf16>, vector<64x512xf32> -> vector<64x512xf32>
    %c0_34 = arith.constant 0 : index
    %c0_35 = arith.constant 0 : index
    %76 = vector.load %arg13[%c0_34, %c0_35] : memref<1x512xf32, #tpu.memory_space<vmem>>, vector<1x512xf32>
    %77 = vector.broadcast %76 : vector<1x512xf32> to vector<64x512xf32>
    %78 = arith.addf %75, %77 : vector<64x512xf32>
    %c0_36 = arith.constant 0 : index
    %c0_37 = arith.constant 0 : index
    %79 = vector.load %arg23[%c0_36, %c0_37] : memref<64x512xf32, #tpu.memory_space<vmem>>, vector<64x512xf32>
    tpu.vector_store %arg23[%c0_36, %c0_37], %78 {strides = array<i32>} : memref<64x512xf32, #tpu.memory_space<vmem>>, vector<64x512xf32>,
    %cst_38 = arith.constant 0.000000e+00 : f32
    %80 = vector.broadcast %cst_38 : f32 to vector<8x128xf32>
    %cst_39 = arith.constant 0.000000e+00 : f32
    %81 = vector.broadcast %cst_39 : f32 to vector<8x128xf32>
    %c0_i32 = arith.constant 0 : i32
    %c8_i32 = arith.constant 8 : i32
    %82 = arith.muli %c0_i32, %c8_i32 : i32
    %83 = tpu.assume_multiple %82, 8 : i32
    %84 = arith.index_cast %83 : i32 to index
    %c0_40 = arith.constant 0 : index
    %85 = vector.load %arg23[%84, %c0_40] : memref<64x512xf32, #tpu.memory_space<vmem>>, vector<8x512xf32>
    %86 = arith.truncf %80 : vector<8x128xf32> to vector<8x128xbf16>
    %c0_41 = arith.constant 0 : index
    %c0_42 = arith.constant 0 : index
    %87 = vector.load %arg12[%c0_41, %c0_42] : memref<128x512xbf16, #tpu.memory_space<vmem>>, vector<128x512xbf16>
    %cst_43 = arith.constant dense<0.000000e+00> : vector<8x512xf32>
    %88 = tpu.matmul %86, %87, %cst_43 {dimension_numbers = #tpu.dot_dimension_numbers<[1], [0], [0], [1], [0, 0, 1, 1], [], []>} : vector<8x128xbf16>, vector<128x512xbf16>, vector<8x512xf32> -> vector<8x512xf32>
    %89 = arith.addf %85, %88 : vector<8x512xf32>
    %90 = vector.extract_strided_slice %89 {offsets = [0, 0], sizes = [8, 384], strides = [1, 1]} : vector<8x512xf32> to vector<8x384xf32>
    %91 = arith.negf %90 : vector<8x384xf32>
    %92 = math.exp %91 : vector<8x384xf32>
    %cst_44 = arith.constant 1.000000e+00 : f32
    %93 = vector.broadcast %cst_44 : f32 to vector<8x384xf32>
    %94 = arith.addf %93, %92 : vector<8x384xf32>
    %95 = arith.divf %93, %94 : vector<8x384xf32>
    %96 = vector.extract_strided_slice %95 {offsets = [0, 0], sizes = [8, 128], strides = [1, 1]} : vector<8x384xf32> to vector<8x128xf32>
    %97 = vector.extract_strided_slice %95 {offsets = [0, 128], sizes = [8, 128], strides = [1, 1]} : vector<8x384xf32> to vector<8x128xf32>
    %98 = vector.extract_strided_slice %95 {offsets = [0, 256], sizes = [8, 128], strides = [1, 1]} : vector<8x384xf32> to vector<8x128xf32>
    %99 = vector.extract_strided_slice %89 {offsets = [0, 384], sizes = [8, 128], strides = [1, 1]} : vector<8x512xf32> to vector<8x128xf32>
    %100 = math.tanh %99 : vector<8x128xf32>
    %101 = arith.mulf %97, %81 : vector<8x128xf32>
    %102 = arith.mulf %96, %100 : vector<8x128xf32>
    %103 = arith.addf %101, %102 : vector<8x128xf32>
    %104 = math.tanh %103 : vector<8x128xf32>
    %105 = arith.mulf %98, %104 : vector<8x128xf32>
    %106 = arith.index_cast %83 : i32 to index
    %c0_45 = arith.constant 0 : index
    %107 = vector.load %arg24[%106, %c0_45] : memref<64x128xf32, #tpu.memory_space<vmem>>, vector<8x128xf32>
    tpu.vector_store %arg24[%106, %c0_45], %105 {strides = array<i32>} : memref<64x128xf32, #tpu.memory_space<vmem>>, vector<8x128xf32>,
    %c1_i32 = arith.constant 1 : i32
    %c8_i32_46 = arith.constant 8 : i32
    %108 = arith.muli %c1_i32, %c8_i32_46 : i32
    %109 = tpu.assume_multiple %108, 8 : i32
    %110 = arith.index_cast %109 : i32 to index
    %c0_47 = arith.constant 0 : index
    %111 = vector.load %arg23[%110, %c0_47] : memref<64x512xf32, #tpu.memory_space<vmem>>, vector<8x512xf32>
    %112 = arith.truncf %105 : vector<8x128xf32> to vector<8x128xbf16>
    %c0_48 = arith.constant 0 : index
    %c0_49 = arith.constant 0 : index
    %113 = vector.load %arg12[%c0_48, %c0_49] : memref<128x512xbf16, #tpu.memory_space<vmem>>, vector<128x512xbf16>
    %cst_50 = arith.constant dense<0.000000e+00> : vector<8x512xf32>
    %114 = tpu.matmul %112, %113, %cst_50 {dimension_numbers = #tpu.dot_dimension_numbers<[1], [0], [0], [1], [0, 0, 1, 1], [], []>} : vector<8x128xbf16>, vector<128x512xbf16>, vector<8x512xf32> -> vector<8x512xf32>
    %115 = arith.addf %111, %114 : vector<8x512xf32>
    %116 = vector.extract_strided_slice %115 {offsets = [0, 0], sizes = [8, 384], strides = [1, 1]} : vector<8x512xf32> to vector<8x384xf32>
    %117 = arith.negf %116 : vector<8x384xf32>
    %118 = math.exp %117 : vector<8x384xf32>
    %cst_51 = arith.constant 1.000000e+00 : f32
    %119 = vector.broadcast %cst_51 : f32 to vector<8x384xf32>
    %120 = arith.addf %119, %118 : vector<8x384xf32>
    %121 = arith.divf %119, %120 : vector<8x384xf32>
    %122 = vector.extract_strided_slice %121 {offsets = [0, 0], sizes = [8, 128], strides = [1, 1]} : vector<8x384xf32> to vector<8x128xf32>
    %123 = vector.extract_strided_slice %121 {offsets = [0, 128], sizes = [8, 128], strides = [1, 1]} : vector<8x384xf32> to vector<8x128xf32>
    %124 = vector.extract_strided_slice %121 {offsets = [0, 256], sizes = [8, 128], strides = [1, 1]} : vector<8x384xf32> to vector<8x128xf32>
    %125 = vector.extract_strided_slice %115 {offsets = [0, 384], sizes = [8, 128], strides = [1, 1]} : vector<8x512xf32> to vector<8x128xf32>
    %126 = math.tanh %125 : vector<8x128xf32>
    %127 = arith.mulf %123, %103 : vector<8x128xf32>
    %128 = arith.mulf %122, %126 : vector<8x128xf32>
    %129 = arith.addf %127, %128 : vector<8x128xf32>
    %130 = math.tanh %129 : vector<8x128xf32>
    %131 = arith.mulf %124, %130 : vector<8x128xf32>
    %132 = arith.index_cast %109 : i32 to index
    %c0_52 = arith.constant 0 : index
    %133 = vector.load %arg24[%132, %c0_52] : memref<64x128xf32, #tpu.memory_space<vmem>>, vector<8x128xf32>
    tpu.vector_store %arg24[%132, %c0_52], %131 {strides = array<i32>} : memref<64x128xf32, #tpu.memory_space<vmem>>, vector<8x128xf32>,
    %c2_i32 = arith.constant 2 : i32
    %c8_i32_53 = arith.constant 8 : i32
    %134 = arith.muli %c2_i32, %c8_i32_53 : i32
    %135 = tpu.assume_multiple %134, 8 : i32
    %136 = arith.index_cast %135 : i32 to index
    %c0_54 = arith.constant 0 : index
    %137 = vector.load %arg23[%136, %c0_54] : memref<64x512xf32, #tpu.memory_space<vmem>>, vector<8x512xf32>
    %138 = arith.truncf %131 : vector<8x128xf32> to vector<8x128xbf16>
    %c0_55 = arith.constant 0 : index
    %c0_56 = arith.constant 0 : index
    %139 = vector.load %arg12[%c0_55, %c0_56] : memref<128x512xbf16, #tpu.memory_space<vmem>>, vector<128x512xbf16>
    %cst_57 = arith.constant dense<0.000000e+00> : vector<8x512xf32>
    %140 = tpu.matmul %138, %139, %cst_57 {dimension_numbers = #tpu.dot_dimension_numbers<[1], [0], [0], [1], [0, 0, 1, 1], [], []>} : vector<8x128xbf16>, vector<128x512xbf16>, vector<8x512xf32> -> vector<8x512xf32>
    %141 = arith.addf %137, %140 : vector<8x512xf32>
    %142 = vector.extract_strided_slice %141 {offsets = [0, 0], sizes = [8, 384], strides = [1, 1]} : vector<8x512xf32> to vector<8x384xf32>
    %143 = arith.negf %142 : vector<8x384xf32>
    %144 = math.exp %143 : vector<8x384xf32>
    %cst_58 = arith.constant 1.000000e+00 : f32
    %145 = vector.broadcast %cst_58 : f32 to vector<8x384xf32>
    %146 = arith.addf %145, %144 : vector<8x384xf32>
    %147 = arith.divf %145, %146 : vector<8x384xf32>
    %148 = vector.extract_strided_slice %147 {offsets = [0, 0], sizes = [8, 128], strides = [1, 1]} : vector<8x384xf32> to vector<8x128xf32>
    %149 = vector.extract_strided_slice %147 {offsets = [0, 128], sizes = [8, 128], strides = [1, 1]} : vector<8x384xf32> to vector<8x128xf32>
    %150 = vector.extract_strided_slice %147 {offsets = [0, 256], sizes = [8, 128], strides = [1, 1]} : vector<8x384xf32> to vector<8x128xf32>
    %151 = vector.extract_strided_slice %141 {offsets = [0, 384], sizes = [8, 128], strides = [1, 1]} : vector<8x512xf32> to vector<8x128xf32>
    %152 = math.tanh %151 : vector<8x128xf32>
    %153 = arith.mulf %149, %129 : vector<8x128xf32>
    %154 = arith.mulf %148, %152 : vector<8x128xf32>
    %155 = arith.addf %153, %154 : vector<8x128xf32>
    %156 = math.tanh %155 : vector<8x128xf32>
    %157 = arith.mulf %150, %156 : vector<8x128xf32>
    %158 = arith.index_cast %135 : i32 to index
    %c0_59 = arith.constant 0 : index
    %159 = vector.load %arg24[%158, %c0_59] : memref<64x128xf32, #tpu.memory_space<vmem>>, vector<8x128xf32>
    tpu.vector_store %arg24[%158, %c0_59], %157 {strides = array<i32>} : memref<64x128xf32, #tpu.memory_space<vmem>>, vector<8x128xf32>,
    %c3_i32 = arith.constant 3 : i32
    %c8_i32_60 = arith.constant 8 : i32
    %160 = arith.muli %c3_i32, %c8_i32_60 : i32
    %161 = tpu.assume_multiple %160, 8 : i32
    %162 = arith.index_cast %161 : i32 to index
    %c0_61 = arith.constant 0 : index
    %163 = vector.load %arg23[%162, %c0_61] : memref<64x512xf32, #tpu.memory_space<vmem>>, vector<8x512xf32>
    %164 = arith.truncf %157 : vector<8x128xf32> to vector<8x128xbf16>
    %c0_62 = arith.constant 0 : index
    %c0_63 = arith.constant 0 : index
    %165 = vector.load %arg12[%c0_62, %c0_63] : memref<128x512xbf16, #tpu.memory_space<vmem>>, vector<128x512xbf16>
    %cst_64 = arith.constant dense<0.000000e+00> : vector<8x512xf32>
    %166 = tpu.matmul %164, %165, %cst_64 {dimension_numbers = #tpu.dot_dimension_numbers<[1], [0], [0], [1], [0, 0, 1, 1], [], []>} : vector<8x128xbf16>, vector<128x512xbf16>, vector<8x512xf32> -> vector<8x512xf32>
    %167 = arith.addf %163, %166 : vector<8x512xf32>
    %168 = vector.extract_strided_slice %167 {offsets = [0, 0], sizes = [8, 384], strides = [1, 1]} : vector<8x512xf32> to vector<8x384xf32>
    %169 = arith.negf %168 : vector<8x384xf32>
    %170 = math.exp %169 : vector<8x384xf32>
    %cst_65 = arith.constant 1.000000e+00 : f32
    %171 = vector.broadcast %cst_65 : f32 to vector<8x384xf32>
    %172 = arith.addf %171, %170 : vector<8x384xf32>
    %173 = arith.divf %171, %172 : vector<8x384xf32>
    %174 = vector.extract_strided_slice %173 {offsets = [0, 0], sizes = [8, 128], strides = [1, 1]} : vector<8x384xf32> to vector<8x128xf32>
    %175 = vector.extract_strided_slice %173 {offsets = [0, 128], sizes = [8, 128], strides = [1, 1]} : vector<8x384xf32> to vector<8x128xf32>
    %176 = vector.extract_strided_slice %173 {offsets = [0, 256], sizes = [8, 128], strides = [1, 1]} : vector<8x384xf32> to vector<8x128xf32>
    %177 = vector.extract_strided_slice %167 {offsets = [0, 384], sizes = [8, 128], strides = [1, 1]} : vector<8x512xf32> to vector<8x128xf32>
    %178 = math.tanh %177 : vector<8x128xf32>
    %179 = arith.mulf %175, %155 : vector<8x128xf32>
    %180 = arith.mulf %174, %178 : vector<8x128xf32>
    %181 = arith.addf %179, %180 : vector<8x128xf32>
    %182 = math.tanh %181 : vector<8x128xf32>
    %183 = arith.mulf %176, %182 : vector<8x128xf32>
    %184 = arith.index_cast %161 : i32 to index
    %c0_66 = arith.constant 0 : index
    %185 = vector.load %arg24[%184, %c0_66] : memref<64x128xf32, #tpu.memory_space<vmem>>, vector<8x128xf32>
    tpu.vector_store %arg24[%184, %c0_66], %183 {strides = array<i32>} : memref<64x128xf32, #tpu.memory_space<vmem>>, vector<8x128xf32>,
    %c4_i32 = arith.constant 4 : i32
    %c8_i32_67 = arith.constant 8 : i32
    %186 = arith.muli %c4_i32, %c8_i32_67 : i32
    %187 = tpu.assume_multiple %186, 8 : i32
    %188 = arith.index_cast %187 : i32 to index
    %c0_68 = arith.constant 0 : index
    %189 = vector.load %arg23[%188, %c0_68] : memref<64x512xf32, #tpu.memory_space<vmem>>, vector<8x512xf32>
    %190 = arith.truncf %183 : vector<8x128xf32> to vector<8x128xbf16>
    %c0_69 = arith.constant 0 : index
    %c0_70 = arith.constant 0 : index
    %191 = vector.load %arg12[%c0_69, %c0_70] : memref<128x512xbf16, #tpu.memory_space<vmem>>, vector<128x512xbf16>
    %cst_71 = arith.constant dense<0.000000e+00> : vector<8x512xf32>
    %192 = tpu.matmul %190, %191, %cst_71 {dimension_numbers = #tpu.dot_dimension_numbers<[1], [0], [0], [1], [0, 0, 1, 1], [], []>} : vector<8x128xbf16>, vector<128x512xbf16>, vector<8x512xf32> -> vector<8x512xf32>
    %193 = arith.addf %189, %192 : vector<8x512xf32>
    %194 = vector.extract_strided_slice %193 {offsets = [0, 0], sizes = [8, 384], strides = [1, 1]} : vector<8x512xf32> to vector<8x384xf32>
    %195 = arith.negf %194 : vector<8x384xf32>
    %196 = math.exp %195 : vector<8x384xf32>
    %cst_72 = arith.constant 1.000000e+00 : f32
    %197 = vector.broadcast %cst_72 : f32 to vector<8x384xf32>
    %198 = arith.addf %197, %196 : vector<8x384xf32>
    %199 = arith.divf %197, %198 : vector<8x384xf32>
    %200 = vector.extract_strided_slice %199 {offsets = [0, 0], sizes = [8, 128], strides = [1, 1]} : vector<8x384xf32> to vector<8x128xf32>
    %201 = vector.extract_strided_slice %199 {offsets = [0, 128], sizes = [8, 128], strides = [1, 1]} : vector<8x384xf32> to vector<8x128xf32>
    %202 = vector.extract_strided_slice %199 {offsets = [0, 256], sizes = [8, 128], strides = [1, 1]} : vector<8x384xf32> to vector<8x128xf32>
    %203 = vector.extract_strided_slice %193 {offsets = [0, 384], sizes = [8, 128], strides = [1, 1]} : vector<8x512xf32> to vector<8x128xf32>
    %204 = math.tanh %203 : vector<8x128xf32>
    %205 = arith.mulf %201, %181 : vector<8x128xf32>
    %206 = arith.mulf %200, %204 : vector<8x128xf32>
    %207 = arith.addf %205, %206 : vector<8x128xf32>
    %208 = math.tanh %207 : vector<8x128xf32>
    %209 = arith.mulf %202, %208 : vector<8x128xf32>
    %210 = arith.index_cast %187 : i32 to index
    %c0_73 = arith.constant 0 : index
    %211 = vector.load %arg24[%210, %c0_73] : memref<64x128xf32, #tpu.memory_space<vmem>>, vector<8x128xf32>
    tpu.vector_store %arg24[%210, %c0_73], %209 {strides = array<i32>} : memref<64x128xf32, #tpu.memory_space<vmem>>, vector<8x128xf32>,
    %c5_i32 = arith.constant 5 : i32
    %c8_i32_74 = arith.constant 8 : i32
    %212 = arith.muli %c5_i32, %c8_i32_74 : i32
    %213 = tpu.assume_multiple %212, 8 : i32
    %214 = arith.index_cast %213 : i32 to index
    %c0_75 = arith.constant 0 : index
    %215 = vector.load %arg23[%214, %c0_75] : memref<64x512xf32, #tpu.memory_space<vmem>>, vector<8x512xf32>
    %216 = arith.truncf %209 : vector<8x128xf32> to vector<8x128xbf16>
    %c0_76 = arith.constant 0 : index
    %c0_77 = arith.constant 0 : index
    %217 = vector.load %arg12[%c0_76, %c0_77] : memref<128x512xbf16, #tpu.memory_space<vmem>>, vector<128x512xbf16>
    %cst_78 = arith.constant dense<0.000000e+00> : vector<8x512xf32>
    %218 = tpu.matmul %216, %217, %cst_78 {dimension_numbers = #tpu.dot_dimension_numbers<[1], [0], [0], [1], [0, 0, 1, 1], [], []>} : vector<8x128xbf16>, vector<128x512xbf16>, vector<8x512xf32> -> vector<8x512xf32>
    %219 = arith.addf %215, %218 : vector<8x512xf32>
    %220 = vector.extract_strided_slice %219 {offsets = [0, 0], sizes = [8, 384], strides = [1, 1]} : vector<8x512xf32> to vector<8x384xf32>
    %221 = arith.negf %220 : vector<8x384xf32>
    %222 = math.exp %221 : vector<8x384xf32>
    %cst_79 = arith.constant 1.000000e+00 : f32
    %223 = vector.broadcast %cst_79 : f32 to vector<8x384xf32>
    %224 = arith.addf %223, %222 : vector<8x384xf32>
    %225 = arith.divf %223, %224 : vector<8x384xf32>
    %226 = vector.extract_strided_slice %225 {offsets = [0, 0], sizes = [8, 128], strides = [1, 1]} : vector<8x384xf32> to vector<8x128xf32>
    %227 = vector.extract_strided_slice %225 {offsets = [0, 128], sizes = [8, 128], strides = [1, 1]} : vector<8x384xf32> to vector<8x128xf32>
    %228 = vector.extract_strided_slice %225 {offsets = [0, 256], sizes = [8, 128], strides = [1, 1]} : vector<8x384xf32> to vector<8x128xf32>
    %229 = vector.extract_strided_slice %219 {offsets = [0, 384], sizes = [8, 128], strides = [1, 1]} : vector<8x512xf32> to vector<8x128xf32>
    %230 = math.tanh %229 : vector<8x128xf32>
    %231 = arith.mulf %227, %207 : vector<8x128xf32>
    %232 = arith.mulf %226, %230 : vector<8x128xf32>
    %233 = arith.addf %231, %232 : vector<8x128xf32>
    %234 = math.tanh %233 : vector<8x128xf32>
    %235 = arith.mulf %228, %234 : vector<8x128xf32>
    %236 = arith.index_cast %213 : i32 to index
    %c0_80 = arith.constant 0 : index
    %237 = vector.load %arg24[%236, %c0_80] : memref<64x128xf32, #tpu.memory_space<vmem>>, vector<8x128xf32>
    tpu.vector_store %arg24[%236, %c0_80], %235 {strides = array<i32>} : memref<64x128xf32, #tpu.memory_space<vmem>>, vector<8x128xf32>,
    %c6_i32 = arith.constant 6 : i32
    %c8_i32_81 = arith.constant 8 : i32
    %238 = arith.muli %c6_i32, %c8_i32_81 : i32
    %239 = tpu.assume_multiple %238, 8 : i32
    %240 = arith.index_cast %239 : i32 to index
    %c0_82 = arith.constant 0 : index
    %241 = vector.load %arg23[%240, %c0_82] : memref<64x512xf32, #tpu.memory_space<vmem>>, vector<8x512xf32>
    %242 = arith.truncf %235 : vector<8x128xf32> to vector<8x128xbf16>
    %c0_83 = arith.constant 0 : index
    %c0_84 = arith.constant 0 : index
    %243 = vector.load %arg12[%c0_83, %c0_84] : memref<128x512xbf16, #tpu.memory_space<vmem>>, vector<128x512xbf16>
    %cst_85 = arith.constant dense<0.000000e+00> : vector<8x512xf32>
    %244 = tpu.matmul %242, %243, %cst_85 {dimension_numbers = #tpu.dot_dimension_numbers<[1], [0], [0], [1], [0, 0, 1, 1], [], []>} : vector<8x128xbf16>, vector<128x512xbf16>, vector<8x512xf32> -> vector<8x512xf32>
    %245 = arith.addf %241, %244 : vector<8x512xf32>
    %246 = vector.extract_strided_slice %245 {offsets = [0, 0], sizes = [8, 384], strides = [1, 1]} : vector<8x512xf32> to vector<8x384xf32>
    %247 = arith.negf %246 : vector<8x384xf32>
    %248 = math.exp %247 : vector<8x384xf32>
    %cst_86 = arith.constant 1.000000e+00 : f32
    %249 = vector.broadcast %cst_86 : f32 to vector<8x384xf32>
    %250 = arith.addf %249, %248 : vector<8x384xf32>
    %251 = arith.divf %249, %250 : vector<8x384xf32>
    %252 = vector.extract_strided_slice %251 {offsets = [0, 0], sizes = [8, 128], strides = [1, 1]} : vector<8x384xf32> to vector<8x128xf32>
    %253 = vector.extract_strided_slice %251 {offsets = [0, 128], sizes = [8, 128], strides = [1, 1]} : vector<8x384xf32> to vector<8x128xf32>
    %254 = vector.extract_strided_slice %251 {offsets = [0, 256], sizes = [8, 128], strides = [1, 1]} : vector<8x384xf32> to vector<8x128xf32>
    %255 = vector.extract_strided_slice %245 {offsets = [0, 384], sizes = [8, 128], strides = [1, 1]} : vector<8x512xf32> to vector<8x128xf32>
    %256 = math.tanh %255 : vector<8x128xf32>
    %257 = arith.mulf %253, %233 : vector<8x128xf32>
    %258 = arith.mulf %252, %256 : vector<8x128xf32>
    %259 = arith.addf %257, %258 : vector<8x128xf32>
    %260 = math.tanh %259 : vector<8x128xf32>
    %261 = arith.mulf %254, %260 : vector<8x128xf32>
    %262 = arith.index_cast %239 : i32 to index
    %c0_87 = arith.constant 0 : index
    %263 = vector.load %arg24[%262, %c0_87] : memref<64x128xf32, #tpu.memory_space<vmem>>, vector<8x128xf32>
    tpu.vector_store %arg24[%262, %c0_87], %261 {strides = array<i32>} : memref<64x128xf32, #tpu.memory_space<vmem>>, vector<8x128xf32>,
    %c7_i32 = arith.constant 7 : i32
    %c8_i32_88 = arith.constant 8 : i32
    %264 = arith.muli %c7_i32, %c8_i32_88 : i32
    %265 = tpu.assume_multiple %264, 8 : i32
    %266 = arith.index_cast %265 : i32 to index
    %c0_89 = arith.constant 0 : index
    %267 = vector.load %arg23[%266, %c0_89] : memref<64x512xf32, #tpu.memory_space<vmem>>, vector<8x512xf32>
    %268 = arith.truncf %261 : vector<8x128xf32> to vector<8x128xbf16>
    %c0_90 = arith.constant 0 : index
    %c0_91 = arith.constant 0 : index
    %269 = vector.load %arg12[%c0_90, %c0_91] : memref<128x512xbf16, #tpu.memory_space<vmem>>, vector<128x512xbf16>
    %cst_92 = arith.constant dense<0.000000e+00> : vector<8x512xf32>
    %270 = tpu.matmul %268, %269, %cst_92 {dimension_numbers = #tpu.dot_dimension_numbers<[1], [0], [0], [1], [0, 0, 1, 1], [], []>} : vector<8x128xbf16>, vector<128x512xbf16>, vector<8x512xf32> -> vector<8x512xf32>
    %271 = arith.addf %267, %270 : vector<8x512xf32>
    %272 = vector.extract_strided_slice %271 {offsets = [0, 0], sizes = [8, 384], strides = [1, 1]} : vector<8x512xf32> to vector<8x384xf32>
    %273 = arith.negf %272 : vector<8x384xf32>
    %274 = math.exp %273 : vector<8x384xf32>
    %cst_93 = arith.constant 1.000000e+00 : f32
    %275 = vector.broadcast %cst_93 : f32 to vector<8x384xf32>
    %276 = arith.addf %275, %274 : vector<8x384xf32>
    %277 = arith.divf %275, %276 : vector<8x384xf32>
    %278 = vector.extract_strided_slice %277 {offsets = [0, 0], sizes = [8, 128], strides = [1, 1]} : vector<8x384xf32> to vector<8x128xf32>
    %279 = vector.extract_strided_slice %277 {offsets = [0, 128], sizes = [8, 128], strides = [1, 1]} : vector<8x384xf32> to vector<8x128xf32>
    %280 = vector.extract_strided_slice %277 {offsets = [0, 256], sizes = [8, 128], strides = [1, 1]} : vector<8x384xf32> to vector<8x128xf32>
    %281 = vector.extract_strided_slice %271 {offsets = [0, 384], sizes = [8, 128], strides = [1, 1]} : vector<8x512xf32> to vector<8x128xf32>
    %282 = math.tanh %281 : vector<8x128xf32>
    %283 = arith.mulf %279, %259 : vector<8x128xf32>
    %284 = arith.mulf %278, %282 : vector<8x128xf32>
    %285 = arith.addf %283, %284 : vector<8x128xf32>
    %286 = math.tanh %285 : vector<8x128xf32>
    %287 = arith.mulf %280, %286 : vector<8x128xf32>
    %288 = arith.index_cast %265 : i32 to index
    %c0_94 = arith.constant 0 : index
    %289 = vector.load %arg24[%288, %c0_94] : memref<64x128xf32, #tpu.memory_space<vmem>>, vector<8x128xf32>
    tpu.vector_store %arg24[%288, %c0_94], %287 {strides = array<i32>} : memref<64x128xf32, #tpu.memory_space<vmem>>, vector<8x128xf32>,
    %c8_i32_95 = arith.constant 8 : i32
    %c0_96 = arith.constant 0 : index
    %c0_97 = arith.constant 0 : index
    %290 = vector.load %arg24[%c0_96, %c0_97] : memref<64x128xf32, #tpu.memory_space<vmem>>, vector<64x128xf32>
    %291 = vector.extract_strided_slice %290 {offsets = [0, 0], sizes = [64, 64], strides = [1, 1]} : vector<64x128xf32> to vector<64x64xf32>
    %c0_98 = arith.constant 0 : index
    %c0_99 = arith.constant 0 : index
    %c0_100 = arith.constant 0 : index
    %292 = vector.load %arg1[%c0_98, %c0_99, %c0_100] : memref<1x64x1xf32, #tpu.memory_space<vmem>>, vector<1x64x1xf32>
    %293 = vector.shape_cast %292 : vector<1x64x1xf32> to vector<64x1xf32>
    %294 = vector.broadcast %293 : vector<64x1xf32> to vector<64x64xf32>
    %295 = arith.mulf %291, %294 : vector<64x64xf32>
    %c0_101 = arith.constant 0 : index
    %c0_102 = arith.constant 0 : index
    %296 = vector.load %arg14[%c0_101, %c0_102] : memref<1x64xf32, #tpu.memory_space<vmem>>, vector<1x64xf32>
    %c0_103 = arith.constant 0 : index
    %c0_104 = arith.constant 0 : index
    %297 = vector.load %arg15[%c0_103, %c0_104] : memref<1x64xf32, #tpu.memory_space<vmem>>, vector<1x64xf32>
    %cst_105 = arith.constant dense<0.000000e+00> : vector<64xf32>
    %298 = vector.multi_reduction <add>, %295, %cst_105 [1] : vector<64x64xf32> to vector<64xf32>
    %299 = vector.shape_cast %298 : vector<64xf32> to vector<64x1xf32>
    %cst_106 = arith.constant 6.400000e+01 : f32
    %300 = vector.broadcast %cst_106 : f32 to vector<64x1xf32>
    %301 = arith.divf %299, %300 : vector<64x1xf32>
    %302 = vector.broadcast %301 : vector<64x1xf32> to vector<64x64xf32>
    %303 = arith.subf %295, %302 : vector<64x64xf32>
    %304 = arith.mulf %303, %303 : vector<64x64xf32>
    %cst_107 = arith.constant dense<0.000000e+00> : vector<64xf32>
    %305 = vector.multi_reduction <add>, %304, %cst_107 [1] : vector<64x64xf32> to vector<64xf32>
    %306 = vector.shape_cast %305 : vector<64xf32> to vector<64x1xf32>
    %cst_108 = arith.constant 6.400000e+01 : f32
    %307 = vector.broadcast %cst_108 : f32 to vector<64x1xf32>
    %308 = arith.divf %306, %307 : vector<64x1xf32>
    %309 = vector.broadcast %301 : vector<64x1xf32> to vector<64x64xf32>
    %310 = arith.subf %295, %309 : vector<64x64xf32>
    %cst_109 = arith.constant 9.99999974E-6 : f32
    %311 = vector.broadcast %cst_109 : f32 to vector<64x1xf32>
    %312 = arith.addf %308, %311 : vector<64x1xf32>
    %313 = math.rsqrt %312 : vector<64x1xf32>
    %314 = vector.broadcast %313 : vector<64x1xf32> to vector<64x64xf32>
    %315 = arith.mulf %310, %314 : vector<64x64xf32>
    %316 = vector.broadcast %296 : vector<1x64xf32> to vector<64x64xf32>
    %317 = arith.mulf %315, %316 : vector<64x64xf32>
    %318 = vector.broadcast %297 : vector<1x64xf32> to vector<64x64xf32>
    %319 = arith.addf %317, %318 : vector<64x64xf32>
    %320 = arith.negf %319 : vector<64x64xf32>
    %321 = math.exp %320 : vector<64x64xf32>
    %cst_110 = arith.constant 1.000000e+00 : f32
    %322 = vector.broadcast %cst_110 : f32 to vector<64x64xf32>
    %323 = arith.addf %322, %321 : vector<64x64xf32>
    %324 = arith.divf %322, %323 : vector<64x64xf32>
    %325 = arith.mulf %319, %324 : vector<64x64xf32>
    %326 = arith.truncf %325 : vector<64x64xf32> to vector<64x64xbf16>
    %c0_111 = arith.constant 0 : index
    %c0_112 = arith.constant 0 : index
    %327 = vector.load %arg16[%c0_111, %c0_112] : memref<64x32xbf16, #tpu.memory_space<vmem>>, vector<64x32xbf16>
    %cst_113 = arith.constant dense<0.000000e+00> : vector<64x32xf32>
    %328 = tpu.matmul %326, %327, %cst_113 {dimension_numbers = #tpu.dot_dimension_numbers<[1], [0], [0], [1], [0, 0, 1, 1], [], []>} : vector<64x64xbf16>, vector<64x32xbf16>, vector<64x32xf32> -> vector<64x32xf32>
    %c0_114 = arith.constant 0 : index
    %c0_115 = arith.constant 0 : index
    %329 = vector.load %arg17[%c0_114, %c0_115] : memref<1x32xf32, #tpu.memory_space<vmem>>, vector<1x32xf32>
    %330 = vector.broadcast %329 : vector<1x32xf32> to vector<64x32xf32>
    %331 = arith.addf %328, %330 : vector<64x32xf32>
    %c0_116 = arith.constant 0 : index
    %c0_117 = arith.constant 0 : index
    %332 = vector.load %arg18[%c0_116, %c0_117] : memref<1x32xf32, #tpu.memory_space<vmem>>, vector<1x32xf32>
    %c0_118 = arith.constant 0 : index
    %c0_119 = arith.constant 0 : index
    %333 = vector.load %arg19[%c0_118, %c0_119] : memref<1x32xf32, #tpu.memory_space<vmem>>, vector<1x32xf32>
    %cst_120 = arith.constant dense<0.000000e+00> : vector<64xf32>
    %334 = vector.multi_reduction <add>, %331, %cst_120 [1] : vector<64x32xf32> to vector<64xf32>
    %335 = vector.shape_cast %334 : vector<64xf32> to vector<64x1xf32>
    %cst_121 = arith.constant 3.200000e+01 : f32
    %336 = vector.broadcast %cst_121 : f32 to vector<64x1xf32>
    %337 = arith.divf %335, %336 : vector<64x1xf32>
    %338 = vector.broadcast %337 : vector<64x1xf32> to vector<64x32xf32>
    %339 = arith.subf %331, %338 : vector<64x32xf32>
    %340 = arith.mulf %339, %339 : vector<64x32xf32>
    %cst_122 = arith.constant dense<0.000000e+00> : vector<64xf32>
    %341 = vector.multi_reduction <add>, %340, %cst_122 [1] : vector<64x32xf32> to vector<64xf32>
    %342 = vector.shape_cast %341 : vector<64xf32> to vector<64x1xf32>
    %cst_123 = arith.constant 3.200000e+01 : f32
    %343 = vector.broadcast %cst_123 : f32 to vector<64x1xf32>
    %344 = arith.divf %342, %343 : vector<64x1xf32>
    %345 = vector.broadcast %337 : vector<64x1xf32> to vector<64x32xf32>
    %346 = arith.subf %331, %345 : vector<64x32xf32>
    %cst_124 = arith.constant 9.99999974E-6 : f32
    %347 = vector.broadcast %cst_124 : f32 to vector<64x1xf32>
    %348 = arith.addf %344, %347 : vector<64x1xf32>
    %349 = math.rsqrt %348 : vector<64x1xf32>
    %350 = vector.broadcast %349 : vector<64x1xf32> to vector<64x32xf32>
    %351 = arith.mulf %346, %350 : vector<64x32xf32>
    %352 = vector.broadcast %332 : vector<1x32xf32> to vector<64x32xf32>
    %353 = arith.mulf %351, %352 : vector<64x32xf32>
    %354 = vector.broadcast %333 : vector<1x32xf32> to vector<64x32xf32>
    %355 = arith.addf %353, %354 : vector<64x32xf32>
    %356 = arith.negf %355 : vector<64x32xf32>
    %357 = math.exp %356 : vector<64x32xf32>
    %cst_125 = arith.constant 1.000000e+00 : f32
    %358 = vector.broadcast %cst_125 : f32 to vector<64x32xf32>
    %359 = arith.addf %358, %357 : vector<64x32xf32>
    %360 = arith.divf %358, %359 : vector<64x32xf32>
    %361 = arith.mulf %355, %360 : vector<64x32xf32>
    %362 = arith.truncf %361 : vector<64x32xf32> to vector<64x32xbf16>
    %c0_126 = arith.constant 0 : index
    %c0_127 = arith.constant 0 : index
    %363 = vector.load %arg20[%c0_126, %c0_127] : memref<32x128xbf16, #tpu.memory_space<vmem>>, vector<32x128xbf16>
    %cst_128 = arith.constant dense<0.000000e+00> : vector<64x128xf32>
    %364 = tpu.matmul %362, %363, %cst_128 {dimension_numbers = #tpu.dot_dimension_numbers<[1], [0], [0], [1], [0, 0, 1, 1], [], []>} : vector<64x32xbf16>, vector<32x128xbf16>, vector<64x128xf32> -> vector<64x128xf32>
    %c0_129 = arith.constant 0 : index
    %c0_130 = arith.constant 0 : index
    %365 = vector.load %arg21[%c0_129, %c0_130] : memref<1x128xf32, #tpu.memory_space<vmem>>, vector<1x128xf32>
    %366 = vector.broadcast %365 : vector<1x128xf32> to vector<64x128xf32>
    %367 = arith.addf %364, %366 : vector<64x128xf32>
    %c0_131 = arith.constant 0 : index
    %c0_132 = arith.constant 0 : index
    %c0_133 = arith.constant 0 : index
    %368 = vector.load %arg22[%c0_131, %c0_132, %c0_133] : memref<1x64x128xf32, #tpu.memory_space<vmem>>, vector<1x64x128xf32>
    %369 = vector.shape_cast %368 : vector<1x64x128xf32> to vector<64x128xf32>
    %370 = vector.shape_cast %367 : vector<64x128xf32> to vector<1x64x128xf32>
    tpu.vector_store %arg22[%c0_131, %c0_132, %c0_133], %370 {strides = array<i32>} : memref<1x64x128xf32, #tpu.memory_space<vmem>>, vector<1x64x128xf32>,
    return
  }
  func.func @transform_0(%arg0: i32) -> (i32, i32, i32) {
    %c0_i32 = arith.constant 0 : i32
    %c0_i32_0 = arith.constant 0 : i32
    %c0_i32_1 = arith.constant 0 : i32
    return %arg0, %c0_i32, %c0_i32_0 : i32, i32, i32
  }
  func.func @transform_1(%arg0: i32) -> (i32, i32, i32) {
    %c0_i32 = arith.constant 0 : i32
    %c0_i32_0 = arith.constant 0 : i32
    %c0_i32_1 = arith.constant 0 : i32
    return %arg0, %c0_i32, %c0_i32_0 : i32, i32, i32
  }
  func.func @transform_2(%arg0: i32) -> (i32, i32) {
    %c0_i32 = arith.constant 0 : i32
    %c0_i32_0 = arith.constant 0 : i32
    %c0_i32_1 = arith.constant 0 : i32
    return %c0_i32, %c0_i32_0 : i32, i32
  }
  func.func @transform_3(%arg0: i32) -> (i32, i32) {
    %c0_i32 = arith.constant 0 : i32
    %c0_i32_0 = arith.constant 0 : i32
    %c0_i32_1 = arith.constant 0 : i32
    return %c0_i32, %c0_i32_0 : i32, i32
  }
  func.func @transform_4(%arg0: i32) -> (i32, i32) {
    %c0_i32 = arith.constant 0 : i32
    %c0_i32_0 = arith.constant 0 : i32
    %c0_i32_1 = arith.constant 0 : i32
    return %c0_i32, %c0_i32_0 : i32, i32
  }
  func.func @transform_5(%arg0: i32) -> (i32, i32) {
    %c0_i32 = arith.constant 0 : i32
    %c0_i32_0 = arith.constant 0 : i32
    %c0_i32_1 = arith.constant 0 : i32
    return %c0_i32, %c0_i32_0 : i32, i32
  }
  func.func @transform_6(%arg0: i32) -> (i32, i32) {
    %c0_i32 = arith.constant 0 : i32
    %c0_i32_0 = arith.constant 0 : i32
    %c0_i32_1 = arith.constant 0 : i32
    return %c0_i32, %c0_i32_0 : i32, i32
  }
  func.func @transform_7(%arg0: i32) -> (i32, i32) {
    %c0_i32 = arith.constant 0 : i32
    %c0_i32_0 = arith.constant 0 : i32
    %c0_i32_1 = arith.constant 0 : i32
    return %c0_i32, %c0_i32_0 : i32, i32
  }
  func.func @transform_8(%arg0: i32) -> (i32, i32) {
    %c0_i32 = arith.constant 0 : i32
    %c0_i32_0 = arith.constant 0 : i32
    %c0_i32_1 = arith.constant 0 : i32
    return %c0_i32, %c0_i32_0 : i32, i32
  }
  func.func @transform_9(%arg0: i32) -> (i32, i32) {
    %c0_i32 = arith.constant 0 : i32
    %c0_i32_0 = arith.constant 0 : i32
    %c0_i32_1 = arith.constant 0 : i32
    return %c0_i32, %c0_i32_0 : i32, i32
  }
  func.func @transform_10(%arg0: i32) -> (i32, i32) {
    %c0_i32 = arith.constant 0 : i32
    %c0_i32_0 = arith.constant 0 : i32
    %c0_i32_1 = arith.constant 0 : i32
    return %c0_i32, %c0_i32_0 : i32, i32
  }
  func.func @transform_11(%arg0: i32) -> (i32, i32) {
    %c0_i32 = arith.constant 0 : i32
    %c0_i32_0 = arith.constant 0 : i32
    %c0_i32_1 = arith.constant 0 : i32
    return %c0_i32, %c0_i32_0 : i32, i32
  }
  func.func @transform_12(%arg0: i32) -> (i32, i32) {
    %c0_i32 = arith.constant 0 : i32
    %c0_i32_0 = arith.constant 0 : i32
    %c0_i32_1 = arith.constant 0 : i32
    return %c0_i32, %c0_i32_0 : i32, i32
  }
  func.func @transform_13(%arg0: i32) -> (i32, i32) {
    %c0_i32 = arith.constant 0 : i32
    %c0_i32_0 = arith.constant 0 : i32
    %c0_i32_1 = arith.constant 0 : i32
    return %c0_i32, %c0_i32_0 : i32, i32
  }
  func.func @transform_14(%arg0: i32) -> (i32, i32) {
    %c0_i32 = arith.constant 0 : i32
    %c0_i32_0 = arith.constant 0 : i32
    %c0_i32_1 = arith.constant 0 : i32
    return %c0_i32, %c0_i32_0 : i32, i32
  }
  func.func @transform_15(%arg0: i32) -> (i32, i32) {
    %c0_i32 = arith.constant 0 : i32
    %c0_i32_0 = arith.constant 0 : i32
    %c0_i32_1 = arith.constant 0 : i32
    return %c0_i32, %c0_i32_0 : i32, i32
  }
  func.func @transform_16(%arg0: i32) -> (i32, i32) {
    %c0_i32 = arith.constant 0 : i32
    %c0_i32_0 = arith.constant 0 : i32
    %c0_i32_1 = arith.constant 0 : i32
    return %c0_i32, %c0_i32_0 : i32, i32
  }
  func.func @transform_17(%arg0: i32) -> (i32, i32) {
    %c0_i32 = arith.constant 0 : i32
    %c0_i32_0 = arith.constant 0 : i32
    %c0_i32_1 = arith.constant 0 : i32
    return %c0_i32, %c0_i32_0 : i32, i32
  }
  func.func @transform_18(%arg0: i32) -> (i32, i32) {
    %c0_i32 = arith.constant 0 : i32
    %c0_i32_0 = arith.constant 0 : i32
    %c0_i32_1 = arith.constant 0 : i32
    return %c0_i32, %c0_i32_0 : i32, i32
  }
  func.func @transform_19(%arg0: i32) -> (i32, i32) {
    %c0_i32 = arith.constant 0 : i32
    %c0_i32_0 = arith.constant 0 : i32
    %c0_i32_1 = arith.constant 0 : i32
    return %c0_i32, %c0_i32_0 : i32, i32
  }
  func.func @transform_20(%arg0: i32) -> (i32, i32) {
    %c0_i32 = arith.constant 0 : i32
    %c0_i32_0 = arith.constant 0 : i32
    %c0_i32_1 = arith.constant 0 : i32
    return %c0_i32, %c0_i32_0 : i32, i32
  }
  func.func @transform_21(%arg0: i32) -> (i32, i32, i32) {
    %c0_i32 = arith.constant 0 : i32
    %c0_i32_0 = arith.constant 0 : i32
    %c0_i32_1 = arith.constant 0 : i32
    return %arg0, %c0_i32, %c0_i32_0 : i32, i32, i32
  }
}

</mosaic_0001>

<llo_original>
// kernel: self_supervised_forward.1
$region0: #{self_supervised_forward.1}
  #allocation0 [shape = 'u32[]', space=smem, size = 0x4, offset = 0x4, fixed_abs, tag = 'smem constant byte address 0x4 - core index']
  #allocation1 [shape = 'u32[144,128]{1,0:T(1,128)}', space=vmem, size = 0x12000, scoped, tag = 'internal scratch']
  #allocation2 [shape = 'f32[64,512]{1,0:T(8,128)}', space=vmem, size = 0x20000, scoped, tag = 'scratch operand']
  #allocation3 [shape = 'f32[64,128]{1,0:T(8,128)}', space=vmem, size = 0x8000, scoped, tag = 'scratch operand']
  %s0 = inlined_call_operand.vmem [shape: f32[1,64,1], index: 0, kind: input, shape index: {}]
  %s1 = inlined_call_operand.vmem [shape: bf16[1,64,16], index: 1, kind: input, shape index: {}]
  %s2 = inlined_call_operand.vmem [shape: bf16[16,16], index: 2, kind: input, shape index: {}]
  %s3 = inlined_call_operand.vmem [shape: f32[1,16], index: 3, kind: input, shape index: {}]
  %s4 = inlined_call_operand.vmem [shape: f32[1,16], index: 4, kind: input, shape index: {}]
  %s5 = inlined_call_operand.vmem [shape: f32[1,16], index: 5, kind: input, shape index: {}]
  %s6 = inlined_call_operand.vmem [shape: bf16[16,32], index: 6, kind: input, shape index: {}]
  %s7 = inlined_call_operand.vmem [shape: f32[1,32], index: 7, kind: input, shape index: {}]
  %s8 = inlined_call_operand.vmem [shape: f32[1,32], index: 8, kind: input, shape index: {}]
  %s9 = inlined_call_operand.vmem [shape: f32[1,32], index: 9, kind: input, shape index: {}]
  %s10 = inlined_call_operand.vmem [shape: bf16[32,512], index: 10, kind: input, shape index: {}]
  %s11 = inlined_call_operand.vmem [shape: bf16[128,512], index: 11, kind: input, shape index: {}]
  %s12 = inlined_call_operand.vmem [shape: f32[1,512], index: 12, kind: input, shape index: {}]
  %s13 = inlined_call_operand.vmem [shape: f32[1,64], index: 13, kind: input, shape index: {}]
  %s14 = inlined_call_operand.vmem [shape: f32[1,64], index: 14, kind: input, shape index: {}]
  %s15 = inlined_call_operand.vmem [shape: bf16[64,32], index: 15, kind: input, shape index: {}]
  %s16 = inlined_call_operand.vmem [shape: f32[1,32], index: 16, kind: input, shape index: {}]
  %s17 = inlined_call_operand.vmem [shape: f32[1,32], index: 17, kind: input, shape index: {}]
  %s18 = inlined_call_operand.vmem [shape: f32[1,32], index: 18, kind: input, shape index: {}]
  %s19 = inlined_call_operand.vmem [shape: bf16[32,128], index: 19, kind: input, shape index: {}]
  %s20 = inlined_call_operand.vmem [shape: f32[1,128], index: 20, kind: input, shape index: {}]
  %s21 = inlined_call_operand.vmem [shape: f32[1,64,128], index: 21, kind: output, shape index: {}]
  %s22 = sld [smem:[#allocation0]]
  $region94: #{self_supervised_forward.1} parent=0
    _
  %s24 = ssub.s32 1, %s22
  %s25 = scalar_select 0, %s24, %s22
  // Predicated region
  $region2: #{self_supervised_forward.1} parent=0 // pred_check
    _
  $region3: #{self_supervised_forward.1} parent=0 // pred_check_branch
    %27 = sbr.rel (0) target = $region5
  $region4: #{self_supervised_forward.1} parent=0 // pred_region
    _
  $region5: #{self_supervised_forward.1} parent=0 // pred_fallthru
    _
  // Predicated region
  $region6: #{self_supervised_forward.1} parent=0 // pred_check
    _
  $region7: #{self_supervised_forward.1} parent=0 // pred_check_branch
    %29 = sbr.rel (0) target = $region9
  $region8: #{self_supervised_forward.1} parent=0 // pred_region
    _
  $region9: #{self_supervised_forward.1} parent=0 // pred_fallthru
    _
  // Predicated region
  $region10: #{self_supervised_forward.1} parent=0 // pred_check
    _
  $region11: #{self_supervised_forward.1} parent=0 // pred_check_branch
    %31 = sbr.rel (0) target = $region13
  $region12: #{self_supervised_forward.1} parent=0 // pred_region
    _
  $region13: #{self_supervised_forward.1} parent=0 // pred_fallthru
    _
  // Predicated region
  $region14: #{self_supervised_forward.1} parent=0 // pred_check
    _
  $region15: #{self_supervised_forward.1} parent=0 // pred_check_branch
    %33 = sbr.rel (0) target = $region17
  $region16: #{self_supervised_forward.1} parent=0 // pred_region
    _
  $region17: #{self_supervised_forward.1} parent=0 // pred_fallthru
    _
  // Predicated region
  $region18: #{self_supervised_forward.1} parent=0 // pred_check
    _
  $region19: #{self_supervised_forward.1} parent=0 // pred_check_branch
    %35 = sbr.rel (0) target = $region21
  $region20: #{self_supervised_forward.1} parent=0 // pred_region
    _
  $region21: #{self_supervised_forward.1} parent=0 // pred_fallthru
    _
  // Predicated region
  $region22: #{self_supervised_forward.1} parent=0 // pred_check
    _
  $region23: #{self_supervised_forward.1} parent=0 // pred_check_branch
    %37 = sbr.rel (0) target = $region25
  $region24: #{self_supervised_forward.1} parent=0 // pred_region
    _
  $region25: #{self_supervised_forward.1} parent=0 // pred_fallthru
    _
  // Predicated region
  $region26: #{self_supervised_forward.1} parent=0 // pred_check
    _
  $region27: #{self_supervised_forward.1} parent=0 // pred_check_branch
    %39 = sbr.rel (0) target = $region29
  $region28: #{self_supervised_forward.1} parent=0 // pred_region
    _
  $region29: #{self_supervised_forward.1} parent=0 // pred_fallthru
    _
  // Predicated region
  $region30: #{self_supervised_forward.1} parent=0 // pred_check
    _
  $region31: #{self_supervised_forward.1} parent=0 // pred_check_branch
    %41 = sbr.rel (0) target = $region33
  $region32: #{self_supervised_forward.1} parent=0 // pred_region
    _
  $region33: #{self_supervised_forward.1} parent=0 // pred_fallthru
    _
  // Predicated region
  $region34: #{self_supervised_forward.1} parent=0 // pred_check
    _
  $region35: #{self_supervised_forward.1} parent=0 // pred_check_branch
    %43 = sbr.rel (0) target = $region37
  $region36: #{self_supervised_forward.1} parent=0 // pred_region
    _
  $region37: #{self_supervised_forward.1} parent=0 // pred_fallthru
    _
  // Predicated region
  $region38: #{self_supervised_forward.1} parent=0 // pred_check
    _
  $region39: #{self_supervised_forward.1} parent=0 // pred_check_branch
    %45 = sbr.rel (0) target = $region41
  $region40: #{self_supervised_forward.1} parent=0 // pred_region
    _
  $region41: #{self_supervised_forward.1} parent=0 // pred_fallthru
    _
  // Predicated region
  $region42: #{self_supervised_forward.1} parent=0 // pred_check
    _
  $region43: #{self_supervised_forward.1} parent=0 // pred_check_branch
    %47 = sbr.rel (0) target = $region45
  $region44: #{self_supervised_forward.1} parent=0 // pred_region
    _
  $region45: #{self_supervised_forward.1} parent=0 // pred_fallthru
    _
  // Predicated region
  $region46: #{self_supervised_forward.1} parent=0 // pred_check
    _
  $region47: #{self_supervised_forward.1} parent=0 // pred_check_branch
    %49 = sbr.rel (0) target = $region49
  $region48: #{self_supervised_forward.1} parent=0 // pred_region
    _
  $region49: #{self_supervised_forward.1} parent=0 // pred_fallthru
    _
  // Predicated region
  $region50: #{self_supervised_forward.1} parent=0 // pred_check
    _
  $region51: #{self_supervised_forward.1} parent=0 // pred_check_branch
    %51 = sbr.rel (0) target = $region53
  $region52: #{self_supervised_forward.1} parent=0 // pred_region
    _
  $region53: #{self_supervised_forward.1} parent=0 // pred_fallthru
    _
  // Predicated region
  $region54: #{self_supervised_forward.1} parent=0 // pred_check
    _
  $region55: #{self_supervised_forward.1} parent=0 // pred_check_branch
    %53 = sbr.rel (0) target = $region57
  $region56: #{self_supervised_forward.1} parent=0 // pred_region
    _
  $region57: #{self_supervised_forward.1} parent=0 // pred_fallthru
    _
  // Predicated region
  $region58: #{self_supervised_forward.1} parent=0 // pred_check
    _
  $region59: #{self_supervised_forward.1} parent=0 // pred_check_branch
    %55 = sbr.rel (0) target = $region61
  $region60: #{self_supervised_forward.1} parent=0 // pred_region
    _
  $region61: #{self_supervised_forward.1} parent=0 // pred_fallthru
    _
  // Predicated region
  $region62: #{self_supervised_forward.1} parent=0 // pred_check
    _
  $region63: #{self_supervised_forward.1} parent=0 // pred_check_branch
    %57 = sbr.rel (0) target = $region65
  $region64: #{self_supervised_forward.1} parent=0 // pred_region
    _
  $region65: #{self_supervised_forward.1} parent=0 // pred_fallthru
    _
  // Predicated region
  $region66: #{self_supervised_forward.1} parent=0 // pred_check
    _
  $region67: #{self_supervised_forward.1} parent=0 // pred_check_branch
    %59 = sbr.rel (0) target = $region69
  $region68: #{self_supervised_forward.1} parent=0 // pred_region
    _
  $region69: #{self_supervised_forward.1} parent=0 // pred_fallthru
    _
  // Predicated region
  $region70: #{self_supervised_forward.1} parent=0 // pred_check
    _
  $region71: #{self_supervised_forward.1} parent=0 // pred_check_branch
    %61 = sbr.rel (0) target = $region73
  $region72: #{self_supervised_forward.1} parent=0 // pred_region
    _
  $region73: #{self_supervised_forward.1} parent=0 // pred_fallthru
    _
  // Predicated region
  $region74: #{self_supervised_forward.1} parent=0 // pred_check
    _
  $region75: #{self_supervised_forward.1} parent=0 // pred_check_branch
    %63 = sbr.rel (0) target = $region77
  $region76: #{self_supervised_forward.1} parent=0 // pred_region
    _
  $region77: #{self_supervised_forward.1} parent=0 // pred_fallthru
    _
  // Predicated region
  $region78: #{self_supervised_forward.1} parent=0 // pred_check
    _
  $region79: #{self_supervised_forward.1} parent=0 // pred_check_branch
    %65 = sbr.rel (0) target = $region81
  $region80: #{self_supervised_forward.1} parent=0 // pred_region
    _
  $region81: #{self_supervised_forward.1} parent=0 // pred_fallthru
    _
  // Predicated region
  $region82: #{self_supervised_forward.1} parent=0 // pred_check
    _
  $region83: #{self_supervised_forward.1} parent=0 // pred_check_branch
    %67 = sbr.rel (0) target = $region85
  $region84: #{self_supervised_forward.1} parent=0 // pred_region
    _
  $region85: #{self_supervised_forward.1} parent=0 // pred_fallthru
    _
  %v69 = vld [vmem:[%s1] sm:$0xf]
  %v70 = vld [vmem:[%s1 + $0x4] sm:$0xf]
  %v71 = vld [vmem:[%s1 + $0x8] sm:$0xf]
  %v72 = vld [vmem:[%s1 + $0xc] sm:$0xf]
  %v73 = vld [vmem:[%s1 + $0x10] sm:$0xf]
  %v74 = vld [vmem:[%s1 + $0x14] sm:$0xf]
  %v75 = vld [vmem:[%s1 + $0x18] sm:$0xf]
  %v76 = vld [vmem:[%s1 + $0x1c] sm:$0xf]
  %v77 = vld [vmem:[%s2] sm:$0xf]
  %v78 = vld [vmem:[%s2 + $0x4] sm:$0xf]
  %v79 = vld [vmem:[%s3] sm:$0x1]
  %v81 = vlaneseq
  %v82 = vshrl.u32 %v81, 7
  %v83 = vsub.s32 0, %v82
  %v84 = vrot.slane %v79, %v83
  %v94 = vunpack.c.l.b16 %v69
  %v95 = vunpack.c.l.b16 %v70
  %v96 = vunpack.c.l.b16 %v71
  %v97 = vunpack.c.l.b16 %v72
  %v98 = vunpack.c.l.b16 %v73
  %v99 = vunpack.c.l.b16 %v74
  %v100 = vunpack.c.l.b16 %v75
  %v101 = vunpack.c.l.b16 %v76
  %v102 = vpack.c.b16 %v95, %v94
  %v103 = vpack.c.b16 %v97, %v96
  %v104 = vpack.c.b16 %v99, %v98
  %v105 = vpack.c.b16 %v101, %v100
  %v108 = vunpack.c.l.b16 %v77
  %v109 = vunpack.c.l.b16 %v78
  %v110 = vpack.c.b16 %v109, %v108
  %vm112 = vcmask 130048
  %v114 = vsel %vm112, %v102, 0
  %v117 = vsel %vm112, %v103, 0
  %v120 = vsel %vm112, %v104, 0
  %v123 = vsel %vm112, %v105, 0
  %125 = vmatprep.subr.bf16.mxu0 0
  %126 = vmatpush1.bf16.msra.mxu0 %v110
  %127 = vmatprep.subr.bf16.mxu0 0
  %128 = vmatpush1.bf16.msra.mxu0 0
  %129 = vmatprep.subr.bf16.mxu0 0
  %130 = vmatpush1.bf16.msra.mxu0 0
  %131 = vmatprep.subr.bf16.mxu0 0
  %132 = vmatpush1.bf16.msra.mxu0 0
  %133 = vmatprep.subr.bf16.mxu0 0
  %134 = vmatpush1.bf16.msra.mxu0 0
  %135 = vmatprep.subr.bf16.mxu0 0
  %136 = vmatpush1.bf16.msra.mxu0 0
  %137 = vmatprep.subr.bf16.mxu0 0
  %138 = vmatpush1.bf16.msra.mxu0 0
  %139 = vmatprep.subr.bf16.mxu0 0
  %140 = vmatpush1.bf16.msra.mxu0 0
  %141 = vmatprep.subr.bf16.mxu0 0
  %142 = vmatpush1.bf16.msra.mxu0 0
  %143 = vmatprep.subr.bf16.mxu0 0
  %144 = vmatpush1.bf16.msra.mxu0 0
  %145 = vmatprep.subr.bf16.mxu0 0
  %146 = vmatpush1.bf16.msra.mxu0 0
  %147 = vmatprep.subr.bf16.mxu0 0
  %148 = vmatpush1.bf16.msra.mxu0 0
  %149 = vmatprep.subr.bf16.mxu0 0
  %150 = vmatpush1.bf16.msra.mxu0 0
  %151 = vmatprep.subr.bf16.mxu0 0
  %152 = vmatpush1.bf16.msra.mxu0 0
  %153 = vmatprep.subr.bf16.mxu0 0
  %154 = vmatpush1.bf16.msra.mxu0 0
  %155 = vmatprep.subr.bf16.mxu0 0
  %156 = vmatpush1.bf16.msra.mxu0 0
  %157 = vmatprep.mubr.bf16.mxu0 0
  %158 = vmatmul.mubr.bf16.gmra.mrb[0].mxu0 %v114
  %v159 = vpop.f32.mrb[0].mxu0
  %v160 = vadd.f32 %v84, %v159
  %v161 = vpop.f32.mrb[0].mxu0
  %v162 = vpop.f32.mrb[0].mxu0
  %v163 = vadd.f32 %v84, %v162
  %v164 = vpop.f32.mrb[0].mxu0
  %165 = vmatprep.mubr.bf16.mxu0 0
  %166 = vmatmul.mubr.bf16.gmra.mrb[0].mxu0 %v117
  %v167 = vpop.f32.mrb[0].mxu0
  %v168 = vadd.f32 %v84, %v167
  %v169 = vpop.f32.mrb[0].mxu0
  %v170 = vpop.f32.mrb[0].mxu0
  %v171 = vadd.f32 %v84, %v170
  %v172 = vpop.f32.mrb[0].mxu0
  %173 = vmatprep.mubr.bf16.mxu0 0
  %174 = vmatmul.mubr.bf16.gmra.mrb[0].mxu0 %v120
  %v175 = vpop.f32.mrb[0].mxu0
  %v176 = vadd.f32 %v84, %v175
  %v177 = vpop.f32.mrb[0].mxu0
  %v178 = vpop.f32.mrb[0].mxu0
  %v179 = vadd.f32 %v84, %v178
  %v180 = vpop.f32.mrb[0].mxu0
  %181 = vmatprep.mubr.bf16.mxu0 0
  %182 = vmatmul.mubr.bf16.gmra.mrb[0].mxu0 %v123
  %v183 = vpop.f32.mrb[0].mxu0
  %v184 = vadd.f32 %v84, %v183
  %v185 = vpop.f32.mrb[0].mxu0
  %v186 = vpop.f32.mrb[0].mxu0
  %v187 = vadd.f32 %v84, %v186
  %v188 = vpop.f32.mrb[0].mxu0
  %189 = vdwg.mxu0
  %v190 = vld [vmem:[%s4] sm:$0x1]
  %v191 = vld [vmem:[%s5] sm:$0x1]
  %v192 = vsel %vm112, %v160, 0.0
  %193 = vadd.xlane.f32.xlu0 %v192
  %v194 = vpop.xlane.xlu0 %193
  %v195 = vsel %vm112, %v163, 0.0
  %196 = vadd.xlane.f32.xlu0 %v195
  %v197 = vpop.xlane.xlu0 %196
  %v198 = vsel %vm112, %v168, 0.0
  %199 = vadd.xlane.f32.xlu0 %v198
  %v200 = vpop.xlane.xlu0 %199
  %v201 = vsel %vm112, %v171, 0.0
  %202 = vadd.xlane.f32.xlu0 %v201
  %v203 = vpop.xlane.xlu0 %202
  %v204 = vsel %vm112, %v176, 0.0
  %205 = vadd.xlane.f32.xlu0 %v204
  %v206 = vpop.xlane.xlu0 %205
  %v207 = vsel %vm112, %v179, 0.0
  %208 = vadd.xlane.f32.xlu0 %v207
  %v209 = vpop.xlane.xlu0 %208
  %v210 = vsel %vm112, %v184, 0.0
  %211 = vadd.xlane.f32.xlu0 %v210
  %v212 = vpop.xlane.xlu0 %211
  %v213 = vsel %vm112, %v187, 0.0
  %214 = vadd.xlane.f32.xlu0 %v213
  %v215 = vpop.xlane.xlu0 %214
  %v216 = vrcp.pop 16.0
  %v217 = vmul.f32 %v194, %v216
  %v218 = vmul.f32 %v197, %v216
  %v219 = vmul.f32 %v200, %v216
  %v220 = vmul.f32 %v203, %v216
  %v221 = vmul.f32 %v206, %v216
  %v222 = vmul.f32 %v209, %v216
  %v223 = vmul.f32 %v212, %v216
  %v224 = vmul.f32 %v215, %v216
  %v225 = vsub.f32 %v160, %v217
  %v226 = vsub.f32 %v163, %v218
  %v227 = vsub.f32 %v168, %v219
  %v228 = vsub.f32 %v171, %v220
  %v229 = vsub.f32 %v176, %v221
  %v230 = vsub.f32 %v179, %v222
  %v231 = vsub.f32 %v184, %v223
  %v232 = vsub.f32 %v187, %v224
  %v233 = vmul.f32 %v225, %v225
  %v234 = vmul.f32 %v226, %v226
  %v235 = vmul.f32 %v227, %v227
  %v236 = vmul.f32 %v228, %v228
  %v237 = vmul.f32 %v229, %v229
  %v238 = vmul.f32 %v230, %v230
  %v239 = vmul.f32 %v231, %v231
  %v240 = vmul.f32 %v232, %v232
  %v241 = vsel %vm112, %v233, 0.0
  %242 = vadd.xlane.f32.xlu0 %v241
  %v243 = vpop.xlane.xlu0 %242
  %v244 = vsel %vm112, %v234, 0.0
  %245 = vadd.xlane.f32.xlu0 %v244
  %v246 = vpop.xlane.xlu0 %245
  %v247 = vsel %vm112, %v235, 0.0
  %248 = vadd.xlane.f32.xlu0 %v247
  %v249 = vpop.xlane.xlu0 %248
  %v250 = vsel %vm112, %v236, 0.0
  %251 = vadd.xlane.f32.xlu0 %v250
  %v252 = vpop.xlane.xlu0 %251
  %v253 = vsel %vm112, %v237, 0.0
  %254 = vadd.xlane.f32.xlu0 %v253
  %v255 = vpop.xlane.xlu0 %254
  %v256 = vsel %vm112, %v238, 0.0
  %257 = vadd.xlane.f32.xlu0 %v256
  %v258 = vpop.xlane.xlu0 %257
  %v259 = vsel %vm112, %v239, 0.0
  %260 = vadd.xlane.f32.xlu0 %v259
  %v261 = vpop.xlane.xlu0 %260
  %v262 = vsel %vm112, %v240, 0.0
  %263 = vadd.xlane.f32.xlu0 %v262
  %v264 = vpop.xlane.xlu0 %263
  %v265 = vmul.f32 %v243, %v216
  %v266 = vmul.f32 %v246, %v216
  %v267 = vmul.f32 %v249, %v216
  %v268 = vmul.f32 %v252, %v216
  %v269 = vmul.f32 %v255, %v216
  %v270 = vmul.f32 %v258, %v216
  %v271 = vmul.f32 %v261, %v216
  %v272 = vmul.f32 %v264, %v216
  %v273 = vadd.f32 %v265, 1e-05
  %v274 = vadd.f32 %v266, 1e-05
  %v275 = vadd.f32 %v267, 1e-05
  %v276 = vadd.f32 %v268, 1e-05
  %v277 = vadd.f32 %v269, 1e-05
  %v278 = vadd.f32 %v270, 1e-05
  %v279 = vadd.f32 %v271, 1e-05
  %v280 = vadd.f32 %v272, 1e-05
  %v281 = vrsqrt.pop %v273
  %v282 = vrsqrt.pop %v274
  %v283 = vrsqrt.pop %v275
  %v284 = vrsqrt.pop %v276
  %v285 = vrsqrt.pop %v277
  %v286 = vrsqrt.pop %v278
  %v287 = vrsqrt.pop %v279
  %v288 = vrsqrt.pop %v280
  %v289 = vmul.f32 %v225, %v281
  %v290 = vmul.f32 %v226, %v282
  %v291 = vmul.f32 %v227, %v283
  %v292 = vmul.f32 %v228, %v284
  %v293 = vmul.f32 %v229, %v285
  %v294 = vmul.f32 %v230, %v286
  %v295 = vmul.f32 %v231, %v287
  %v296 = vmul.f32 %v232, %v288
  %v298 = vlaneseq
  %v299 = vshrl.u32 %v298, 7
  %v300 = vsub.s32 0, %v299
  %v301 = vrot.slane %v190, %v300
  %v303 = vmul.f32 %v289, %v301
  %v304 = vmul.f32 %v290, %v301
  %v305 = vmul.f32 %v291, %v301
  %v306 = vmul.f32 %v292, %v301
  %v307 = vmul.f32 %v293, %v301
  %v308 = vmul.f32 %v294, %v301
  %v309 = vmul.f32 %v295, %v301
  %v310 = vmul.f32 %v296, %v301
  %v312 = vlaneseq
  %v313 = vshrl.u32 %v312, 7
  %v314 = vsub.s32 0, %v313
  %v315 = vrot.slane %v191, %v314
  %v317 = vadd.f32 %v303, %v315
  %v318 = vadd.f32 %v304, %v315
  %v319 = vadd.f32 %v305, %v315
  %v320 = vadd.f32 %v306, %v315
  %v321 = vadd.f32 %v307, %v315
  %v322 = vadd.f32 %v308, %v315
  %v323 = vadd.f32 %v309, %v315
  %v324 = vadd.f32 %v310, %v315
  %v325 = vxor.u32 %v317, 2147483648
  %v326 = vxor.u32 %v318, 2147483648
  %v327 = vxor.u32 %v319, 2147483648
  %v328 = vxor.u32 %v320, 2147483648
  %v329 = vxor.u32 %v321, 2147483648
  %v330 = vxor.u32 %v322, 2147483648
  %v331 = vxor.u32 %v323, 2147483648
  %v332 = vxor.u32 %v324, 2147483648
  %v333 = vmul.f32 %v325, 1.442695
  %v334 = vpow.pop %v333
  %v335 = vmul.f32 %v326, 1.442695
  %v336 = vpow.pop %v335
  %v337 = vmul.f32 %v327, 1.442695
  %v338 = vpow.pop %v337
  %v339 = vmul.f32 %v328, 1.442695
  %v340 = vpow.pop %v339
  %v341 = vmul.f32 %v329, 1.442695
  %v342 = vpow.pop %v341
  %v343 = vmul.f32 %v330, 1.442695
  %v344 = vpow.pop %v343
  %v345 = vmul.f32 %v331, 1.442695
  %v346 = vpow.pop %v345
  %v347 = vmul.f32 %v332, 1.442695
  %v348 = vpow.pop %v347
  %v349 = vadd.f32 %v334, 1.0
  %v350 = vadd.f32 %v336, 1.0
  %v351 = vadd.f32 %v338, 1.0
  %v352 = vadd.f32 %v340, 1.0
  %v353 = vadd.f32 %v342, 1.0
  %v354 = vadd.f32 %v344, 1.0
  %v355 = vadd.f32 %v346, 1.0
  %v356 = vadd.f32 %v348, 1.0
  %v357 = vrcp.pop %v349
  %v358 = vmul.f32 1.0, %v357
  %v359 = vrcp.pop %v350
  %v360 = vmul.f32 1.0, %v359
  %v361 = vrcp.pop %v351
  %v362 = vmul.f32 1.0, %v361
  %v363 = vrcp.pop %v352
  %v364 = vmul.f32 1.0, %v363
  %v365 = vrcp.pop %v353
  %v366 = vmul.f32 1.0, %v365
  %v367 = vrcp.pop %v354
  %v368 = vmul.f32 1.0, %v367
  %v369 = vrcp.pop %v355
  %v370 = vmul.f32 1.0, %v369
  %v371 = vrcp.pop %v356
  %v372 = vmul.f32 1.0, %v371
  %v373 = vmul.f32 %v317, %v358
  %v374 = vmul.f32 %v318, %v360
  %v375 = vmul.f32 %v319, %v362
  %v376 = vmul.f32 %v320, %v364
  %v377 = vmul.f32 %v321, %v366
  %v378 = vmul.f32 %v322, %v368
  %v379 = vmul.f32 %v323, %v370
  %v380 = vmul.f32 %v324, %v372
  %v381 = vpack.c.bf16 %v374, %v373
  %v382 = vpack.c.bf16 %v376, %v375
  %v383 = vpack.c.bf16 %v378, %v377
  %v384 = vpack.c.bf16 %v380, %v379
  %v385 = vld [vmem:[%s6] sm:$0xf]
  %v386 = vld [vmem:[%s6 + $0x4] sm:$0xf]
  %v387 = vld [vmem:[%s7] sm:$0x1]
  %v389 = vlaneseq
  %v390 = vshrl.u32 %v389, 7
  %v391 = vsub.s32 0, %v390
  %v392 = vrot.slane %v387, %v391
  %v396 = vunpack.c.l.b16 %v385
  %v397 = vunpack.c.l.b16 %v386
  %v398 = vpack.c.b16 %v397, %v396
  %v401 = vsel %vm112, %v381, 0
  %v404 = vsel %vm112, %v382, 0
  %v407 = vsel %vm112, %v383, 0
  %v410 = vsel %vm112, %v384, 0
  %412 = vmatprep.subr.bf16.mxu0 0
  %413 = vmatpush1.bf16.msra.mxu0 %v398
  %414 = vmatprep.subr.bf16.mxu0 0
  %415 = vmatpush1.bf16.msra.mxu0 0
  %416 = vmatprep.subr.bf16.mxu0 0
  %417 = vmatpush1.bf16.msra.mxu0 0
  %418 = vmatprep.subr.bf16.mxu0 0
  %419 = vmatpush1.bf16.msra.mxu0 0
  %420 = vmatprep.subr.bf16.mxu0 0
  %421 = vmatpush1.bf16.msra.mxu0 0
  %422 = vmatprep.subr.bf16.mxu0 0
  %423 = vmatpush1.bf16.msra.mxu0 0
  %424 = vmatprep.subr.bf16.mxu0 0
  %425 = vmatpush1.bf16.msra.mxu0 0
  %426 = vmatprep.subr.bf16.mxu0 0
  %427 = vmatpush1.bf16.msra.mxu0 0
  %428 = vmatprep.subr.bf16.mxu0 0
  %429 = vmatpush1.bf16.msra.mxu0 0
  %430 = vmatprep.subr.bf16.mxu0 0
  %431 = vmatpush1.bf16.msra.mxu0 0
  %432 = vmatprep.subr.bf16.mxu0 0
  %433 = vmatpush1.bf16.msra.mxu0 0
  %434 = vmatprep.subr.bf16.mxu0 0
  %435 = vmatpush1.bf16.msra.mxu0 0
  %436 = vmatprep.subr.bf16.mxu0 0
  %437 = vmatpush1.bf16.msra.mxu0 0
  %438 = vmatprep.subr.bf16.mxu0 0
  %439 = vmatpush1.bf16.msra.mxu0 0
  %440 = vmatprep.subr.bf16.mxu0 0
  %441 = vmatpush1.bf16.msra.mxu0 0
  %442 = vmatprep.subr.bf16.mxu0 0
  %443 = vmatpush1.bf16.msra.mxu0 0
  %444 = vmatprep.mubr.bf16.mxu0 0
  %445 = vmatmul.mubr.bf16.gmra.mrb[0].mxu0 %v401
  %v446 = vpop.f32.mrb[0].mxu0
  %v447 = vadd.f32 %v392, %v446
  %v448 = vpop.f32.mrb[0].mxu0
  %v449 = vpop.f32.mrb[0].mxu0
  %v450 = vadd.f32 %v392, %v449
  %v451 = vpop.f32.mrb[0].mxu0
  %452 = vmatprep.mubr.bf16.mxu0 0
  %453 = vmatmul.mubr.bf16.gmra.mrb[0].mxu0 %v404
  %v454 = vpop.f32.mrb[0].mxu0
  %v455 = vadd.f32 %v392, %v454
  %v456 = vpop.f32.mrb[0].mxu0
  %v457 = vpop.f32.mrb[0].mxu0
  %v458 = vadd.f32 %v392, %v457
  %v459 = vpop.f32.mrb[0].mxu0
  %460 = vmatprep.mubr.bf16.mxu0 0
  %461 = vmatmul.mubr.bf16.gmra.mrb[0].mxu0 %v407
  %v462 = vpop.f32.mrb[0].mxu0
  %v463 = vadd.f32 %v392, %v462
  %v464 = vpop.f32.mrb[0].mxu0
  %v465 = vpop.f32.mrb[0].mxu0
  %v466 = vadd.f32 %v392, %v465
  %v467 = vpop.f32.mrb[0].mxu0
  %468 = vmatprep.mubr.bf16.mxu0 0
  %469 = vmatmul.mubr.bf16.gmra.mrb[0].mxu0 %v410
  %v470 = vpop.f32.mrb[0].mxu0
  %v471 = vadd.f32 %v392, %v470
  %v472 = vpop.f32.mrb[0].mxu0
  %v473 = vpop.f32.mrb[0].mxu0
  %v474 = vadd.f32 %v392, %v473
  %v475 = vpop.f32.mrb[0].mxu0
  %476 = vdwg.mxu0
  %v477 = vld [vmem:[%s8] sm:$0x1]
  %v478 = vld [vmem:[%s9] sm:$0x1]
  %vm479 = vcmask 261120
  %v480 = vsel %vm479, %v447, 0.0
  %481 = vadd.xlane.f32.xlu0 %v480
  %v482 = vpop.xlane.xlu0 %481
  %v483 = vsel %vm479, %v450, 0.0
  %484 = vadd.xlane.f32.xlu0 %v483
  %v485 = vpop.xlane.xlu0 %484
  %v486 = vsel %vm479, %v455, 0.0
  %487 = vadd.xlane.f32.xlu0 %v486
  %v488 = vpop.xlane.xlu0 %487
  %v489 = vsel %vm479, %v458, 0.0
  %490 = vadd.xlane.f32.xlu0 %v489
  %v491 = vpop.xlane.xlu0 %490
  %v492 = vsel %vm479, %v463, 0.0
  %493 = vadd.xlane.f32.xlu0 %v492
  %v494 = vpop.xlane.xlu0 %493
  %v495 = vsel %vm479, %v466, 0.0
  %496 = vadd.xlane.f32.xlu0 %v495
  %v497 = vpop.xlane.xlu0 %496
  %v498 = vsel %vm479, %v471, 0.0
  %499 = vadd.xlane.f32.xlu0 %v498
  %v500 = vpop.xlane.xlu0 %499
  %v501 = vsel %vm479, %v474, 0.0
  %502 = vadd.xlane.f32.xlu0 %v501
  %v503 = vpop.xlane.xlu0 %502
  %v504 = vrcp.pop 32.0
  %v505 = vmul.f32 %v482, %v504
  %v506 = vmul.f32 %v485, %v504
  %v507 = vmul.f32 %v488, %v504
  %v508 = vmul.f32 %v491, %v504
  %v509 = vmul.f32 %v494, %v504
  %v510 = vmul.f32 %v497, %v504
  %v511 = vmul.f32 %v500, %v504
  %v512 = vmul.f32 %v503, %v504
  %v513 = vsub.f32 %v447, %v505
  %v514 = vsub.f32 %v450, %v506
  %v515 = vsub.f32 %v455, %v507
  %v516 = vsub.f32 %v458, %v508
  %v517 = vsub.f32 %v463, %v509
  %v518 = vsub.f32 %v466, %v510
  %v519 = vsub.f32 %v471, %v511
  %v520 = vsub.f32 %v474, %v512
  %v521 = vmul.f32 %v513, %v513
  %v522 = vmul.f32 %v514, %v514
  %v523 = vmul.f32 %v515, %v515
  %v524 = vmul.f32 %v516, %v516
  %v525 = vmul.f32 %v517, %v517
  %v526 = vmul.f32 %v518, %v518
  %v527 = vmul.f32 %v519, %v519
  %v528 = vmul.f32 %v520, %v520
  %v529 = vsel %vm479, %v521, 0.0
  %530 = vadd.xlane.f32.xlu0 %v529
  %v531 = vpop.xlane.xlu0 %530
  %v532 = vsel %vm479, %v522, 0.0
  %533 = vadd.xlane.f32.xlu0 %v532
  %v534 = vpop.xlane.xlu0 %533
  %v535 = vsel %vm479, %v523, 0.0
  %536 = vadd.xlane.f32.xlu0 %v535
  %v537 = vpop.xlane.xlu0 %536
  %v538 = vsel %vm479, %v524, 0.0
  %539 = vadd.xlane.f32.xlu0 %v538
  %v540 = vpop.xlane.xlu0 %539
  %v541 = vsel %vm479, %v525, 0.0
  %542 = vadd.xlane.f32.xlu0 %v541
  %v543 = vpop.xlane.xlu0 %542
  %v544 = vsel %vm479, %v526, 0.0
  %545 = vadd.xlane.f32.xlu0 %v544
  %v546 = vpop.xlane.xlu0 %545
  %v547 = vsel %vm479, %v527, 0.0
  %548 = vadd.xlane.f32.xlu0 %v547
  %v549 = vpop.xlane.xlu0 %548
  %v550 = vsel %vm479, %v528, 0.0
  %551 = vadd.xlane.f32.xlu0 %v550
  %v552 = vpop.xlane.xlu0 %551
  %v553 = vmul.f32 %v531, %v504
  %v554 = vmul.f32 %v534, %v504
  %v555 = vmul.f32 %v537, %v504
  %v556 = vmul.f32 %v540, %v504
  %v557 = vmul.f32 %v543, %v504
  %v558 = vmul.f32 %v546, %v504
  %v559 = vmul.f32 %v549, %v504
  %v560 = vmul.f32 %v552, %v504
  %v561 = vadd.f32 %v553, 1e-05
  %v562 = vadd.f32 %v554, 1e-05
  %v563 = vadd.f32 %v555, 1e-05
  %v564 = vadd.f32 %v556, 1e-05
  %v565 = vadd.f32 %v557, 1e-05
  %v566 = vadd.f32 %v558, 1e-05
  %v567 = vadd.f32 %v559, 1e-05
  %v568 = vadd.f32 %v560, 1e-05
  %v569 = vrsqrt.pop %v561
  %v570 = vrsqrt.pop %v562
  %v571 = vrsqrt.pop %v563
  %v572 = vrsqrt.pop %v564
  %v573 = vrsqrt.pop %v565
  %v574 = vrsqrt.pop %v566
  %v575 = vrsqrt.pop %v567
  %v576 = vrsqrt.pop %v568
  %v577 = vmul.f32 %v513, %v569
  %v578 = vmul.f32 %v514, %v570
  %v579 = vmul.f32 %v515, %v571
  %v580 = vmul.f32 %v516, %v572
  %v581 = vmul.f32 %v517, %v573
  %v582 = vmul.f32 %v518, %v574
  %v583 = vmul.f32 %v519, %v575
  %v584 = vmul.f32 %v520, %v576
  %v586 = vlaneseq
  %v587 = vshrl.u32 %v586, 7
  %v588 = vsub.s32 0, %v587
  %v589 = vrot.slane %v477, %v588
  %v591 = vmul.f32 %v577, %v589
  %v592 = vmul.f32 %v578, %v589
  %v593 = vmul.f32 %v579, %v589
  %v594 = vmul.f32 %v580, %v589
  %v595 = vmul.f32 %v581, %v589
  %v596 = vmul.f32 %v582, %v589
  %v597 = vmul.f32 %v583, %v589
  %v598 = vmul.f32 %v584, %v589
  %v600 = vlaneseq
  %v601 = vshrl.u32 %v600, 7
  %v602 = vsub.s32 0, %v601
  %v603 = vrot.slane %v478, %v602
  %v605 = vadd.f32 %v591, %v603
  %v606 = vadd.f32 %v592, %v603
  %v607 = vadd.f32 %v593, %v603
  %v608 = vadd.f32 %v594, %v603
  %v609 = vadd.f32 %v595, %v603
  %v610 = vadd.f32 %v596, %v603
  %v611 = vadd.f32 %v597, %v603
  %v612 = vadd.f32 %v598, %v603
  %v613 = vxor.u32 %v605, 2147483648
  %v614 = vxor.u32 %v606, 2147483648
  %v615 = vxor.u32 %v607, 2147483648
  %v616 = vxor.u32 %v608, 2147483648
  %v617 = vxor.u32 %v609, 2147483648
  %v618 = vxor.u32 %v610, 2147483648
  %v619 = vxor.u32 %v611, 2147483648
  %v620 = vxor.u32 %v612, 2147483648
  %v621 = vmul.f32 %v613, 1.442695
  %v622 = vpow.pop %v621
  %v623 = vmul.f32 %v614, 1.442695
  %v624 = vpow.pop %v623
  %v625 = vmul.f32 %v615, 1.442695
  %v626 = vpow.pop %v625
  %v627 = vmul.f32 %v616, 1.442695
  %v628 = vpow.pop %v627
  %v629 = vmul.f32 %v617, 1.442695
  %v630 = vpow.pop %v629
  %v631 = vmul.f32 %v618, 1.442695
  %v632 = vpow.pop %v631
  %v633 = vmul.f32 %v619, 1.442695
  %v634 = vpow.pop %v633
  %v635 = vmul.f32 %v620, 1.442695
  %v636 = vpow.pop %v635
  %v637 = vadd.f32 %v622, 1.0
  %v638 = vadd.f32 %v624, 1.0
  %v639 = vadd.f32 %v626, 1.0
  %v640 = vadd.f32 %v628, 1.0
  %v641 = vadd.f32 %v630, 1.0
  %v642 = vadd.f32 %v632, 1.0
  %v643 = vadd.f32 %v634, 1.0
  %v644 = vadd.f32 %v636, 1.0
  %v645 = vrcp.pop %v637
  %v646 = vmul.f32 1.0, %v645
  %v647 = vrcp.pop %v638
  %v648 = vmul.f32 1.0, %v647
  %v649 = vrcp.pop %v639
  %v650 = vmul.f32 1.0, %v649
  %v651 = vrcp.pop %v640
  %v652 = vmul.f32 1.0, %v651
  %v653 = vrcp.pop %v641
  %v654 = vmul.f32 1.0, %v653
  %v655 = vrcp.pop %v642
  %v656 = vmul.f32 1.0, %v655
  %v657 = vrcp.pop %v643
  %v658 = vmul.f32 1.0, %v657
  %v659 = vrcp.pop %v644
  %v660 = vmul.f32 1.0, %v659
  %v661 = vmul.f32 %v605, %v646
  %v662 = vmul.f32 %v606, %v648
  %v663 = vmul.f32 %v607, %v650
  %v664 = vmul.f32 %v608, %v652
  %v665 = vmul.f32 %v609, %v654
  %v666 = vmul.f32 %v610, %v656
  %v667 = vmul.f32 %v611, %v658
  %v668 = vmul.f32 %v612, %v660
  %v669 = vpack.c.bf16 %v662, %v661
  %v670 = vpack.c.bf16 %v664, %v663
  %v671 = vpack.c.bf16 %v666, %v665
  %v672 = vpack.c.bf16 %v668, %v667
  %v673 = vld [vmem:[%s10] sm:$0xff]
  %v674 = vld [vmem:[%s10 + $0x8] sm:$0xff]
  %v675 = vld [vmem:[%s10 + $0x10] sm:$0xff]
  %v676 = vld [vmem:[%s10 + $0x18] sm:$0xff]
  %v677 = vld [vmem:[%s10 + $0x20] sm:$0xff]
  %v678 = vld [vmem:[%s10 + $0x28] sm:$0xff]
  %v679 = vld [vmem:[%s10 + $0x30] sm:$0xff]
  %v680 = vld [vmem:[%s10 + $0x38] sm:$0xff]
  %v681 = vld [vmem:[%s12] sm:$0xf]
  %v683 = vlaneseq
  %v684 = vshrl.u32 %v683, 7
  %v685 = vsub.s32 0, %v684
  %v686 = vrot.slane %v681, %v685
  %v687 = vlaneseq
  %v688 = vshrl.u32 %v687, 7
  %v689 = vsub.s32 1, %v688
  %v690 = vrot.slane %v681, %v689
  %v691 = vlaneseq
  %v692 = vshrl.u32 %v691, 7
  %v693 = vsub.s32 2, %v692
  %v694 = vrot.slane %v681, %v693
  %v695 = vlaneseq
  %v696 = vshrl.u32 %v695, 7
  %v697 = vsub.s32 3, %v696
  %v698 = vrot.slane %v681, %v697
  %v711 = vunpack.c.l.b16 %v673
  %v712 = vunpack.c.h.b16 %v673
  %v713 = vunpack.c.l.b16 %v674
  %v714 = vunpack.c.h.b16 %v674
  %v715 = vunpack.c.l.b16 %v675
  %v716 = vunpack.c.h.b16 %v675
  %v717 = vunpack.c.l.b16 %v676
  %v718 = vunpack.c.h.b16 %v676
  %v719 = vunpack.c.l.b16 %v677
  %v720 = vunpack.c.h.b16 %v677
  %v721 = vunpack.c.l.b16 %v678
  %v722 = vunpack.c.h.b16 %v678
  %v723 = vunpack.c.l.b16 %v679
  %v724 = vunpack.c.h.b16 %v679
  %v725 = vunpack.c.l.b16 %v680
  %v726 = vunpack.c.h.b16 %v680
  %v727 = vpack.c.b16 %v715, %v711
  %v728 = vpack.c.b16 %v716, %v712
  %v729 = vpack.c.b16 %v717, %v713
  %v730 = vpack.c.b16 %v718, %v714
  %v731 = vpack.c.b16 %v723, %v719
  %v732 = vpack.c.b16 %v724, %v720
  %v733 = vpack.c.b16 %v725, %v721
  %v734 = vpack.c.b16 %v726, %v722
  %v744 = vsel %vm479, %v669, 0
  %v747 = vsel %vm479, %v670, 0
  %v750 = vsel %vm479, %v671, 0
  %v753 = vsel %vm479, %v672, 0
  %755 = vmatprep.subr.bf16.mxu0 %v728
  %756 = vmatpush1.bf16.msra.mxu0 %v727
  %757 = vmatprep.subr.bf16.mxu0 %v732
  %758 = vmatpush1.bf16.msra.mxu0 %v731
  %759 = vmatprep.subr.bf16.mxu0 0
  %760 = vmatpush1.bf16.msra.mxu0 0
  %761 = vmatprep.subr.bf16.mxu0 0
  %762 = vmatpush1.bf16.msra.mxu0 0
  %763 = vmatprep.subr.bf16.mxu0 0
  %764 = vmatpush1.bf16.msra.mxu0 0
  %765 = vmatprep.subr.bf16.mxu0 0
  %766 = vmatpush1.bf16.msra.mxu0 0
  %767 = vmatprep.subr.bf16.mxu0 0
  %768 = vmatpush1.bf16.msra.mxu0 0
  %769 = vmatprep.subr.bf16.mxu0 0
  %770 = vmatpush1.bf16.msra.mxu0 0
  %771 = vmatprep.subr.bf16.mxu0 0
  %772 = vmatpush1.bf16.msra.mxu0 0
  %773 = vmatprep.subr.bf16.mxu0 0
  %774 = vmatpush1.bf16.msra.mxu0 0
  %775 = vmatprep.subr.bf16.mxu0 0
  %776 = vmatpush1.bf16.msra.mxu0 0
  %777 = vmatprep.subr.bf16.mxu0 0
  %778 = vmatpush1.bf16.msra.mxu0 0
  %779 = vmatprep.subr.bf16.mxu0 0
  %780 = vmatpush1.bf16.msra.mxu0 0
  %781 = vmatprep.subr.bf16.mxu0 0
  %782 = vmatpush1.bf16.msra.mxu0 0
  %783 = vmatprep.subr.bf16.mxu0 0
  %784 = vmatpush1.bf16.msra.mxu0 0
  %785 = vmatprep.subr.bf16.mxu0 0
  %786 = vmatpush1.bf16.msra.mxu0 0
  %787 = vmatprep.mubr.bf16.mxu0 0
  %788 = vmatmul.mubr.bf16.gmra.mrb[0].mxu0 %v744
  %v789 = vpop.f32.mrb[0].mxu0
  %v790 = vadd.f32 %v686, %v789
  %v791 = vpop.f32.mrb[0].mxu0
  %v792 = vadd.f32 %v690, %v791
  %v793 = vpop.f32.mrb[0].mxu0
  %v794 = vadd.f32 %v686, %v793
  %v795 = vpop.f32.mrb[0].mxu0
  %v796 = vadd.f32 %v690, %v795
  %797 = vmatprep.mubr.bf16.mxu0 0
  %798 = vmatmul.mubr.bf16.gmra.mrb[0].mxu0 %v747
  %v799 = vpop.f32.mrb[0].mxu0
  %v800 = vadd.f32 %v686, %v799
  %v801 = vpop.f32.mrb[0].mxu0
  %v802 = vadd.f32 %v690, %v801
  %v803 = vpop.f32.mrb[0].mxu0
  %v804 = vadd.f32 %v686, %v803
  %v805 = vpop.f32.mrb[0].mxu0
  %v806 = vadd.f32 %v690, %v805
  %807 = vmatprep.mubr.bf16.mxu0 0
  %808 = vmatmul.mubr.bf16.gmra.mrb[0].mxu0 %v750
  %v809 = vpop.f32.mrb[0].mxu0
  %v810 = vadd.f32 %v686, %v809
  %v811 = vpop.f32.mrb[0].mxu0
  %v812 = vadd.f32 %v690, %v811
  %v813 = vpop.f32.mrb[0].mxu0
  %v814 = vadd.f32 %v686, %v813
  %v815 = vpop.f32.mrb[0].mxu0
  %v816 = vadd.f32 %v690, %v815
  %817 = vmatprep.mubr.bf16.mxu0 0
  %818 = vmatmul.mubr.bf16.gmra.mrb[0].mxu0 %v753
  %v819 = vpop.f32.mrb[0].mxu0
  %v820 = vadd.f32 %v686, %v819
  %v821 = vpop.f32.mrb[0].mxu0
  %v822 = vadd.f32 %v690, %v821
  %v823 = vpop.f32.mrb[0].mxu0
  %v824 = vadd.f32 %v686, %v823
  %v825 = vpop.f32.mrb[0].mxu0
  %v826 = vadd.f32 %v690, %v825
  %827 = vdwg.mxu0
  %828 = vmatprep.subr.bf16.mxu0 %v730
  %829 = vmatpush1.bf16.msra.mxu0 %v729
  %830 = vmatprep.subr.bf16.mxu0 %v734
  %831 = vmatpush1.bf16.msra.mxu0 %v733
  %832 = vmatprep.subr.bf16.mxu0 0
  %833 = vmatpush1.bf16.msra.mxu0 0
  %834 = vmatprep.subr.bf16.mxu0 0
  %835 = vmatpush1.bf16.msra.mxu0 0
  %836 = vmatprep.subr.bf16.mxu0 0
  %837 = vmatpush1.bf16.msra.mxu0 0
  %838 = vmatprep.subr.bf16.mxu0 0
  %839 = vmatpush1.bf16.msra.mxu0 0
  %840 = vmatprep.subr.bf16.mxu0 0
  %841 = vmatpush1.bf16.msra.mxu0 0
  %842 = vmatprep.subr.bf16.mxu0 0
  %843 = vmatpush1.bf16.msra.mxu0 0
  %844 = vmatprep.subr.bf16.mxu0 0
  %845 = vmatpush1.bf16.msra.mxu0 0
  %846 = vmatprep.subr.bf16.mxu0 0
  %847 = vmatpush1.bf16.msra.mxu0 0
  %848 = vmatprep.subr.bf16.mxu0 0
  %849 = vmatpush1.bf16.msra.mxu0 0
  %850 = vmatprep.subr.bf16.mxu0 0
  %851 = vmatpush1.bf16.msra.mxu0 0
  %852 = vmatprep.subr.bf16.mxu0 0
  %853 = vmatpush1.bf16.msra.mxu0 0
  %854 = vmatprep.subr.bf16.mxu0 0
  %855 = vmatpush1.bf16.msra.mxu0 0
  %856 = vmatprep.subr.bf16.mxu0 0
  %857 = vmatpush1.bf16.msra.mxu0 0
  %858 = vmatprep.subr.bf16.mxu0 0
  %859 = vmatpush1.bf16.msra.mxu0 0
  %860 = vmatprep.mubr.bf16.mxu0 0
  %861 = vmatmul.mubr.bf16.gmra.mrb[0].mxu0 %v744
  %v862 = vpop.f32.mrb[0].mxu0
  %v863 = vadd.f32 %v694, %v862
  %v864 = vpop.f32.mrb[0].mxu0
  %v865 = vadd.f32 %v698, %v864
  %v866 = vpop.f32.mrb[0].mxu0
  %v867 = vadd.f32 %v694, %v866
  %v868 = vpop.f32.mrb[0].mxu0
  %v869 = vadd.f32 %v698, %v868
  %870 = vmatprep.mubr.bf16.mxu0 0
  %871 = vmatmul.mubr.bf16.gmra.mrb[0].mxu0 %v747
  %v872 = vpop.f32.mrb[0].mxu0
  %v873 = vadd.f32 %v694, %v872
  %v874 = vpop.f32.mrb[0].mxu0
  %v875 = vadd.f32 %v698, %v874
  %v876 = vpop.f32.mrb[0].mxu0
  %v877 = vadd.f32 %v694, %v876
  %v878 = vpop.f32.mrb[0].mxu0
  %v879 = vadd.f32 %v698, %v878
  %880 = vmatprep.mubr.bf16.mxu0 0
  %881 = vmatmul.mubr.bf16.gmra.mrb[0].mxu0 %v750
  %v882 = vpop.f32.mrb[0].mxu0
  %v883 = vadd.f32 %v694, %v882
  %v884 = vpop.f32.mrb[0].mxu0
  %v885 = vadd.f32 %v698, %v884
  %v886 = vpop.f32.mrb[0].mxu0
  %v887 = vadd.f32 %v694, %v886
  %v888 = vpop.f32.mrb[0].mxu0
  %v889 = vadd.f32 %v698, %v888
  %890 = vmatprep.mubr.bf16.mxu0 0
  %891 = vmatmul.mubr.bf16.gmra.mrb[0].mxu0 %v753
  %v892 = vpop.f32.mrb[0].mxu0
  %v893 = vadd.f32 %v694, %v892
  %v894 = vpop.f32.mrb[0].mxu0
  %v895 = vadd.f32 %v698, %v894
  %v896 = vpop.f32.mrb[0].mxu0
  %v897 = vadd.f32 %v694, %v896
  %v898 = vpop.f32.mrb[0].mxu0
  %v899 = vadd.f32 %v698, %v898
  %900 = vdwg.mxu0
  %901 = vst [vmem:[#allocation2] sm:$0xff] %v790
  %902 = vst [vmem:[#allocation2 + $0x8] sm:$0xff] %v792
  %903 = vst [vmem:[#allocation2 + $0x10] sm:$0xff] %v863
  %904 = vst [vmem:[#allocation2 + $0x18] sm:$0xff] %v865
  %905 = vst [vmem:[#allocation2 + $0x20] sm:$0xff] %v794
  %906 = vst [vmem:[#allocation2 + $0x28] sm:$0xff] %v796
  %907 = vst [vmem:[#allocation2 + $0x30] sm:$0xff] %v867
  %908 = vst [vmem:[#allocation2 + $0x38] sm:$0xff] %v869
  %909 = vst [vmem:[#allocation2 + $0x40] sm:$0xff] %v800
  %910 = vst [vmem:[#allocation2 + $0x48] sm:$0xff] %v802
  %911 = vst [vmem:[#allocation2 + $0x50] sm:$0xff] %v873
  %912 = vst [vmem:[#allocation2 + $0x58] sm:$0xff] %v875
  %913 = vst [vmem:[#allocation2 + $0x60] sm:$0xff] %v804
  %914 = vst [vmem:[#allocation2 + $0x68] sm:$0xff] %v806
  %915 = vst [vmem:[#allocation2 + $0x70] sm:$0xff] %v877
  %916 = vst [vmem:[#allocation2 + $0x78] sm:$0xff] %v879
  %917 = vst [vmem:[#allocation2 + $0x80] sm:$0xff] %v810
  %918 = vst [vmem:[#allocation2 + $0x88] sm:$0xff] %v812
  %919 = vst [vmem:[#allocation2 + $0x90] sm:$0xff] %v883
  %920 = vst [vmem:[#allocation2 + $0x98] sm:$0xff] %v885
  %921 = vst [vmem:[#allocation2 + $0xa0] sm:$0xff] %v814
  %922 = vst [vmem:[#allocation2 + $0xa8] sm:$0xff] %v816
  %923 = vst [vmem:[#allocation2 + $0xb0] sm:$0xff] %v887
  %924 = vst [vmem:[#allocation2 + $0xb8] sm:$0xff] %v889
  %925 = vst [vmem:[#allocation2 + $0xc0] sm:$0xff] %v820
  %926 = vst [vmem:[#allocation2 + $0xc8] sm:$0xff] %v822
  %927 = vst [vmem:[#allocation2 + $0xd0] sm:$0xff] %v893
  %928 = vst [vmem:[#allocation2 + $0xd8] sm:$0xff] %v895
  %929 = vst [vmem:[#allocation2 + $0xe0] sm:$0xff] %v824
  %930 = vst [vmem:[#allocation2 + $0xe8] sm:$0xff] %v826
  %931 = vst [vmem:[#allocation2 + $0xf0] sm:$0xff] %v897
  %932 = vst [vmem:[#allocation2 + $0xf8] sm:$0xff] %v899
  %s933 = smul.u32 0, 4
  %s934 = smul.addr %s933, 8
  %s935 = scalar_lea.vmem [#allocation2], %s934
  %v936 = vld [vmem:[%s935] sm:$0xff]
  %v937 = vld [vmem:[%s935 + $0x8] sm:$0xff]
  %v938 = vld [vmem:[%s935 + $0x10] sm:$0xff]
  %v939 = vld [vmem:[%s935 + $0x18] sm:$0xff]
  %v940 = vld [vmem:[%s11] sm:$0xff]
  %v941 = vld [vmem:[%s11 + $0x8] sm:$0xff]
  %v942 = vld [vmem:[%s11 + $0x10] sm:$0xff]
  %v943 = vld [vmem:[%s11 + $0x18] sm:$0xff]
  %v944 = vld [vmem:[%s11 + $0x20] sm:$0xff]
  %v945 = vld [vmem:[%s11 + $0x28] sm:$0xff]
  %v946 = vld [vmem:[%s11 + $0x30] sm:$0xff]
  %v947 = vld [vmem:[%s11 + $0x38] sm:$0xff]
  %v948 = vld [vmem:[%s11 + $0x40] sm:$0xff]
  %v949 = vld [vmem:[%s11 + $0x48] sm:$0xff]
  %v950 = vld [vmem:[%s11 + $0x50] sm:$0xff]
  %v951 = vld [vmem:[%s11 + $0x58] sm:$0xff]
  %v952 = vld [vmem:[%s11 + $0x60] sm:$0xff]
  %v953 = vld [vmem:[%s11 + $0x68] sm:$0xff]
  %v954 = vld [vmem:[%s11 + $0x70] sm:$0xff]
  %v955 = vld [vmem:[%s11 + $0x78] sm:$0xff]
  %v956 = vld [vmem:[%s11 + $0x80] sm:$0xff]
  %v957 = vld [vmem:[%s11 + $0x88] sm:$0xff]
  %v958 = vld [vmem:[%s11 + $0x90] sm:$0xff]
  %v959 = vld [vmem:[%s11 + $0x98] sm:$0xff]
  %v960 = vld [vmem:[%s11 + $0xa0] sm:$0xff]
  %v961 = vld [vmem:[%s11 + $0xa8] sm:$0xff]
  %v962 = vld [vmem:[%s11 + $0xb0] sm:$0xff]
  %v963 = vld [vmem:[%s11 + $0xb8] sm:$0xff]
  %v964 = vld [vmem:[%s11 + $0xc0] sm:$0xff]
  %v965 = vld [vmem:[%s11 + $0xc8] sm:$0xff]
  %v966 = vld [vmem:[%s11 + $0xd0] sm:$0xff]
  %v967 = vld [vmem:[%s11 + $0xd8] sm:$0xff]
  %v968 = vld [vmem:[%s11 + $0xe0] sm:$0xff]
  %v969 = vld [vmem:[%s11 + $0xe8] sm:$0xff]
  %v970 = vld [vmem:[%s11 + $0xf0] sm:$0xff]
  %v971 = vld [vmem:[%s11 + $0xf8] sm:$0xff]
  %v1004 = vunpack.c.l.b16 %v940
  %v1005 = vunpack.c.h.b16 %v940
  %v1006 = vunpack.c.l.b16 %v941
  %v1007 = vunpack.c.h.b16 %v941
  %v1008 = vunpack.c.l.b16 %v942
  %v1009 = vunpack.c.h.b16 %v942
  %v1010 = vunpack.c.l.b16 %v943
  %v1011 = vunpack.c.h.b16 %v943
  %v1012 = vunpack.c.l.b16 %v944
  %v1013 = vunpack.c.h.b16 %v944
  %v1014 = vunpack.c.l.b16 %v945
  %v1015 = vunpack.c.h.b16 %v945
  %v1016 = vunpack.c.l.b16 %v946
  %v1017 = vunpack.c.h.b16 %v946
  %v1018 = vunpack.c.l.b16 %v947
  %v1019 = vunpack.c.h.b16 %v947
  %v1020 = vunpack.c.l.b16 %v948
  %v1021 = vunpack.c.h.b16 %v948
  %v1022 = vunpack.c.l.b16 %v949
  %v1023 = vunpack.c.h.b16 %v949
  %v1024 = vunpack.c.l.b16 %v950
  %v1025 = vunpack.c.h.b16 %v950
  %v1026 = vunpack.c.l.b16 %v951
  %v1027 = vunpack.c.h.b16 %v951
  %v1028 = vunpack.c.l.b16 %v952
  %v1029 = vunpack.c.h.b16 %v952
  %v1030 = vunpack.c.l.b16 %v953
  %v1031 = vunpack.c.h.b16 %v953
  %v1032 = vunpack.c.l.b16 %v954
  %v1033 = vunpack.c.h.b16 %v954
  %v1034 = vunpack.c.l.b16 %v955
  %v1035 = vunpack.c.h.b16 %v955
  %v1036 = vunpack.c.l.b16 %v956
  %v1037 = vunpack.c.h.b16 %v956
  %v1038 = vunpack.c.l.b16 %v957
  %v1039 = vunpack.c.h.b16 %v957
  %v1040 = vunpack.c.l.b16 %v958
  %v1041 = vunpack.c.h.b16 %v958
  %v1042 = vunpack.c.l.b16 %v959
  %v1043 = vunpack.c.h.b16 %v959
  %v1044 = vunpack.c.l.b16 %v960
  %v1045 = vunpack.c.h.b16 %v960
  %v1046 = vunpack.c.l.b16 %v961
  %v1047 = vunpack.c.h.b16 %v961
  %v1048 = vunpack.c.l.b16 %v962
  %v1049 = vunpack.c.h.b16 %v962
  %v1050 = vunpack.c.l.b16 %v963
  %v1051 = vunpack.c.h.b16 %v963
  %v1052 = vunpack.c.l.b16 %v964
  %v1053 = vunpack.c.h.b16 %v964
  %v1054 = vunpack.c.l.b16 %v965
  %v1055 = vunpack.c.h.b16 %v965
  %v1056 = vunpack.c.l.b16 %v966
  %v1057 = vunpack.c.h.b16 %v966
  %v1058 = vunpack.c.l.b16 %v967
  %v1059 = vunpack.c.h.b16 %v967
  %v1060 = vunpack.c.l.b16 %v968
  %v1061 = vunpack.c.h.b16 %v968
  %v1062 = vunpack.c.l.b16 %v969
  %v1063 = vunpack.c.h.b16 %v969
  %v1064 = vunpack.c.l.b16 %v970
  %v1065 = vunpack.c.h.b16 %v970
  %v1066 = vunpack.c.l.b16 %v971
  %v1067 = vunpack.c.h.b16 %v971
  %v1068 = vpack.c.b16 %v1008, %v1004
  %v1069 = vpack.c.b16 %v1009, %v1005
  %v1070 = vpack.c.b16 %v1010, %v1006
  %v1071 = vpack.c.b16 %v1011, %v1007
  %v1072 = vpack.c.b16 %v1016, %v1012
  %v1073 = vpack.c.b16 %v1017, %v1013
  %v1074 = vpack.c.b16 %v1018, %v1014
  %v1075 = vpack.c.b16 %v1019, %v1015
  %v1076 = vpack.c.b16 %v1024, %v1020
  %v1077 = vpack.c.b16 %v1025, %v1021
  %v1078 = vpack.c.b16 %v1026, %v1022
  %v1079 = vpack.c.b16 %v1027, %v1023
  %v1080 = vpack.c.b16 %v1032, %v1028
  %v1081 = vpack.c.b16 %v1033, %v1029
  %v1082 = vpack.c.b16 %v1034, %v1030
  %v1083 = vpack.c.b16 %v1035, %v1031
  %v1084 = vpack.c.b16 %v1040, %v1036
  %v1085 = vpack.c.b16 %v1041, %v1037
  %v1086 = vpack.c.b16 %v1042, %v1038
  %v1087 = vpack.c.b16 %v1043, %v1039
  %v1088 = vpack.c.b16 %v1048, %v1044
  %v1089 = vpack.c.b16 %v1049, %v1045
  %v1090 = vpack.c.b16 %v1050, %v1046
  %v1091 = vpack.c.b16 %v1051, %v1047
  %v1092 = vpack.c.b16 %v1056, %v1052
  %v1093 = vpack.c.b16 %v1057, %v1053
  %v1094 = vpack.c.b16 %v1058, %v1054
  %v1095 = vpack.c.b16 %v1059, %v1055
  %v1096 = vpack.c.b16 %v1064, %v1060
  %v1097 = vpack.c.b16 %v1065, %v1061
  %v1098 = vpack.c.b16 %v1066, %v1062
  %v1099 = vpack.c.b16 %v1067, %v1063
  %1132 = vmatprep.subr.bf16.mxu0 %v1069
  %1133 = vmatpush1.bf16.msra.mxu0 %v1068
  %1134 = vmatprep.subr.bf16.mxu0 %v1073
  %1135 = vmatpush1.bf16.msra.mxu0 %v1072
  %1136 = vmatprep.subr.bf16.mxu0 %v1077
  %1137 = vmatpush1.bf16.msra.mxu0 %v1076
  %1138 = vmatprep.subr.bf16.mxu0 %v1081
  %1139 = vmatpush1.bf16.msra.mxu0 %v1080
  %1140 = vmatprep.subr.bf16.mxu0 %v1085
  %1141 = vmatpush1.bf16.msra.mxu0 %v1084
  %1142 = vmatprep.subr.bf16.mxu0 %v1089
  %1143 = vmatpush1.bf16.msra.mxu0 %v1088
  %1144 = vmatprep.subr.bf16.mxu0 %v1093
  %1145 = vmatpush1.bf16.msra.mxu0 %v1092
  %1146 = vmatprep.subr.bf16.mxu0 %v1097
  %1147 = vmatpush1.bf16.msra.mxu0 %v1096
  %1148 = vmatprep.subr.bf16.mxu0 0
  %1149 = vmatpush1.bf16.msra.mxu0 0
  %1150 = vmatprep.subr.bf16.mxu0 0
  %1151 = vmatpush1.bf16.msra.mxu0 0
  %1152 = vmatprep.subr.bf16.mxu0 0
  %1153 = vmatpush1.bf16.msra.mxu0 0
  %1154 = vmatprep.subr.bf16.mxu0 0
  %1155 = vmatpush1.bf16.msra.mxu0 0
  %1156 = vmatprep.subr.bf16.mxu0 0
  %1157 = vmatpush1.bf16.msra.mxu0 0
  %1158 = vmatprep.subr.bf16.mxu0 0
  %1159 = vmatpush1.bf16.msra.mxu0 0
  %1160 = vmatprep.subr.bf16.mxu0 0
  %1161 = vmatpush1.bf16.msra.mxu0 0
  %1162 = vmatprep.subr.bf16.mxu0 0
  %1163 = vmatpush1.bf16.msra.mxu0 0
  %1164 = vmatprep.mubr.bf16.mxu0 0
  %1165 = vmatmul.mubr.bf16.gmra.mrb[0].mxu0 0
  %v1166 = vpop.f32.mrb[0].mxu0
  %v1167 = vadd.f32 0.0, %v1166
  %v1168 = vpop.f32.mrb[0].mxu0
  %v1169 = vadd.f32 0.0, %v1168
  %v1170 = vpop.f32.mrb[0].mxu0
  %v1171 = vpop.f32.mrb[0].mxu0
  %1172 = vdwg.mxu0
  %1173 = vmatprep.subr.bf16.mxu0 %v1071
  %1174 = vmatpush1.bf16.msra.mxu0 %v1070
  %1175 = vmatprep.subr.bf16.mxu0 %v1075
  %1176 = vmatpush1.bf16.msra.mxu0 %v1074
  %1177 = vmatprep.subr.bf16.mxu0 %v1079
  %1178 = vmatpush1.bf16.msra.mxu0 %v1078
  %1179 = vmatprep.subr.bf16.mxu0 %v1083
  %1180 = vmatpush1.bf16.msra.mxu0 %v1082
  %1181 = vmatprep.subr.bf16.mxu0 %v1087
  %1182 = vmatpush1.bf16.msra.mxu0 %v1086
  %1183 = vmatprep.subr.bf16.mxu0 %v1091
  %1184 = vmatpush1.bf16.msra.mxu0 %v1090
  %1185 = vmatprep.subr.bf16.mxu0 %v1095
  %1186 = vmatpush1.bf16.msra.mxu0 %v1094
  %1187 = vmatprep.subr.bf16.mxu0 %v1099
  %1188 = vmatpush1.bf16.msra.mxu0 %v1098
  %1189 = vmatprep.subr.bf16.mxu0 0
  %1190 = vmatpush1.bf16.msra.mxu0 0
  %1191 = vmatprep.subr.bf16.mxu0 0
  %1192 = vmatpush1.bf16.msra.mxu0 0
  %1193 = vmatprep.subr.bf16.mxu0 0
  %1194 = vmatpush1.bf16.msra.mxu0 0
  %1195 = vmatprep.subr.bf16.mxu0 0
  %1196 = vmatpush1.bf16.msra.mxu0 0
  %1197 = vmatprep.subr.bf16.mxu0 0
  %1198 = vmatpush1.bf16.msra.mxu0 0
  %1199 = vmatprep.subr.bf16.mxu0 0
  %1200 = vmatpush1.bf16.msra.mxu0 0
  %1201 = vmatprep.subr.bf16.mxu0 0
  %1202 = vmatpush1.bf16.msra.mxu0 0
  %1203 = vmatprep.subr.bf16.mxu0 0
  %1204 = vmatpush1.bf16.msra.mxu0 0
  %1205 = vmatprep.mubr.bf16.mxu0 0
  %1206 = vmatmul.mubr.bf16.gmra.mrb[0].mxu0 0
  %v1207 = vpop.f32.mrb[0].mxu0
  %v1208 = vadd.f32 0.0, %v1207
  %v1209 = vpop.f32.mrb[0].mxu0
  %v1210 = vadd.f32 0.0, %v1209
  %v1211 = vpop.f32.mrb[0].mxu0
  %v1212 = vpop.f32.mrb[0].mxu0
  %1213 = vdwg.mxu0
  %v1214 = vadd.f32 %v936, %v1167
  %v1215 = vadd.f32 %v937, %v1169
  %v1216 = vadd.f32 %v938, %v1208
  %v1217 = vadd.f32 %v939, %v1210
  %v1218 = vxor.u32 %v1214, 2147483648
  %v1219 = vxor.u32 %v1215, 2147483648
  %v1220 = vxor.u32 %v1216, 2147483648
  %v1221 = vmul.f32 %v1218, 1.442695
  %v1222 = vpow.pop %v1221
  %v1223 = vmul.f32 %v1219, 1.442695
  %v1224 = vpow.pop %v1223
  %v1225 = vmul.f32 %v1220, 1.442695
  %v1226 = vpow.pop %v1225
  %v1227 = vadd.f32 %v1222, 1.0
  %v1228 = vadd.f32 %v1224, 1.0
  %v1229 = vadd.f32 %v1226, 1.0
  %v1230 = vrcp.pop %v1227
  %v1231 = vmul.f32 1.0, %v1230
  %v1232 = vrcp.pop %v1228
  %v1233 = vmul.f32 1.0, %v1232
  %v1234 = vrcp.pop %v1229
  %v1235 = vmul.f32 1.0, %v1234
  %v1236 = vtanh.pop %v1217
  %v1237 = vmul.f32 %v1233, 0.0
  %v1238 = vmul.f32 %v1231, %v1236
  %v1239 = vadd.f32 %v1237, %v1238
  %v1240 = vtanh.pop %v1239
  %v1241 = vmul.f32 %v1235, %v1240
  %1242 = vst [vmem:[#allocation3] sm:$0xff] %v1241
  %s1243 = smul.u32 1, 4
  %s1244 = smul.addr %s1243, 8
  %s1245 = scalar_lea.vmem [#allocation2], %s1244
  %v1246 = vld [vmem:[%s1245] sm:$0xff]
  %v1247 = vld [vmem:[%s1245 + $0x8] sm:$0xff]
  %v1248 = vld [vmem:[%s1245 + $0x10] sm:$0xff]
  %v1249 = vld [vmem:[%s1245 + $0x18] sm:$0xff]
  %v1250 = vpack.c.bf16 %v1241, %v1241
  %v1251 = vld [vmem:[%s11] sm:$0xff]
  %v1252 = vld [vmem:[%s11 + $0x8] sm:$0xff]
  %v1253 = vld [vmem:[%s11 + $0x10] sm:$0xff]
  %v1254 = vld [vmem:[%s11 + $0x18] sm:$0xff]
  %v1255 = vld [vmem:[%s11 + $0x20] sm:$0xff]
  %v1256 = vld [vmem:[%s11 + $0x28] sm:$0xff]
  %v1257 = vld [vmem:[%s11 + $0x30] sm:$0xff]
  %v1258 = vld [vmem:[%s11 + $0x38] sm:$0xff]
  %v1259 = vld [vmem:[%s11 + $0x40] sm:$0xff]
  %v1260 = vld [vmem:[%s11 + $0x48] sm:$0xff]
  %v1261 = vld [vmem:[%s11 + $0x50] sm:$0xff]
  %v1262 = vld [vmem:[%s11 + $0x58] sm:$0xff]
  %v1263 = vld [vmem:[%s11 + $0x60] sm:$0xff]
  %v1264 = vld [vmem:[%s11 + $0x68] sm:$0xff]
  %v1265 = vld [vmem:[%s11 + $0x70] sm:$0xff]
  %v1266 = vld [vmem:[%s11 + $0x78] sm:$0xff]
  %v1267 = vld [vmem:[%s11 + $0x80] sm:$0xff]
  %v1268 = vld [vmem:[%s11 + $0x88] sm:$0xff]
  %v1269 = vld [vmem:[%s11 + $0x90] sm:$0xff]
  %v1270 = vld [vmem:[%s11 + $0x98] sm:$0xff]
  %v1271 = vld [vmem:[%s11 + $0xa0] sm:$0xff]
  %v1272 = vld [vmem:[%s11 + $0xa8] sm:$0xff]
  %v1273 = vld [vmem:[%s11 + $0xb0] sm:$0xff]
  %v1274 = vld [vmem:[%s11 + $0xb8] sm:$0xff]
  %v1275 = vld [vmem:[%s11 + $0xc0] sm:$0xff]
  %v1276 = vld [vmem:[%s11 + $0xc8] sm:$0xff]
  %v1277 = vld [vmem:[%s11 + $0xd0] sm:$0xff]
  %v1278 = vld [vmem:[%s11 + $0xd8] sm:$0xff]
  %v1279 = vld [vmem:[%s11 + $0xe0] sm:$0xff]
  %v1280 = vld [vmem:[%s11 + $0xe8] sm:$0xff]
  %v1281 = vld [vmem:[%s11 + $0xf0] sm:$0xff]
  %v1282 = vld [vmem:[%s11 + $0xf8] sm:$0xff]
  %v1315 = vunpack.c.l.b16 %v1251
  %v1316 = vunpack.c.h.b16 %v1251
  %v1317 = vunpack.c.l.b16 %v1252
  %v1318 = vunpack.c.h.b16 %v1252
  %v1319 = vunpack.c.l.b16 %v1253
  %v1320 = vunpack.c.h.b16 %v1253
  %v1321 = vunpack.c.l.b16 %v1254
  %v1322 = vunpack.c.h.b16 %v1254
  %v1323 = vunpack.c.l.b16 %v1255
  %v1324 = vunpack.c.h.b16 %v1255
  %v1325 = vunpack.c.l.b16 %v1256
  %v1326 = vunpack.c.h.b16 %v1256
  %v1327 = vunpack.c.l.b16 %v1257
  %v1328 = vunpack.c.h.b16 %v1257
  %v1329 = vunpack.c.l.b16 %v1258
  %v1330 = vunpack.c.h.b16 %v1258
  %v1331 = vunpack.c.l.b16 %v1259
  %v1332 = vunpack.c.h.b16 %v1259
  %v1333 = vunpack.c.l.b16 %v1260
  %v1334 = vunpack.c.h.b16 %v1260
  %v1335 = vunpack.c.l.b16 %v1261
  %v1336 = vunpack.c.h.b16 %v1261
  %v1337 = vunpack.c.l.b16 %v1262
  %v1338 = vunpack.c.h.b16 %v1262
  %v1339 = vunpack.c.l.b16 %v1263
  %v1340 = vunpack.c.h.b16 %v1263
  %v1341 = vunpack.c.l.b16 %v1264
  %v1342 = vunpack.c.h.b16 %v1264
  %v1343 = vunpack.c.l.b16 %v1265
  %v1344 = vunpack.c.h.b16 %v1265
  %v1345 = vunpack.c.l.b16 %v1266
  %v1346 = vunpack.c.h.b16 %v1266
  %v1347 = vunpack.c.l.b16 %v1267
  %v1348 = vunpack.c.h.b16 %v1267
  %v1349 = vunpack.c.l.b16 %v1268
  %v1350 = vunpack.c.h.b16 %v1268
  %v1351 = vunpack.c.l.b16 %v1269
  %v1352 = vunpack.c.h.b16 %v1269
  %v1353 = vunpack.c.l.b16 %v1270
  %v1354 = vunpack.c.h.b16 %v1270
  %v1355 = vunpack.c.l.b16 %v1271
  %v1356 = vunpack.c.h.b16 %v1271
  %v1357 = vunpack.c.l.b16 %v1272
  %v1358 = vunpack.c.h.b16 %v1272
  %v1359 = vunpack.c.l.b16 %v1273
  %v1360 = vunpack.c.h.b16 %v1273
  %v1361 = vunpack.c.l.b16 %v1274
  %v1362 = vunpack.c.h.b16 %v1274
  %v1363 = vunpack.c.l.b16 %v1275
  %v1364 = vunpack.c.h.b16 %v1275
  %v1365 = vunpack.c.l.b16 %v1276
  %v1366 = vunpack.c.h.b16 %v1276
  %v1367 = vunpack.c.l.b16 %v1277
  %v1368 = vunpack.c.h.b16 %v1277
  %v1369 = vunpack.c.l.b16 %v1278
  %v1370 = vunpack.c.h.b16 %v1278
  %v1371 = vunpack.c.l.b16 %v1279
  %v1372 = vunpack.c.h.b16 %v1279
  %v1373 = vunpack.c.l.b16 %v1280
  %v1374 = vunpack.c.h.b16 %v1280
  %v1375 = vunpack.c.l.b16 %v1281
  %v1376 = vunpack.c.h.b16 %v1281
  %v1377 = vunpack.c.l.b16 %v1282
  %v1378 = vunpack.c.h.b16 %v1282
  %v1379 = vpack.c.b16 %v1319, %v1315
  %v1380 = vpack.c.b16 %v1320, %v1316
  %v1381 = vpack.c.b16 %v1321, %v1317
  %v1382 = vpack.c.b16 %v1322, %v1318
  %v1383 = vpack.c.b16 %v1327, %v1323
  %v1384 = vpack.c.b16 %v1328, %v1324
  %v1385 = vpack.c.b16 %v1329, %v1325
  %v1386 = vpack.c.b16 %v1330, %v1326
  %v1387 = vpack.c.b16 %v1335, %v1331
  %v1388 = vpack.c.b16 %v1336, %v1332
  %v1389 = vpack.c.b16 %v1337, %v1333
  %v1390 = vpack.c.b16 %v1338, %v1334
  %v1391 = vpack.c.b16 %v1343, %v1339
  %v1392 = vpack.c.b16 %v1344, %v1340
  %v1393 = vpack.c.b16 %v1345, %v1341
  %v1394 = vpack.c.b16 %v1346, %v1342
  %v1395 = vpack.c.b16 %v1351, %v1347
  %v1396 = vpack.c.b16 %v1352, %v1348
  %v1397 = vpack.c.b16 %v1353, %v1349
  %v1398 = vpack.c.b16 %v1354, %v1350
  %v1399 = vpack.c.b16 %v1359, %v1355
  %v1400 = vpack.c.b16 %v1360, %v1356
  %v1401 = vpack.c.b16 %v1361, %v1357
  %v1402 = vpack.c.b16 %v1362, %v1358
  %v1403 = vpack.c.b16 %v1367, %v1363
  %v1404 = vpack.c.b16 %v1368, %v1364
  %v1405 = vpack.c.b16 %v1369, %v1365
  %v1406 = vpack.c.b16 %v1370, %v1366
  %v1407 = vpack.c.b16 %v1375, %v1371
  %v1408 = vpack.c.b16 %v1376, %v1372
  %v1409 = vpack.c.b16 %v1377, %v1373
  %v1410 = vpack.c.b16 %v1378, %v1374
  %1443 = vmatprep.subr.bf16.mxu0 %v1380
  %1444 = vmatpush1.bf16.msra.mxu0 %v1379
  %1445 = vmatprep.subr.bf16.mxu0 %v1384
  %1446 = vmatpush1.bf16.msra.mxu0 %v1383
  %1447 = vmatprep.subr.bf16.mxu0 %v1388
  %1448 = vmatpush1.bf16.msra.mxu0 %v1387
  %1449 = vmatprep.subr.bf16.mxu0 %v1392
  %1450 = vmatpush1.bf16.msra.mxu0 %v1391
  %1451 = vmatprep.subr.bf16.mxu0 %v1396
  %1452 = vmatpush1.bf16.msra.mxu0 %v1395
  %1453 = vmatprep.subr.bf16.mxu0 %v1400
  %1454 = vmatpush1.bf16.msra.mxu0 %v1399
  %1455 = vmatprep.subr.bf16.mxu0 %v1404
  %1456 = vmatpush1.bf16.msra.mxu0 %v1403
  %1457 = vmatprep.subr.bf16.mxu0 %v1408
  %1458 = vmatpush1.bf16.msra.mxu0 %v1407
  %1459 = vmatprep.subr.bf16.mxu0 0
  %1460 = vmatpush1.bf16.msra.mxu0 0
  %1461 = vmatprep.subr.bf16.mxu0 0
  %1462 = vmatpush1.bf16.msra.mxu0 0
  %1463 = vmatprep.subr.bf16.mxu0 0
  %1464 = vmatpush1.bf16.msra.mxu0 0
  %1465 = vmatprep.subr.bf16.mxu0 0
  %1466 = vmatpush1.bf16.msra.mxu0 0
  %1467 = vmatprep.subr.bf16.mxu0 0
  %1468 = vmatpush1.bf16.msra.mxu0 0
  %1469 = vmatprep.subr.bf16.mxu0 0
  %1470 = vmatpush1.bf16.msra.mxu0 0
  %1471 = vmatprep.subr.bf16.mxu0 0
  %1472 = vmatpush1.bf16.msra.mxu0 0
  %1473 = vmatprep.subr.bf16.mxu0 0
  %1474 = vmatpush1.bf16.msra.mxu0 0
  %1475 = vmatprep.mubr.bf16.mxu0 0
  %1476 = vmatmul.mubr.bf16.gmra.mrb[0].mxu0 %v1250
  %v1477 = vpop.f32.mrb[0].mxu0
  %v1478 = vadd.f32 0.0, %v1477
  %v1479 = vpop.f32.mrb[0].mxu0
  %v1480 = vadd.f32 0.0, %v1479
  %v1481 = vpop.f32.mrb[0].mxu0
  %v1482 = vpop.f32.mrb[0].mxu0
  %1483 = vdwg.mxu0
  %1484 = vmatprep.subr.bf16.mxu0 %v1382
  %1485 = vmatpush1.bf16.msra.mxu0 %v1381
  %1486 = vmatprep.subr.bf16.mxu0 %v1386
  %1487 = vmatpush1.bf16.msra.mxu0 %v1385
  %1488 = vmatprep.subr.bf16.mxu0 %v1390
  %1489 = vmatpush1.bf16.msra.mxu0 %v1389
  %1490 = vmatprep.subr.bf16.mxu0 %v1394
  %1491 = vmatpush1.bf16.msra.mxu0 %v1393
  %1492 = vmatprep.subr.bf16.mxu0 %v1398
  %1493 = vmatpush1.bf16.msra.mxu0 %v1397
  %1494 = vmatprep.subr.bf16.mxu0 %v1402
  %1495 = vmatpush1.bf16.msra.mxu0 %v1401
  %1496 = vmatprep.subr.bf16.mxu0 %v1406
  %1497 = vmatpush1.bf16.msra.mxu0 %v1405
  %1498 = vmatprep.subr.bf16.mxu0 %v1410
  %1499 = vmatpush1.bf16.msra.mxu0 %v1409
  %1500 = vmatprep.subr.bf16.mxu0 0
  %1501 = vmatpush1.bf16.msra.mxu0 0
  %1502 = vmatprep.subr.bf16.mxu0 0
  %1503 = vmatpush1.bf16.msra.mxu0 0
  %1504 = vmatprep.subr.bf16.mxu0 0
  %1505 = vmatpush1.bf16.msra.mxu0 0
  %1506 = vmatprep.subr.bf16.mxu0 0
  %1507 = vmatpush1.bf16.msra.mxu0 0
  %1508 = vmatprep.subr.bf16.mxu0 0
  %1509 = vmatpush1.bf16.msra.mxu0 0
  %1510 = vmatprep.subr.bf16.mxu0 0
  %1511 = vmatpush1.bf16.msra.mxu0 0
  %1512 = vmatprep.subr.bf16.mxu0 0
  %1513 = vmatpush1.bf16.msra.mxu0 0
  %1514 = vmatprep.subr.bf16.mxu0 0
  %1515 = vmatpush1.bf16.msra.mxu0 0
  %1516 = vmatprep.mubr.bf16.mxu0 0
  %1517 = vmatmul.mubr.bf16.gmra.mrb[0].mxu0 %v1250
  %v1518 = vpop.f32.mrb[0].mxu0
  %v1519 = vadd.f32 0.0, %v1518
  %v1520 = vpop.f32.mrb[0].mxu0
  %v1521 = vadd.f32 0.0, %v1520
  %v1522 = vpop.f32.mrb[0].mxu0
  %v1523 = vpop.f32.mrb[0].mxu0
  %1524 = vdwg.mxu0
  %v1525 = vadd.f32 %v1246, %v1478
  %v1526 = vadd.f32 %v1247, %v1480
  %v1527 = vadd.f32 %v1248, %v1519
  %v1528 = vadd.f32 %v1249, %v1521
  %v1529 = vxor.u32 %v1525, 2147483648
  %v1530 = vxor.u32 %v1526, 2147483648
  %v1531 = vxor.u32 %v1527, 2147483648
  %v1532 = vmul.f32 %v1529, 1.442695
  %v1533 = vpow.pop %v1532
  %v1534 = vmul.f32 %v1530, 1.442695
  %v1535 = vpow.pop %v1534
  %v1536 = vmul.f32 %v1531, 1.442695
  %v1537 = vpow.pop %v1536
  %v1538 = vadd.f32 %v1533, 1.0
  %v1539 = vadd.f32 %v1535, 1.0
  %v1540 = vadd.f32 %v1537, 1.0
  %v1541 = vrcp.pop %v1538
  %v1542 = vmul.f32 1.0, %v1541
  %v1543 = vrcp.pop %v1539
  %v1544 = vmul.f32 1.0, %v1543
  %v1545 = vrcp.pop %v1540
  %v1546 = vmul.f32 1.0, %v1545
  %v1547 = vtanh.pop %v1528
  %v1548 = vmul.f32 %v1544, %v1239
  %v1549 = vmul.f32 %v1542, %v1547
  %v1550 = vadd.f32 %v1548, %v1549
  %v1551 = vtanh.pop %v1550
  %v1552 = vmul.f32 %v1546, %v1551
  %s1553 = scalar_lea.vmem [#allocation3], 8
  %1554 = vst [vmem:[%s1553] sm:$0xff] %v1552
  %s1555 = smul.u32 2, 4
  %s1556 = smul.addr %s1555, 8
  %s1557 = scalar_lea.vmem [#allocation2], %s1556
  %v1558 = vld [vmem:[%s1557] sm:$0xff]
  %v1559 = vld [vmem:[%s1557 + $0x8] sm:$0xff]
  %v1560 = vld [vmem:[%s1557 + $0x10] sm:$0xff]
  %v1561 = vld [vmem:[%s1557 + $0x18] sm:$0xff]
  %v1562 = vpack.c.bf16 %v1552, %v1552
  %v1563 = vld [vmem:[%s11] sm:$0xff]
  %v1564 = vld [vmem:[%s11 + $0x8] sm:$0xff]
  %v1565 = vld [vmem:[%s11 + $0x10] sm:$0xff]
  %v1566 = vld [vmem:[%s11 + $0x18] sm:$0xff]
  %v1567 = vld [vmem:[%s11 + $0x20] sm:$0xff]
  %v1568 = vld [vmem:[%s11 + $0x28] sm:$0xff]
  %v1569 = vld [vmem:[%s11 + $0x30] sm:$0xff]
  %v1570 = vld [vmem:[%s11 + $0x38] sm:$0xff]
  %v1571 = vld [vmem:[%s11 + $0x40] sm:$0xff]
  %v1572 = vld [vmem:[%s11 + $0x48] sm:$0xff]
  %v1573 = vld [vmem:[%s11 + $0x50] sm:$0xff]
  %v1574 = vld [vmem:[%s11 + $0x58] sm:$0xff]
  %v1575 = vld [vmem:[%s11 + $0x60] sm:$0xff]
  %v1576 = vld [vmem:[%s11 + $0x68] sm:$0xff]
  %v1577 = vld [vmem:[%s11 + $0x70] sm:$0xff]
  %v1578 = vld [vmem:[%s11 + $0x78] sm:$0xff]
  %v1579 = vld [vmem:[%s11 + $0x80] sm:$0xff]
  %v1580 = vld [vmem:[%s11 + $0x88] sm:$0xff]
  %v1581 = vld [vmem:[%s11 + $0x90] sm:$0xff]
  %v1582 = vld [vmem:[%s11 + $0x98] sm:$0xff]
  %v1583 = vld [vmem:[%s11 + $0xa0] sm:$0xff]
  %v1584 = vld [vmem:[%s11 + $0xa8] sm:$0xff]
  %v1585 = vld [vmem:[%s11 + $0xb0] sm:$0xff]
  %v1586 = vld [vmem:[%s11 + $0xb8] sm:$0xff]
  %v1587 = vld [vmem:[%s11 + $0xc0] sm:$0xff]
  %v1588 = vld [vmem:[%s11 + $0xc8] sm:$0xff]
  %v1589 = vld [vmem:[%s11 + $0xd0] sm:$0xff]
  %v1590 = vld [vmem:[%s11 + $0xd8] sm:$0xff]
  %v1591 = vld [vmem:[%s11 + $0xe0] sm:$0xff]
  %v1592 = vld [vmem:[%s11 + $0xe8] sm:$0xff]
  %v1593 = vld [vmem:[%s11 + $0xf0] sm:$0xff]
  %v1594 = vld [vmem:[%s11 + $0xf8] sm:$0xff]
  %v1627 = vunpack.c.l.b16 %v1563
  %v1628 = vunpack.c.h.b16 %v1563
  %v1629 = vunpack.c.l.b16 %v1564
  %v1630 = vunpack.c.h.b16 %v1564
  %v1631 = vunpack.c.l.b16 %v1565
  %v1632 = vunpack.c.h.b16 %v1565
  %v1633 = vunpack.c.l.b16 %v1566
  %v1634 = vunpack.c.h.b16 %v1566
  %v1635 = vunpack.c.l.b16 %v1567
  %v1636 = vunpack.c.h.b16 %v1567
  %v1637 = vunpack.c.l.b16 %v1568
  %v1638 = vunpack.c.h.b16 %v1568
  %v1639 = vunpack.c.l.b16 %v1569
  %v1640 = vunpack.c.h.b16 %v1569
  %v1641 = vunpack.c.l.b16 %v1570
  %v1642 = vunpack.c.h.b16 %v1570
  %v1643 = vunpack.c.l.b16 %v1571
  %v1644 = vunpack.c.h.b16 %v1571
  %v1645 = vunpack.c.l.b16 %v1572
  %v1646 = vunpack.c.h.b16 %v1572
  %v1647 = vunpack.c.l.b16 %v1573
  %v1648 = vunpack.c.h.b16 %v1573
  %v1649 = vunpack.c.l.b16 %v1574
  %v1650 = vunpack.c.h.b16 %v1574
  %v1651 = vunpack.c.l.b16 %v1575
  %v1652 = vunpack.c.h.b16 %v1575
  %v1653 = vunpack.c.l.b16 %v1576
  %v1654 = vunpack.c.h.b16 %v1576
  %v1655 = vunpack.c.l.b16 %v1577
  %v1656 = vunpack.c.h.b16 %v1577
  %v1657 = vunpack.c.l.b16 %v1578
  %v1658 = vunpack.c.h.b16 %v1578
  %v1659 = vunpack.c.l.b16 %v1579
  %v1660 = vunpack.c.h.b16 %v1579
  %v1661 = vunpack.c.l.b16 %v1580
  %v1662 = vunpack.c.h.b16 %v1580
  %v1663 = vunpack.c.l.b16 %v1581
  %v1664 = vunpack.c.h.b16 %v1581
  %v1665 = vunpack.c.l.b16 %v1582
  %v1666 = vunpack.c.h.b16 %v1582
  %v1667 = vunpack.c.l.b16 %v1583
  %v1668 = vunpack.c.h.b16 %v1583
  %v1669 = vunpack.c.l.b16 %v1584
  %v1670 = vunpack.c.h.b16 %v1584
  %v1671 = vunpack.c.l.b16 %v1585
  %v1672 = vunpack.c.h.b16 %v1585
  %v1673 = vunpack.c.l.b16 %v1586
  %v1674 = vunpack.c.h.b16 %v1586
  %v1675 = vunpack.c.l.b16 %v1587
  %v1676 = vunpack.c.h.b16 %v1587
  %v1677 = vunpack.c.l.b16 %v1588
  %v1678 = vunpack.c.h.b16 %v1588
  %v1679 = vunpack.c.l.b16 %v1589
  %v1680 = vunpack.c.h.b16 %v1589
  %v1681 = vunpack.c.l.b16 %v1590
  %v1682 = vunpack.c.h.b16 %v1590
  %v1683 = vunpack.c.l.b16 %v1591
  %v1684 = vunpack.c.h.b16 %v1591
  %v1685 = vunpack.c.l.b16 %v1592
  %v1686 = vunpack.c.h.b16 %v1592
  %v1687 = vunpack.c.l.b16 %v1593
  %v1688 = vunpack.c.h.b16 %v1593
  %v1689 = vunpack.c.l.b16 %v1594
  %v1690 = vunpack.c.h.b16 %v1594
  %v1691 = vpack.c.b16 %v1631, %v1627
  %v1692 = vpack.c.b16 %v1632, %v1628
  %v1693 = vpack.c.b16 %v1633, %v1629
  %v1694 = vpack.c.b16 %v1634, %v1630
  %v1695 = vpack.c.b16 %v1639, %v1635
  %v1696 = vpack.c.b16 %v1640, %v1636
  %v1697 = vpack.c.b16 %v1641, %v1637
  %v1698 = vpack.c.b16 %v1642, %v1638
  %v1699 = vpack.c.b16 %v1647, %v1643
  %v1700 = vpack.c.b16 %v1648, %v1644
  %v1701 = vpack.c.b16 %v1649, %v1645
  %v1702 = vpack.c.b16 %v1650, %v1646
  %v1703 = vpack.c.b16 %v1655, %v1651
  %v1704 = vpack.c.b16 %v1656, %v1652
  %v1705 = vpack.c.b16 %v1657, %v1653
  %v1706 = vpack.c.b16 %v1658, %v1654
  %v1707 = vpack.c.b16 %v1663, %v1659
  %v1708 = vpack.c.b16 %v1664, %v1660
  %v1709 = vpack.c.b16 %v1665, %v1661
  %v1710 = vpack.c.b16 %v1666, %v1662
  %v1711 = vpack.c.b16 %v1671, %v1667
  %v1712 = vpack.c.b16 %v1672, %v1668
  %v1713 = vpack.c.b16 %v1673, %v1669
  %v1714 = vpack.c.b16 %v1674, %v1670
  %v1715 = vpack.c.b16 %v1679, %v1675
  %v1716 = vpack.c.b16 %v1680, %v1676
  %v1717 = vpack.c.b16 %v1681, %v1677
  %v1718 = vpack.c.b16 %v1682, %v1678
  %v1719 = vpack.c.b16 %v1687, %v1683
  %v1720 = vpack.c.b16 %v1688, %v1684
  %v1721 = vpack.c.b16 %v1689, %v1685
  %v1722 = vpack.c.b16 %v1690, %v1686
  %1755 = vmatprep.subr.bf16.mxu0 %v1692
  %1756 = vmatpush1.bf16.msra.mxu0 %v1691
  %1757 = vmatprep.subr.bf16.mxu0 %v1696
  %1758 = vmatpush1.bf16.msra.mxu0 %v1695
  %1759 = vmatprep.subr.bf16.mxu0 %v1700
  %1760 = vmatpush1.bf16.msra.mxu0 %v1699
  %1761 = vmatprep.subr.bf16.mxu0 %v1704
  %1762 = vmatpush1.bf16.msra.mxu0 %v1703
  %1763 = vmatprep.subr.bf16.mxu0 %v1708
  %1764 = vmatpush1.bf16.msra.mxu0 %v1707
  %1765 = vmatprep.subr.bf16.mxu0 %v1712
  %1766 = vmatpush1.bf16.msra.mxu0 %v1711
  %1767 = vmatprep.subr.bf16.mxu0 %v1716
  %1768 = vmatpush1.bf16.msra.mxu0 %v1715
  %1769 = vmatprep.subr.bf16.mxu0 %v1720
  %1770 = vmatpush1.bf16.msra.mxu0 %v1719
  %1771 = vmatprep.subr.bf16.mxu0 0
  %1772 = vmatpush1.bf16.msra.mxu0 0
  %1773 = vmatprep.subr.bf16.mxu0 0
  %1774 = vmatpush1.bf16.msra.mxu0 0
  %1775 = vmatprep.subr.bf16.mxu0 0
  %1776 = vmatpush1.bf16.msra.mxu0 0
  %1777 = vmatprep.subr.bf16.mxu0 0
  %1778 = vmatpush1.bf16.msra.mxu0 0
  %1779 = vmatprep.subr.bf16.mxu0 0
  %1780 = vmatpush1.bf16.msra.mxu0 0
  %1781 = vmatprep.subr.bf16.mxu0 0
  %1782 = vmatpush1.bf16.msra.mxu0 0
  %1783 = vmatprep.subr.bf16.mxu0 0
  %1784 = vmatpush1.bf16.msra.mxu0 0
  %1785 = vmatprep.subr.bf16.mxu0 0
  %1786 = vmatpush1.bf16.msra.mxu0 0
  %1787 = vmatprep.mubr.bf16.mxu0 0
  %1788 = vmatmul.mubr.bf16.gmra.mrb[0].mxu0 %v1562
  %v1789 = vpop.f32.mrb[0].mxu0
  %v1790 = vadd.f32 0.0, %v1789
  %v1791 = vpop.f32.mrb[0].mxu0
  %v1792 = vadd.f32 0.0, %v1791
  %v1793 = vpop.f32.mrb[0].mxu0
  %v1794 = vpop.f32.mrb[0].mxu0
  %1795 = vdwg.mxu0
  %1796 = vmatprep.subr.bf16.mxu0 %v1694
  %1797 = vmatpush1.bf16.msra.mxu0 %v1693
  %1798 = vmatprep.subr.bf16.mxu0 %v1698
  %1799 = vmatpush1.bf16.msra.mxu0 %v1697
  %1800 = vmatprep.subr.bf16.mxu0 %v1702
  %1801 = vmatpush1.bf16.msra.mxu0 %v1701
  %1802 = vmatprep.subr.bf16.mxu0 %v1706
  %1803 = vmatpush1.bf16.msra.mxu0 %v1705
  %1804 = vmatprep.subr.bf16.mxu0 %v1710
  %1805 = vmatpush1.bf16.msra.mxu0 %v1709
  %1806 = vmatprep.subr.bf16.mxu0 %v1714
  %1807 = vmatpush1.bf16.msra.mxu0 %v1713
  %1808 = vmatprep.subr.bf16.mxu0 %v1718
  %1809 = vmatpush1.bf16.msra.mxu0 %v1717
  %1810 = vmatprep.subr.bf16.mxu0 %v1722
  %1811 = vmatpush1.bf16.msra.mxu0 %v1721
  %1812 = vmatprep.subr.bf16.mxu0 0
  %1813 = vmatpush1.bf16.msra.mxu0 0
  %1814 = vmatprep.subr.bf16.mxu0 0
  %1815 = vmatpush1.bf16.msra.mxu0 0
  %1816 = vmatprep.subr.bf16.mxu0 0
  %1817 = vmatpush1.bf16.msra.mxu0 0
  %1818 = vmatprep.subr.bf16.mxu0 0
  %1819 = vmatpush1.bf16.msra.mxu0 0
  %1820 = vmatprep.subr.bf16.mxu0 0
  %1821 = vmatpush1.bf16.msra.mxu0 0
  %1822 = vmatprep.subr.bf16.mxu0 0
  %1823 = vmatpush1.bf16.msra.mxu0 0
  %1824 = vmatprep.subr.bf16.mxu0 0
  %1825 = vmatpush1.bf16.msra.mxu0 0
  %1826 = vmatprep.subr.bf16.mxu0 0
  %1827 = vmatpush1.bf16.msra.mxu0 0
  %1828 = vmatprep.mubr.bf16.mxu0 0
  %1829 = vmatmul.mubr.bf16.gmra.mrb[0].mxu0 %v1562
  %v1830 = vpop.f32.mrb[0].mxu0
  %v1831 = vadd.f32 0.0, %v1830
  %v1832 = vpop.f32.mrb[0].mxu0
  %v1833 = vadd.f32 0.0, %v1832
  %v1834 = vpop.f32.mrb[0].mxu0
  %v1835 = vpop.f32.mrb[0].mxu0
  %1836 = vdwg.mxu0
  %v1837 = vadd.f32 %v1558, %v1790
  %v1838 = vadd.f32 %v1559, %v1792
  %v1839 = vadd.f32 %v1560, %v1831
  %v1840 = vadd.f32 %v1561, %v1833
  %v1841 = vxor.u32 %v1837, 2147483648
  %v1842 = vxor.u32 %v1838, 2147483648
  %v1843 = vxor.u32 %v1839, 2147483648
  %v1844 = vmul.f32 %v1841, 1.442695
  %v1845 = vpow.pop %v1844
  %v1846 = vmul.f32 %v1842, 1.442695
  %v1847 = vpow.pop %v1846
  %v1848 = vmul.f32 %v1843, 1.442695
  %v1849 = vpow.pop %v1848
  %v1850 = vadd.f32 %v1845, 1.0
  %v1851 = vadd.f32 %v1847, 1.0
  %v1852 = vadd.f32 %v1849, 1.0
  %v1853 = vrcp.pop %v1850
  %v1854 = vmul.f32 1.0, %v1853
  %v1855 = vrcp.pop %v1851
  %v1856 = vmul.f32 1.0, %v1855
  %v1857 = vrcp.pop %v1852
  %v1858 = vmul.f32 1.0, %v1857
  %v1859 = vtanh.pop %v1840
  %v1860 = vmul.f32 %v1856, %v1550
  %v1861 = vmul.f32 %v1854, %v1859
  %v1862 = vadd.f32 %v1860, %v1861
  %v1863 = vtanh.pop %v1862
  %v1864 = vmul.f32 %v1858, %v1863
  %s1865 = scalar_lea.vmem [#allocation3], 16
  %1866 = vst [vmem:[%s1865] sm:$0xff] %v1864
  %s1867 = smul.u32 3, 4
  %s1868 = smul.addr %s1867, 8
  %s1869 = scalar_lea.vmem [#allocation2], %s1868
  %v1870 = vld [vmem:[%s1869] sm:$0xff]
  %v1871 = vld [vmem:[%s1869 + $0x8] sm:$0xff]
  %v1872 = vld [vmem:[%s1869 + $0x10] sm:$0xff]
  %v1873 = vld [vmem:[%s1869 + $0x18] sm:$0xff]
  %v1874 = vpack.c.bf16 %v1864, %v1864
  %v1875 = vld [vmem:[%s11] sm:$0xff]
  %v1876 = vld [vmem:[%s11 + $0x8] sm:$0xff]
  %v1877 = vld [vmem:[%s11 + $0x10] sm:$0xff]
  %v1878 = vld [vmem:[%s11 + $0x18] sm:$0xff]
  %v1879 = vld [vmem:[%s11 + $0x20] sm:$0xff]
  %v1880 = vld [vmem:[%s11 + $0x28] sm:$0xff]
  %v1881 = vld [vmem:[%s11 + $0x30] sm:$0xff]
  %v1882 = vld [vmem:[%s11 + $0x38] sm:$0xff]
  %v1883 = vld [vmem:[%s11 + $0x40] sm:$0xff]
  %v1884 = vld [vmem:[%s11 + $0x48] sm:$0xff]
  %v1885 = vld [vmem:[%s11 + $0x50] sm:$0xff]
  %v1886 = vld [vmem:[%s11 + $0x58] sm:$0xff]
  %v1887 = vld [vmem:[%s11 + $0x60] sm:$0xff]
  %v1888 = vld [vmem:[%s11 + $0x68] sm:$0xff]
  %v1889 = vld [vmem:[%s11 + $0x70] sm:$0xff]
  %v1890 = vld [vmem:[%s11 + $0x78] sm:$0xff]
  %v1891 = vld [vmem:[%s11 + $0x80] sm:$0xff]
  %v1892 = vld [vmem:[%s11 + $0x88] sm:$0xff]
  %v1893 = vld [vmem:[%s11 + $0x90] sm:$0xff]
  %v1894 = vld [vmem:[%s11 + $0x98] sm:$0xff]
  %v1895 = vld [vmem:[%s11 + $0xa0] sm:$0xff]
  %v1896 = vld [vmem:[%s11 + $0xa8] sm:$0xff]
  %v1897 = vld [vmem:[%s11 + $0xb0] sm:$0xff]
  %v1898 = vld [vmem:[%s11 + $0xb8] sm:$0xff]
  %v1899 = vld [vmem:[%s11 + $0xc0] sm:$0xff]
  %v1900 = vld [vmem:[%s11 + $0xc8] sm:$0xff]
  %v1901 = vld [vmem:[%s11 + $0xd0] sm:$0xff]
  %v1902 = vld [vmem:[%s11 + $0xd8] sm:$0xff]
  %v1903 = vld [vmem:[%s11 + $0xe0] sm:$0xff]
  %v1904 = vld [vmem:[%s11 + $0xe8] sm:$0xff]
  %v1905 = vld [vmem:[%s11 + $0xf0] sm:$0xff]
  %v1906 = vld [vmem:[%s11 + $0xf8] sm:$0xff]
  %v1939 = vunpack.c.l.b16 %v1875
  %v1940 = vunpack.c.h.b16 %v1875
  %v1941 = vunpack.c.l.b16 %v1876
  %v1942 = vunpack.c.h.b16 %v1876
  %v1943 = vunpack.c.l.b16 %v1877
  %v1944 = vunpack.c.h.b16 %v1877
  %v1945 = vunpack.c.l.b16 %v1878
  %v1946 = vunpack.c.h.b16 %v1878
  %v1947 = vunpack.c.l.b16 %v1879
  %v1948 = vunpack.c.h.b16 %v1879
  %v1949 = vunpack.c.l.b16 %v1880
  %v1950 = vunpack.c.h.b16 %v1880
  %v1951 = vunpack.c.l.b16 %v1881
  %v1952 = vunpack.c.h.b16 %v1881
  %v1953 = vunpack.c.l.b16 %v1882
  %v1954 = vunpack.c.h.b16 %v1882
  %v1955 = vunpack.c.l.b16 %v1883
  %v1956 = vunpack.c.h.b16 %v1883
  %v1957 = vunpack.c.l.b16 %v1884
  %v1958 = vunpack.c.h.b16 %v1884
  %v1959 = vunpack.c.l.b16 %v1885
  %v1960 = vunpack.c.h.b16 %v1885
  %v1961 = vunpack.c.l.b16 %v1886
  %v1962 = vunpack.c.h.b16 %v1886
  %v1963 = vunpack.c.l.b16 %v1887
  %v1964 = vunpack.c.h.b16 %v1887
  %v1965 = vunpack.c.l.b16 %v1888
  %v1966 = vunpack.c.h.b16 %v1888
  %v1967 = vunpack.c.l.b16 %v1889
  %v1968 = vunpack.c.h.b16 %v1889
  %v1969 = vunpack.c.l.b16 %v1890
  %v1970 = vunpack.c.h.b16 %v1890
  %v1971 = vunpack.c.l.b16 %v1891
  %v1972 = vunpack.c.h.b16 %v1891
  %v1973 = vunpack.c.l.b16 %v1892
  %v1974 = vunpack.c.h.b16 %v1892
  %v1975 = vunpack.c.l.b16 %v1893
  %v1976 = vunpack.c.h.b16 %v1893
  %v1977 = vunpack.c.l.b16 %v1894
  %v1978 = vunpack.c.h.b16 %v1894
  %v1979 = vunpack.c.l.b16 %v1895
  %v1980 = vunpack.c.h.b16 %v1895
  %v1981 = vunpack.c.l.b16 %v1896
  %v1982 = vunpack.c.h.b16 %v1896
  %v1983 = vunpack.c.l.b16 %v1897
  %v1984 = vunpack.c.h.b16 %v1897
  %v1985 = vunpack.c.l.b16 %v1898
  %v1986 = vunpack.c.h.b16 %v1898
  %v1987 = vunpack.c.l.b16 %v1899
  %v1988 = vunpack.c.h.b16 %v1899
  %v1989 = vunpack.c.l.b16 %v1900
  %v1990 = vunpack.c.h.b16 %v1900
  %v1991 = vunpack.c.l.b16 %v1901
  %v1992 = vunpack.c.h.b16 %v1901
  %v1993 = vunpack.c.l.b16 %v1902
  %v1994 = vunpack.c.h.b16 %v1902
  %v1995 = vunpack.c.l.b16 %v1903
  %v1996 = vunpack.c.h.b16 %v1903
  %v1997 = vunpack.c.l.b16 %v1904
  %v1998 = vunpack.c.h.b16 %v1904
  %v1999 = vunpack.c.l.b16 %v1905
  %v2000 = vunpack.c.h.b16 %v1905
  %v2001 = vunpack.c.l.b16 %v1906
  %v2002 = vunpack.c.h.b16 %v1906
  %v2003 = vpack.c.b16 %v1943, %v1939
  %v2004 = vpack.c.b16 %v1944, %v1940
  %v2005 = vpack.c.b16 %v1945, %v1941
  %v2006 = vpack.c.b16 %v1946, %v1942
  %v2007 = vpack.c.b16 %v1951, %v1947
  %v2008 = vpack.c.b16 %v1952, %v1948
  %v2009 = vpack.c.b16 %v1953, %v1949
  %v2010 = vpack.c.b16 %v1954, %v1950
  %v2011 = vpack.c.b16 %v1959, %v1955
  %v2012 = vpack.c.b16 %v1960, %v1956
  %v2013 = vpack.c.b16 %v1961, %v1957
  %v2014 = vpack.c.b16 %v1962, %v1958
  %v2015 = vpack.c.b16 %v1967, %v1963
  %v2016 = vpack.c.b16 %v1968, %v1964
  %v2017 = vpack.c.b16 %v1969, %v1965
  %v2018 = vpack.c.b16 %v1970, %v1966
  %v2019 = vpack.c.b16 %v1975, %v1971
  %v2020 = vpack.c.b16 %v1976, %v1972
  %v2021 = vpack.c.b16 %v1977, %v1973
  %v2022 = vpack.c.b16 %v1978, %v1974
  %v2023 = vpack.c.b16 %v1983, %v1979
  %v2024 = vpack.c.b16 %v1984, %v1980
  %v2025 = vpack.c.b16 %v1985, %v1981
  %v2026 = vpack.c.b16 %v1986, %v1982
  %v2027 = vpack.c.b16 %v1991, %v1987
  %v2028 = vpack.c.b16 %v1992, %v1988
  %v2029 = vpack.c.b16 %v1993, %v1989
  %v2030 = vpack.c.b16 %v1994, %v1990
  %v2031 = vpack.c.b16 %v1999, %v1995
  %v2032 = vpack.c.b16 %v2000, %v1996
  %v2033 = vpack.c.b16 %v2001, %v1997
  %v2034 = vpack.c.b16 %v2002, %v1998
  %2067 = vmatprep.subr.bf16.mxu0 %v2004
  %2068 = vmatpush1.bf16.msra.mxu0 %v2003
  %2069 = vmatprep.subr.bf16.mxu0 %v2008
  %2070 = vmatpush1.bf16.msra.mxu0 %v2007
  %2071 = vmatprep.subr.bf16.mxu0 %v2012
  %2072 = vmatpush1.bf16.msra.mxu0 %v2011
  %2073 = vmatprep.subr.bf16.mxu0 %v2016
  %2074 = vmatpush1.bf16.msra.mxu0 %v2015
  %2075 = vmatprep.subr.bf16.mxu0 %v2020
  %2076 = vmatpush1.bf16.msra.mxu0 %v2019
  %2077 = vmatprep.subr.bf16.mxu0 %v2024
  %2078 = vmatpush1.bf16.msra.mxu0 %v2023
  %2079 = vmatprep.subr.bf16.mxu0 %v2028
  %2080 = vmatpush1.bf16.msra.mxu0 %v2027
  %2081 = vmatprep.subr.bf16.mxu0 %v2032
  %2082 = vmatpush1.bf16.msra.mxu0 %v2031
  %2083 = vmatprep.subr.bf16.mxu0 0
  %2084 = vmatpush1.bf16.msra.mxu0 0
  %2085 = vmatprep.subr.bf16.mxu0 0
  %2086 = vmatpush1.bf16.msra.mxu0 0
  %2087 = vmatprep.subr.bf16.mxu0 0
  %2088 = vmatpush1.bf16.msra.mxu0 0
  %2089 = vmatprep.subr.bf16.mxu0 0
  %2090 = vmatpush1.bf16.msra.mxu0 0
  %2091 = vmatprep.subr.bf16.mxu0 0
  %2092 = vmatpush1.bf16.msra.mxu0 0
  %2093 = vmatprep.subr.bf16.mxu0 0
  %2094 = vmatpush1.bf16.msra.mxu0 0
  %2095 = vmatprep.subr.bf16.mxu0 0
  %2096 = vmatpush1.bf16.msra.mxu0 0
  %2097 = vmatprep.subr.bf16.mxu0 0
  %2098 = vmatpush1.bf16.msra.mxu0 0
  %2099 = vmatprep.mubr.bf16.mxu0 0
  %2100 = vmatmul.mubr.bf16.gmra.mrb[0].mxu0 %v1874
  %v2101 = vpop.f32.mrb[0].mxu0
  %v2102 = vadd.f32 0.0, %v2101
  %v2103 = vpop.f32.mrb[0].mxu0
  %v2104 = vadd.f32 0.0, %v2103
  %v2105 = vpop.f32.mrb[0].mxu0
  %v2106 = vpop.f32.mrb[0].mxu0
  %2107 = vdwg.mxu0
  %2108 = vmatprep.subr.bf16.mxu0 %v2006
  %2109 = vmatpush1.bf16.msra.mxu0 %v2005
  %2110 = vmatprep.subr.bf16.mxu0 %v2010
  %2111 = vmatpush1.bf16.msra.mxu0 %v2009
  %2112 = vmatprep.subr.bf16.mxu0 %v2014
  %2113 = vmatpush1.bf16.msra.mxu0 %v2013
  %2114 = vmatprep.subr.bf16.mxu0 %v2018
  %2115 = vmatpush1.bf16.msra.mxu0 %v2017
  %2116 = vmatprep.subr.bf16.mxu0 %v2022
  %2117 = vmatpush1.bf16.msra.mxu0 %v2021
  %2118 = vmatprep.subr.bf16.mxu0 %v2026
  %2119 = vmatpush1.bf16.msra.mxu0 %v2025
  %2120 = vmatprep.subr.bf16.mxu0 %v2030
  %2121 = vmatpush1.bf16.msra.mxu0 %v2029
  %2122 = vmatprep.subr.bf16.mxu0 %v2034
  %2123 = vmatpush1.bf16.msra.mxu0 %v2033
  %2124 = vmatprep.subr.bf16.mxu0 0
  %2125 = vmatpush1.bf16.msra.mxu0 0
  %2126 = vmatprep.subr.bf16.mxu0 0
  %2127 = vmatpush1.bf16.msra.mxu0 0
  %2128 = vmatprep.subr.bf16.mxu0 0
  %2129 = vmatpush1.bf16.msra.mxu0 0
  %2130 = vmatprep.subr.bf16.mxu0 0
  %2131 = vmatpush1.bf16.msra.mxu0 0
  %2132 = vmatprep.subr.bf16.mxu0 0
  %2133 = vmatpush1.bf16.msra.mxu0 0
  %2134 = vmatprep.subr.bf16.mxu0 0
  %2135 = vmatpush1.bf16.msra.mxu0 0
  %2136 = vmatprep.subr.bf16.mxu0 0
  %2137 = vmatpush1.bf16.msra.mxu0 0
  %2138 = vmatprep.subr.bf16.mxu0 0
  %2139 = vmatpush1.bf16.msra.mxu0 0
  %2140 = vmatprep.mubr.bf16.mxu0 0
  %2141 = vmatmul.mubr.bf16.gmra.mrb[0].mxu0 %v1874
  %v2142 = vpop.f32.mrb[0].mxu0
  %v2143 = vadd.f32 0.0, %v2142
  %v2144 = vpop.f32.mrb[0].mxu0
  %v2145 = vadd.f32 0.0, %v2144
  %v2146 = vpop.f32.mrb[0].mxu0
  %v2147 = vpop.f32.mrb[0].mxu0
  %2148 = vdwg.mxu0
  %v2149 = vadd.f32 %v1870, %v2102
  %v2150 = vadd.f32 %v1871, %v2104
  %v2151 = vadd.f32 %v1872, %v2143
  %v2152 = vadd.f32 %v1873, %v2145
  %v2153 = vxor.u32 %v2149, 2147483648
  %v2154 = vxor.u32 %v2150, 2147483648
  %v2155 = vxor.u32 %v2151, 2147483648
  %v2156 = vmul.f32 %v2153, 1.442695
  %v2157 = vpow.pop %v2156
  %v2158 = vmul.f32 %v2154, 1.442695
  %v2159 = vpow.pop %v2158
  %v2160 = vmul.f32 %v2155, 1.442695
  %v2161 = vpow.pop %v2160
  %v2162 = vadd.f32 %v2157, 1.0
  %v2163 = vadd.f32 %v2159, 1.0
  %v2164 = vadd.f32 %v2161, 1.0
  %v2165 = vrcp.pop %v2162
  %v2166 = vmul.f32 1.0, %v2165
  %v2167 = vrcp.pop %v2163
  %v2168 = vmul.f32 1.0, %v2167
  %v2169 = vrcp.pop %v2164
  %v2170 = vmul.f32 1.0, %v2169
  %v2171 = vtanh.pop %v2152
  %v2172 = vmul.f32 %v2168, %v1862
  %v2173 = vmul.f32 %v2166, %v2171
  %v2174 = vadd.f32 %v2172, %v2173
  %v2175 = vtanh.pop %v2174
  %v2176 = vmul.f32 %v2170, %v2175
  %s2177 = scalar_lea.vmem [#allocation3], 24
  %2178 = vst [vmem:[%s2177] sm:$0xff] %v2176
  %s2179 = smul.u32 4, 4
  %s2180 = smul.addr %s2179, 8
  %s2181 = scalar_lea.vmem [#allocation2], %s2180
  %v2182 = vld [vmem:[%s2181] sm:$0xff]
  %v2183 = vld [vmem:[%s2181 + $0x8] sm:$0xff]
  %v2184 = vld [vmem:[%s2181 + $0x10] sm:$0xff]
  %v2185 = vld [vmem:[%s2181 + $0x18] sm:$0xff]
  %v2186 = vpack.c.bf16 %v2176, %v2176
  %v2187 = vld [vmem:[%s11] sm:$0xff]
  %v2188 = vld [vmem:[%s11 + $0x8] sm:$0xff]
  %v2189 = vld [vmem:[%s11 + $0x10] sm:$0xff]
  %v2190 = vld [vmem:[%s11 + $0x18] sm:$0xff]
  %v2191 = vld [vmem:[%s11 + $0x20] sm:$0xff]
  %v2192 = vld [vmem:[%s11 + $0x28] sm:$0xff]
  %v2193 = vld [vmem:[%s11 + $0x30] sm:$0xff]
  %v2194 = vld [vmem:[%s11 + $0x38] sm:$0xff]
  %v2195 = vld [vmem:[%s11 + $0x40] sm:$0xff]
  %v2196 = vld [vmem:[%s11 + $0x48] sm:$0xff]
  %v2197 = vld [vmem:[%s11 + $0x50] sm:$0xff]
  %v2198 = vld [vmem:[%s11 + $0x58] sm:$0xff]
  %v2199 = vld [vmem:[%s11 + $0x60] sm:$0xff]
  %v2200 = vld [vmem:[%s11 + $0x68] sm:$0xff]
  %v2201 = vld [vmem:[%s11 + $0x70] sm:$0xff]
  %v2202 = vld [vmem:[%s11 + $0x78] sm:$0xff]
  %v2203 = vld [vmem:[%s11 + $0x80] sm:$0xff]
  %v2204 = vld [vmem:[%s11 + $0x88] sm:$0xff]
  %v2205 = vld [vmem:[%s11 + $0x90] sm:$0xff]
  %v2206 = vld [vmem:[%s11 + $0x98] sm:$0xff]
  %v2207 = vld [vmem:[%s11 + $0xa0] sm:$0xff]
  %v2208 = vld [vmem:[%s11 + $0xa8] sm:$0xff]
  %v2209 = vld [vmem:[%s11 + $0xb0] sm:$0xff]
  %v2210 = vld [vmem:[%s11 + $0xb8] sm:$0xff]
  %v2211 = vld [vmem:[%s11 + $0xc0] sm:$0xff]
  %v2212 = vld [vmem:[%s11 + $0xc8] sm:$0xff]
  %v2213 = vld [vmem:[%s11 + $0xd0] sm:$0xff]
  %v2214 = vld [vmem:[%s11 + $0xd8] sm:$0xff]
  %v2215 = vld [vmem:[%s11 + $0xe0] sm:$0xff]
  %v2216 = vld [vmem:[%s11 + $0xe8] sm:$0xff]
  %v2217 = vld [vmem:[%s11 + $0xf0] sm:$0xff]
  %v2218 = vld [vmem:[%s11 + $0xf8] sm:$0xff]
  %v2251 = vunpack.c.l.b16 %v2187
  %v2252 = vunpack.c.h.b16 %v2187
  %v2253 = vunpack.c.l.b16 %v2188
  %v2254 = vunpack.c.h.b16 %v2188
  %v2255 = vunpack.c.l.b16 %v2189
  %v2256 = vunpack.c.h.b16 %v2189
  %v2257 = vunpack.c.l.b16 %v2190
  %v2258 = vunpack.c.h.b16 %v2190
  %v2259 = vunpack.c.l.b16 %v2191
  %v2260 = vunpack.c.h.b16 %v2191
  %v2261 = vunpack.c.l.b16 %v2192
  %v2262 = vunpack.c.h.b16 %v2192
  %v2263 = vunpack.c.l.b16 %v2193
  %v2264 = vunpack.c.h.b16 %v2193
  %v2265 = vunpack.c.l.b16 %v2194
  %v2266 = vunpack.c.h.b16 %v2194
  %v2267 = vunpack.c.l.b16 %v2195
  %v2268 = vunpack.c.h.b16 %v2195
  %v2269 = vunpack.c.l.b16 %v2196
  %v2270 = vunpack.c.h.b16 %v2196
  %v2271 = vunpack.c.l.b16 %v2197
  %v2272 = vunpack.c.h.b16 %v2197
  %v2273 = vunpack.c.l.b16 %v2198
  %v2274 = vunpack.c.h.b16 %v2198
  %v2275 = vunpack.c.l.b16 %v2199
  %v2276 = vunpack.c.h.b16 %v2199
  %v2277 = vunpack.c.l.b16 %v2200
  %v2278 = vunpack.c.h.b16 %v2200
  %v2279 = vunpack.c.l.b16 %v2201
  %v2280 = vunpack.c.h.b16 %v2201
  %v2281 = vunpack.c.l.b16 %v2202
  %v2282 = vunpack.c.h.b16 %v2202
  %v2283 = vunpack.c.l.b16 %v2203
  %v2284 = vunpack.c.h.b16 %v2203
  %v2285 = vunpack.c.l.b16 %v2204
  %v2286 = vunpack.c.h.b16 %v2204
  %v2287 = vunpack.c.l.b16 %v2205
  %v2288 = vunpack.c.h.b16 %v2205
  %v2289 = vunpack.c.l.b16 %v2206
  %v2290 = vunpack.c.h.b16 %v2206
  %v2291 = vunpack.c.l.b16 %v2207
  %v2292 = vunpack.c.h.b16 %v2207
  %v2293 = vunpack.c.l.b16 %v2208
  %v2294 = vunpack.c.h.b16 %v2208
  %v2295 = vunpack.c.l.b16 %v2209
  %v2296 = vunpack.c.h.b16 %v2209
  %v2297 = vunpack.c.l.b16 %v2210
  %v2298 = vunpack.c.h.b16 %v2210
  %v2299 = vunpack.c.l.b16 %v2211
  %v2300 = vunpack.c.h.b16 %v2211
  %v2301 = vunpack.c.l.b16 %v2212
  %v2302 = vunpack.c.h.b16 %v2212
  %v2303 = vunpack.c.l.b16 %v2213
  %v2304 = vunpack.c.h.b16 %v2213
  %v2305 = vunpack.c.l.b16 %v2214
  %v2306 = vunpack.c.h.b16 %v2214
  %v2307 = vunpack.c.l.b16 %v2215
  %v2308 = vunpack.c.h.b16 %v2215
  %v2309 = vunpack.c.l.b16 %v2216
  %v2310 = vunpack.c.h.b16 %v2216
  %v2311 = vunpack.c.l.b16 %v2217
  %v2312 = vunpack.c.h.b16 %v2217
  %v2313 = vunpack.c.l.b16 %v2218
  %v2314 = vunpack.c.h.b16 %v2218
  %v2315 = vpack.c.b16 %v2255, %v2251
  %v2316 = vpack.c.b16 %v2256, %v2252
  %v2317 = vpack.c.b16 %v2257, %v2253
  %v2318 = vpack.c.b16 %v2258, %v2254
  %v2319 = vpack.c.b16 %v2263, %v2259
  %v2320 = vpack.c.b16 %v2264, %v2260
  %v2321 = vpack.c.b16 %v2265, %v2261
  %v2322 = vpack.c.b16 %v2266, %v2262
  %v2323 = vpack.c.b16 %v2271, %v2267
  %v2324 = vpack.c.b16 %v2272, %v2268
  %v2325 = vpack.c.b16 %v2273, %v2269
  %v2326 = vpack.c.b16 %v2274, %v2270
  %v2327 = vpack.c.b16 %v2279, %v2275
  %v2328 = vpack.c.b16 %v2280, %v2276
  %v2329 = vpack.c.b16 %v2281, %v2277
  %v2330 = vpack.c.b16 %v2282, %v2278
  %v2331 = vpack.c.b16 %v2287, %v2283
  %v2332 = vpack.c.b16 %v2288, %v2284
  %v2333 = vpack.c.b16 %v2289, %v2285
  %v2334 = vpack.c.b16 %v2290, %v2286
  %v2335 = vpack.c.b16 %v2295, %v2291
  %v2336 = vpack.c.b16 %v2296, %v2292
  %v2337 = vpack.c.b16 %v2297, %v2293
  %v2338 = vpack.c.b16 %v2298, %v2294
  %v2339 = vpack.c.b16 %v2303, %v2299
  %v2340 = vpack.c.b16 %v2304, %v2300
  %v2341 = vpack.c.b16 %v2305, %v2301
  %v2342 = vpack.c.b16 %v2306, %v2302
  %v2343 = vpack.c.b16 %v2311, %v2307
  %v2344 = vpack.c.b16 %v2312, %v2308
  %v2345 = vpack.c.b16 %v2313, %v2309
  %v2346 = vpack.c.b16 %v2314, %v2310
  %2379 = vmatprep.subr.bf16.mxu0 %v2316
  %2380 = vmatpush1.bf16.msra.mxu0 %v2315
  %2381 = vmatprep.subr.bf16.mxu0 %v2320
  %2382 = vmatpush1.bf16.msra.mxu0 %v2319
  %2383 = vmatprep.subr.bf16.mxu0 %v2324
  %2384 = vmatpush1.bf16.msra.mxu0 %v2323
  %2385 = vmatprep.subr.bf16.mxu0 %v2328
  %2386 = vmatpush1.bf16.msra.mxu0 %v2327
  %2387 = vmatprep.subr.bf16.mxu0 %v2332
  %2388 = vmatpush1.bf16.msra.mxu0 %v2331
  %2389 = vmatprep.subr.bf16.mxu0 %v2336
  %2390 = vmatpush1.bf16.msra.mxu0 %v2335
  %2391 = vmatprep.subr.bf16.mxu0 %v2340
  %2392 = vmatpush1.bf16.msra.mxu0 %v2339
  %2393 = vmatprep.subr.bf16.mxu0 %v2344
  %2394 = vmatpush1.bf16.msra.mxu0 %v2343
  %2395 = vmatprep.subr.bf16.mxu0 0
  %2396 = vmatpush1.bf16.msra.mxu0 0
  %2397 = vmatprep.subr.bf16.mxu0 0
  %2398 = vmatpush1.bf16.msra.mxu0 0
  %2399 = vmatprep.subr.bf16.mxu0 0
  %2400 = vmatpush1.bf16.msra.mxu0 0
  %2401 = vmatprep.subr.bf16.mxu0 0
  %2402 = vmatpush1.bf16.msra.mxu0 0
  %2403 = vmatprep.subr.bf16.mxu0 0
  %2404 = vmatpush1.bf16.msra.mxu0 0
  %2405 = vmatprep.subr.bf16.mxu0 0
  %2406 = vmatpush1.bf16.msra.mxu0 0
  %2407 = vmatprep.subr.bf16.mxu0 0
  %2408 = vmatpush1.bf16.msra.mxu0 0
  %2409 = vmatprep.subr.bf16.mxu0 0
  %2410 = vmatpush1.bf16.msra.mxu0 0
  %2411 = vmatprep.mubr.bf16.mxu0 0
  %2412 = vmatmul.mubr.bf16.gmra.mrb[0].mxu0 %v2186
  %v2413 = vpop.f32.mrb[0].mxu0
  %v2414 = vadd.f32 0.0, %v2413
  %v2415 = vpop.f32.mrb[0].mxu0
  %v2416 = vadd.f32 0.0, %v2415
  %v2417 = vpop.f32.mrb[0].mxu0
  %v2418 = vpop.f32.mrb[0].mxu0
  %2419 = vdwg.mxu0
  %2420 = vmatprep.subr.bf16.mxu0 %v2318
  %2421 = vmatpush1.bf16.msra.mxu0 %v2317
  %2422 = vmatprep.subr.bf16.mxu0 %v2322
  %2423 = vmatpush1.bf16.msra.mxu0 %v2321
  %2424 = vmatprep.subr.bf16.mxu0 %v2326
  %2425 = vmatpush1.bf16.msra.mxu0 %v2325
  %2426 = vmatprep.subr.bf16.mxu0 %v2330
  %2427 = vmatpush1.bf16.msra.mxu0 %v2329
  %2428 = vmatprep.subr.bf16.mxu0 %v2334
  %2429 = vmatpush1.bf16.msra.mxu0 %v2333
  %2430 = vmatprep.subr.bf16.mxu0 %v2338
  %2431 = vmatpush1.bf16.msra.mxu0 %v2337
  %2432 = vmatprep.subr.bf16.mxu0 %v2342
  %2433 = vmatpush1.bf16.msra.mxu0 %v2341
  %2434 = vmatprep.subr.bf16.mxu0 %v2346
  %2435 = vmatpush1.bf16.msra.mxu0 %v2345
  %2436 = vmatprep.subr.bf16.mxu0 0
  %2437 = vmatpush1.bf16.msra.mxu0 0
  %2438 = vmatprep.subr.bf16.mxu0 0
  %2439 = vmatpush1.bf16.msra.mxu0 0
  %2440 = vmatprep.subr.bf16.mxu0 0
  %2441 = vmatpush1.bf16.msra.mxu0 0
  %2442 = vmatprep.subr.bf16.mxu0 0
  %2443 = vmatpush1.bf16.msra.mxu0 0
  %2444 = vmatprep.subr.bf16.mxu0 0
  %2445 = vmatpush1.bf16.msra.mxu0 0
  %2446 = vmatprep.subr.bf16.mxu0 0
  %2447 = vmatpush1.bf16.msra.mxu0 0
  %2448 = vmatprep.subr.bf16.mxu0 0
  %2449 = vmatpush1.bf16.msra.mxu0 0
  %2450 = vmatprep.subr.bf16.mxu0 0
  %2451 = vmatpush1.bf16.msra.mxu0 0
  %2452 = vmatprep.mubr.bf16.mxu0 0
  %2453 = vmatmul.mubr.bf16.gmra.mrb[0].mxu0 %v2186
  %v2454 = vpop.f32.mrb[0].mxu0
  %v2455 = vadd.f32 0.0, %v2454
  %v2456 = vpop.f32.mrb[0].mxu0
  %v2457 = vadd.f32 0.0, %v2456
  %v2458 = vpop.f32.mrb[0].mxu0
  %v2459 = vpop.f32.mrb[0].mxu0
  %2460 = vdwg.mxu0
  %v2461 = vadd.f32 %v2182, %v2414
  %v2462 = vadd.f32 %v2183, %v2416
  %v2463 = vadd.f32 %v2184, %v2455
  %v2464 = vadd.f32 %v2185, %v2457
  %v2465 = vxor.u32 %v2461, 2147483648
  %v2466 = vxor.u32 %v2462, 2147483648
  %v2467 = vxor.u32 %v2463, 2147483648
  %v2468 = vmul.f32 %v2465, 1.442695
  %v2469 = vpow.pop %v2468
  %v2470 = vmul.f32 %v2466, 1.442695
  %v2471 = vpow.pop %v2470
  %v2472 = vmul.f32 %v2467, 1.442695
  %v2473 = vpow.pop %v2472
  %v2474 = vadd.f32 %v2469, 1.0
  %v2475 = vadd.f32 %v2471, 1.0
  %v2476 = vadd.f32 %v2473, 1.0
  %v2477 = vrcp.pop %v2474
  %v2478 = vmul.f32 1.0, %v2477
  %v2479 = vrcp.pop %v2475
  %v2480 = vmul.f32 1.0, %v2479
  %v2481 = vrcp.pop %v2476
  %v2482 = vmul.f32 1.0, %v2481
  %v2483 = vtanh.pop %v2464
  %v2484 = vmul.f32 %v2480, %v2174
  %v2485 = vmul.f32 %v2478, %v2483
  %v2486 = vadd.f32 %v2484, %v2485
  %v2487 = vtanh.pop %v2486
  %v2488 = vmul.f32 %v2482, %v2487
  %s2489 = scalar_lea.vmem [#allocation3], 32
  %2490 = vst [vmem:[%s2489] sm:$0xff] %v2488
  %s2491 = smul.u32 5, 4
  %s2492 = smul.addr %s2491, 8
  %s2493 = scalar_lea.vmem [#allocation2], %s2492
  %v2494 = vld [vmem:[%s2493] sm:$0xff]
  %v2495 = vld [vmem:[%s2493 + $0x8] sm:$0xff]
  %v2496 = vld [vmem:[%s2493 + $0x10] sm:$0xff]
  %v2497 = vld [vmem:[%s2493 + $0x18] sm:$0xff]
  %v2498 = vpack.c.bf16 %v2488, %v2488
  %v2499 = vld [vmem:[%s11] sm:$0xff]
  %v2500 = vld [vmem:[%s11 + $0x8] sm:$0xff]
  %v2501 = vld [vmem:[%s11 + $0x10] sm:$0xff]
  %v2502 = vld [vmem:[%s11 + $0x18] sm:$0xff]
  %v2503 = vld [vmem:[%s11 + $0x20] sm:$0xff]
  %v2504 = vld [vmem:[%s11 + $0x28] sm:$0xff]
  %v2505 = vld [vmem:[%s11 + $0x30] sm:$0xff]
  %v2506 = vld [vmem:[%s11 + $0x38] sm:$0xff]
  %v2507 = vld [vmem:[%s11 + $0x40] sm:$0xff]
  %v2508 = vld [vmem:[%s11 + $0x48] sm:$0xff]
  %v2509 = vld [vmem:[%s11 + $0x50] sm:$0xff]
  %v2510 = vld [vmem:[%s11 + $0x58] sm:$0xff]
  %v2511 = vld [vmem:[%s11 + $0x60] sm:$0xff]
  %v2512 = vld [vmem:[%s11 + $0x68] sm:$0xff]
  %v2513 = vld [vmem:[%s11 + $0x70] sm:$0xff]
  %v2514 = vld [vmem:[%s11 + $0x78] sm:$0xff]
  %v2515 = vld [vmem:[%s11 + $0x80] sm:$0xff]
  %v2516 = vld [vmem:[%s11 + $0x88] sm:$0xff]
  %v2517 = vld [vmem:[%s11 + $0x90] sm:$0xff]
  %v2518 = vld [vmem:[%s11 + $0x98] sm:$0xff]
  %v2519 = vld [vmem:[%s11 + $0xa0] sm:$0xff]
  %v2520 = vld [vmem:[%s11 + $0xa8] sm:$0xff]
  %v2521 = vld [vmem:[%s11 + $0xb0] sm:$0xff]
  %v2522 = vld [vmem:[%s11 + $0xb8] sm:$0xff]
  %v2523 = vld [vmem:[%s11 + $0xc0] sm:$0xff]
  %v2524 = vld [vmem:[%s11 + $0xc8] sm:$0xff]
  %v2525 = vld [vmem:[%s11 + $0xd0] sm:$0xff]
  %v2526 = vld [vmem:[%s11 + $0xd8] sm:$0xff]
  %v2527 = vld [vmem:[%s11 + $0xe0] sm:$0xff]
  %v2528 = vld [vmem:[%s11 + $0xe8] sm:$0xff]
  %v2529 = vld [vmem:[%s11 + $0xf0] sm:$0xff]
  %v2530 = vld [vmem:[%s11 + $0xf8] sm:$0xff]
  %v2563 = vunpack.c.l.b16 %v2499
  %v2564 = vunpack.c.h.b16 %v2499
  %v2565 = vunpack.c.l.b16 %v2500
  %v2566 = vunpack.c.h.b16 %v2500
  %v2567 = vunpack.c.l.b16 %v2501
  %v2568 = vunpack.c.h.b16 %v2501
  %v2569 = vunpack.c.l.b16 %v2502
  %v2570 = vunpack.c.h.b16 %v2502
  %v2571 = vunpack.c.l.b16 %v2503
  %v2572 = vunpack.c.h.b16 %v2503
  %v2573 = vunpack.c.l.b16 %v2504
  %v2574 = vunpack.c.h.b16 %v2504
  %v2575 = vunpack.c.l.b16 %v2505
  %v2576 = vunpack.c.h.b16 %v2505
  %v2577 = vunpack.c.l.b16 %v2506
  %v2578 = vunpack.c.h.b16 %v2506
  %v2579 = vunpack.c.l.b16 %v2507
  %v2580 = vunpack.c.h.b16 %v2507
  %v2581 = vunpack.c.l.b16 %v2508
  %v2582 = vunpack.c.h.b16 %v2508
  %v2583 = vunpack.c.l.b16 %v2509
  %v2584 = vunpack.c.h.b16 %v2509
  %v2585 = vunpack.c.l.b16 %v2510
  %v2586 = vunpack.c.h.b16 %v2510
  %v2587 = vunpack.c.l.b16 %v2511
  %v2588 = vunpack.c.h.b16 %v2511
  %v2589 = vunpack.c.l.b16 %v2512
  %v2590 = vunpack.c.h.b16 %v2512
  %v2591 = vunpack.c.l.b16 %v2513
  %v2592 = vunpack.c.h.b16 %v2513
  %v2593 = vunpack.c.l.b16 %v2514
  %v2594 = vunpack.c.h.b16 %v2514
  %v2595 = vunpack.c.l.b16 %v2515
  %v2596 = vunpack.c.h.b16 %v2515
  %v2597 = vunpack.c.l.b16 %v2516
  %v2598 = vunpack.c.h.b16 %v2516
  %v2599 = vunpack.c.l.b16 %v2517
  %v2600 = vunpack.c.h.b16 %v2517
  %v2601 = vunpack.c.l.b16 %v2518
  %v2602 = vunpack.c.h.b16 %v2518
  %v2603 = vunpack.c.l.b16 %v2519
  %v2604 = vunpack.c.h.b16 %v2519
  %v2605 = vunpack.c.l.b16 %v2520
  %v2606 = vunpack.c.h.b16 %v2520
  %v2607 = vunpack.c.l.b16 %v2521
  %v2608 = vunpack.c.h.b16 %v2521
  %v2609 = vunpack.c.l.b16 %v2522
  %v2610 = vunpack.c.h.b16 %v2522
  %v2611 = vunpack.c.l.b16 %v2523
  %v2612 = vunpack.c.h.b16 %v2523
  %v2613 = vunpack.c.l.b16 %v2524
  %v2614 = vunpack.c.h.b16 %v2524
  %v2615 = vunpack.c.l.b16 %v2525
  %v2616 = vunpack.c.h.b16 %v2525
  %v2617 = vunpack.c.l.b16 %v2526
  %v2618 = vunpack.c.h.b16 %v2526
  %v2619 = vunpack.c.l.b16 %v2527
  %v2620 = vunpack.c.h.b16 %v2527
  %v2621 = vunpack.c.l.b16 %v2528
  %v2622 = vunpack.c.h.b16 %v2528
  %v2623 = vunpack.c.l.b16 %v2529
  %v2624 = vunpack.c.h.b16 %v2529
  %v2625 = vunpack.c.l.b16 %v2530
  %v2626 = vunpack.c.h.b16 %v2530
  %v2627 = vpack.c.b16 %v2567, %v2563
  %v2628 = vpack.c.b16 %v2568, %v2564
  %v2629 = vpack.c.b16 %v2569, %v2565
  %v2630 = vpack.c.b16 %v2570, %v2566
  %v2631 = vpack.c.b16 %v2575, %v2571
  %v2632 = vpack.c.b16 %v2576, %v2572
  %v2633 = vpack.c.b16 %v2577, %v2573
  %v2634 = vpack.c.b16 %v2578, %v2574
  %v2635 = vpack.c.b16 %v2583, %v2579
  %v2636 = vpack.c.b16 %v2584, %v2580
  %v2637 = vpack.c.b16 %v2585, %v2581
  %v2638 = vpack.c.b16 %v2586, %v2582
  %v2639 = vpack.c.b16 %v2591, %v2587
  %v2640 = vpack.c.b16 %v2592, %v2588
  %v2641 = vpack.c.b16 %v2593, %v2589
  %v2642 = vpack.c.b16 %v2594, %v2590
  %v2643 = vpack.c.b16 %v2599, %v2595
  %v2644 = vpack.c.b16 %v2600, %v2596
  %v2645 = vpack.c.b16 %v2601, %v2597
  %v2646 = vpack.c.b16 %v2602, %v2598
  %v2647 = vpack.c.b16 %v2607, %v2603
  %v2648 = vpack.c.b16 %v2608, %v2604
  %v2649 = vpack.c.b16 %v2609, %v2605
  %v2650 = vpack.c.b16 %v2610, %v2606
  %v2651 = vpack.c.b16 %v2615, %v2611
  %v2652 = vpack.c.b16 %v2616, %v2612
  %v2653 = vpack.c.b16 %v2617, %v2613
  %v2654 = vpack.c.b16 %v2618, %v2614
  %v2655 = vpack.c.b16 %v2623, %v2619
  %v2656 = vpack.c.b16 %v2624, %v2620
  %v2657 = vpack.c.b16 %v2625, %v2621
  %v2658 = vpack.c.b16 %v2626, %v2622
  %2691 = vmatprep.subr.bf16.mxu0 %v2628
  %2692 = vmatpush1.bf16.msra.mxu0 %v2627
  %2693 = vmatprep.subr.bf16.mxu0 %v2632
  %2694 = vmatpush1.bf16.msra.mxu0 %v2631
  %2695 = vmatprep.subr.bf16.mxu0 %v2636
  %2696 = vmatpush1.bf16.msra.mxu0 %v2635
  %2697 = vmatprep.subr.bf16.mxu0 %v2640
  %2698 = vmatpush1.bf16.msra.mxu0 %v2639
  %2699 = vmatprep.subr.bf16.mxu0 %v2644
  %2700 = vmatpush1.bf16.msra.mxu0 %v2643
  %2701 = vmatprep.subr.bf16.mxu0 %v2648
  %2702 = vmatpush1.bf16.msra.mxu0 %v2647
  %2703 = vmatprep.subr.bf16.mxu0 %v2652
  %2704 = vmatpush1.bf16.msra.mxu0 %v2651
  %2705 = vmatprep.subr.bf16.mxu0 %v2656
  %2706 = vmatpush1.bf16.msra.mxu0 %v2655
  %2707 = vmatprep.subr.bf16.mxu0 0
  %2708 = vmatpush1.bf16.msra.mxu0 0
  %2709 = vmatprep.subr.bf16.mxu0 0
  %2710 = vmatpush1.bf16.msra.mxu0 0
  %2711 = vmatprep.subr.bf16.mxu0 0
  %2712 = vmatpush1.bf16.msra.mxu0 0
  %2713 = vmatprep.subr.bf16.mxu0 0
  %2714 = vmatpush1.bf16.msra.mxu0 0
  %2715 = vmatprep.subr.bf16.mxu0 0
  %2716 = vmatpush1.bf16.msra.mxu0 0
  %2717 = vmatprep.subr.bf16.mxu0 0
  %2718 = vmatpush1.bf16.msra.mxu0 0
  %2719 = vmatprep.subr.bf16.mxu0 0
  %2720 = vmatpush1.bf16.msra.mxu0 0
  %2721 = vmatprep.subr.bf16.mxu0 0
  %2722 = vmatpush1.bf16.msra.mxu0 0
  %2723 = vmatprep.mubr.bf16.mxu0 0
  %2724 = vmatmul.mubr.bf16.gmra.mrb[0].mxu0 %v2498
  %v2725 = vpop.f32.mrb[0].mxu0
  %v2726 = vadd.f32 0.0, %v2725
  %v2727 = vpop.f32.mrb[0].mxu0
  %v2728 = vadd.f32 0.0, %v2727
  %v2729 = vpop.f32.mrb[0].mxu0
  %v2730 = vpop.f32.mrb[0].mxu0
  %2731 = vdwg.mxu0
  %2732 = vmatprep.subr.bf16.mxu0 %v2630
  %2733 = vmatpush1.bf16.msra.mxu0 %v2629
  %2734 = vmatprep.subr.bf16.mxu0 %v2634
  %2735 = vmatpush1.bf16.msra.mxu0 %v2633
  %2736 = vmatprep.subr.bf16.mxu0 %v2638
  %2737 = vmatpush1.bf16.msra.mxu0 %v2637
  %2738 = vmatprep.subr.bf16.mxu0 %v2642
  %2739 = vmatpush1.bf16.msra.mxu0 %v2641
  %2740 = vmatprep.subr.bf16.mxu0 %v2646
  %2741 = vmatpush1.bf16.msra.mxu0 %v2645
  %2742 = vmatprep.subr.bf16.mxu0 %v2650
  %2743 = vmatpush1.bf16.msra.mxu0 %v2649
  %2744 = vmatprep.subr.bf16.mxu0 %v2654
  %2745 = vmatpush1.bf16.msra.mxu0 %v2653
  %2746 = vmatprep.subr.bf16.mxu0 %v2658
  %2747 = vmatpush1.bf16.msra.mxu0 %v2657
  %2748 = vmatprep.subr.bf16.mxu0 0
  %2749 = vmatpush1.bf16.msra.mxu0 0
  %2750 = vmatprep.subr.bf16.mxu0 0
  %2751 = vmatpush1.bf16.msra.mxu0 0
  %2752 = vmatprep.subr.bf16.mxu0 0
  %2753 = vmatpush1.bf16.msra.mxu0 0
  %2754 = vmatprep.subr.bf16.mxu0 0
  %2755 = vmatpush1.bf16.msra.mxu0 0
  %2756 = vmatprep.subr.bf16.mxu0 0
  %2757 = vmatpush1.bf16.msra.mxu0 0
  %2758 = vmatprep.subr.bf16.mxu0 0
  %2759 = vmatpush1.bf16.msra.mxu0 0
  %2760 = vmatprep.subr.bf16.mxu0 0
  %2761 = vmatpush1.bf16.msra.mxu0 0
  %2762 = vmatprep.subr.bf16.mxu0 0
  %2763 = vmatpush1.bf16.msra.mxu0 0
  %2764 = vmatprep.mubr.bf16.mxu0 0
  %2765 = vmatmul.mubr.bf16.gmra.mrb[0].mxu0 %v2498
  %v2766 = vpop.f32.mrb[0].mxu0
  %v2767 = vadd.f32 0.0, %v2766
  %v2768 = vpop.f32.mrb[0].mxu0
  %v2769 = vadd.f32 0.0, %v2768
  %v2770 = vpop.f32.mrb[0].mxu0
  %v2771 = vpop.f32.mrb[0].mxu0
  %2772 = vdwg.mxu0
  %v2773 = vadd.f32 %v2494, %v2726
  %v2774 = vadd.f32 %v2495, %v2728
  %v2775 = vadd.f32 %v2496, %v2767
  %v2776 = vadd.f32 %v2497, %v2769
  %v2777 = vxor.u32 %v2773, 2147483648
  %v2778 = vxor.u32 %v2774, 2147483648
  %v2779 = vxor.u32 %v2775, 2147483648
  %v2780 = vmul.f32 %v2777, 1.442695
  %v2781 = vpow.pop %v2780
  %v2782 = vmul.f32 %v2778, 1.442695
  %v2783 = vpow.pop %v2782
  %v2784 = vmul.f32 %v2779, 1.442695
  %v2785 = vpow.pop %v2784
  %v2786 = vadd.f32 %v2781, 1.0
  %v2787 = vadd.f32 %v2783, 1.0
  %v2788 = vadd.f32 %v2785, 1.0
  %v2789 = vrcp.pop %v2786
  %v2790 = vmul.f32 1.0, %v2789
  %v2791 = vrcp.pop %v2787
  %v2792 = vmul.f32 1.0, %v2791
  %v2793 = vrcp.pop %v2788
  %v2794 = vmul.f32 1.0, %v2793
  %v2795 = vtanh.pop %v2776
  %v2796 = vmul.f32 %v2792, %v2486
  %v2797 = vmul.f32 %v2790, %v2795
  %v2798 = vadd.f32 %v2796, %v2797
  %v2799 = vtanh.pop %v2798
  %v2800 = vmul.f32 %v2794, %v2799
  %s2801 = scalar_lea.vmem [#allocation3], 40
  %2802 = vst [vmem:[%s2801] sm:$0xff] %v2800
  %s2803 = smul.u32 6, 4
  %s2804 = smul.addr %s2803, 8
  %s2805 = scalar_lea.vmem [#allocation2], %s2804
  %v2806 = vld [vmem:[%s2805] sm:$0xff]
  %v2807 = vld [vmem:[%s2805 + $0x8] sm:$0xff]
  %v2808 = vld [vmem:[%s2805 + $0x10] sm:$0xff]
  %v2809 = vld [vmem:[%s2805 + $0x18] sm:$0xff]
  %v2810 = vpack.c.bf16 %v2800, %v2800
  %v2811 = vld [vmem:[%s11] sm:$0xff]
  %v2812 = vld [vmem:[%s11 + $0x8] sm:$0xff]
  %v2813 = vld [vmem:[%s11 + $0x10] sm:$0xff]
  %v2814 = vld [vmem:[%s11 + $0x18] sm:$0xff]
  %v2815 = vld [vmem:[%s11 + $0x20] sm:$0xff]
  %v2816 = vld [vmem:[%s11 + $0x28] sm:$0xff]
  %v2817 = vld [vmem:[%s11 + $0x30] sm:$0xff]
  %v2818 = vld [vmem:[%s11 + $0x38] sm:$0xff]
  %v2819 = vld [vmem:[%s11 + $0x40] sm:$0xff]
  %v2820 = vld [vmem:[%s11 + $0x48] sm:$0xff]
  %v2821 = vld [vmem:[%s11 + $0x50] sm:$0xff]
  %v2822 = vld [vmem:[%s11 + $0x58] sm:$0xff]
  %v2823 = vld [vmem:[%s11 + $0x60] sm:$0xff]
  %v2824 = vld [vmem:[%s11 + $0x68] sm:$0xff]
  %v2825 = vld [vmem:[%s11 + $0x70] sm:$0xff]
  %v2826 = vld [vmem:[%s11 + $0x78] sm:$0xff]
  %v2827 = vld [vmem:[%s11 + $0x80] sm:$0xff]
  %v2828 = vld [vmem:[%s11 + $0x88] sm:$0xff]
  %v2829 = vld [vmem:[%s11 + $0x90] sm:$0xff]
  %v2830 = vld [vmem:[%s11 + $0x98] sm:$0xff]
  %v2831 = vld [vmem:[%s11 + $0xa0] sm:$0xff]
  %v2832 = vld [vmem:[%s11 + $0xa8] sm:$0xff]
  %v2833 = vld [vmem:[%s11 + $0xb0] sm:$0xff]
  %v2834 = vld [vmem:[%s11 + $0xb8] sm:$0xff]
  %v2835 = vld [vmem:[%s11 + $0xc0] sm:$0xff]
  %v2836 = vld [vmem:[%s11 + $0xc8] sm:$0xff]
  %v2837 = vld [vmem:[%s11 + $0xd0] sm:$0xff]
  %v2838 = vld [vmem:[%s11 + $0xd8] sm:$0xff]
  %v2839 = vld [vmem:[%s11 + $0xe0] sm:$0xff]
  %v2840 = vld [vmem:[%s11 + $0xe8] sm:$0xff]
  %v2841 = vld [vmem:[%s11 + $0xf0] sm:$0xff]
  %v2842 = vld [vmem:[%s11 + $0xf8] sm:$0xff]
  %v2875 = vunpack.c.l.b16 %v2811
  %v2876 = vunpack.c.h.b16 %v2811
  %v2877 = vunpack.c.l.b16 %v2812
  %v2878 = vunpack.c.h.b16 %v2812
  %v2879 = vunpack.c.l.b16 %v2813
  %v2880 = vunpack.c.h.b16 %v2813
  %v2881 = vunpack.c.l.b16 %v2814
  %v2882 = vunpack.c.h.b16 %v2814
  %v2883 = vunpack.c.l.b16 %v2815
  %v2884 = vunpack.c.h.b16 %v2815
  %v2885 = vunpack.c.l.b16 %v2816
  %v2886 = vunpack.c.h.b16 %v2816
  %v2887 = vunpack.c.l.b16 %v2817
  %v2888 = vunpack.c.h.b16 %v2817
  %v2889 = vunpack.c.l.b16 %v2818
  %v2890 = vunpack.c.h.b16 %v2818
  %v2891 = vunpack.c.l.b16 %v2819
  %v2892 = vunpack.c.h.b16 %v2819
  %v2893 = vunpack.c.l.b16 %v2820
  %v2894 = vunpack.c.h.b16 %v2820
  %v2895 = vunpack.c.l.b16 %v2821
  %v2896 = vunpack.c.h.b16 %v2821
  %v2897 = vunpack.c.l.b16 %v2822
  %v2898 = vunpack.c.h.b16 %v2822
  %v2899 = vunpack.c.l.b16 %v2823
  %v2900 = vunpack.c.h.b16 %v2823
  %v2901 = vunpack.c.l.b16 %v2824
  %v2902 = vunpack.c.h.b16 %v2824
  %v2903 = vunpack.c.l.b16 %v2825
  %v2904 = vunpack.c.h.b16 %v2825
  %v2905 = vunpack.c.l.b16 %v2826
  %v2906 = vunpack.c.h.b16 %v2826
  %v2907 = vunpack.c.l.b16 %v2827
  %v2908 = vunpack.c.h.b16 %v2827
  %v2909 = vunpack.c.l.b16 %v2828
  %v2910 = vunpack.c.h.b16 %v2828
  %v2911 = vunpack.c.l.b16 %v2829
  %v2912 = vunpack.c.h.b16 %v2829
  %v2913 = vunpack.c.l.b16 %v2830
  %v2914 = vunpack.c.h.b16 %v2830
  %v2915 = vunpack.c.l.b16 %v2831
  %v2916 = vunpack.c.h.b16 %v2831
  %v2917 = vunpack.c.l.b16 %v2832
  %v2918 = vunpack.c.h.b16 %v2832
  %v2919 = vunpack.c.l.b16 %v2833
  %v2920 = vunpack.c.h.b16 %v2833
  %v2921 = vunpack.c.l.b16 %v2834
  %v2922 = vunpack.c.h.b16 %v2834
  %v2923 = vunpack.c.l.b16 %v2835
  %v2924 = vunpack.c.h.b16 %v2835
  %v2925 = vunpack.c.l.b16 %v2836
  %v2926 = vunpack.c.h.b16 %v2836
  %v2927 = vunpack.c.l.b16 %v2837
  %v2928 = vunpack.c.h.b16 %v2837
  %v2929 = vunpack.c.l.b16 %v2838
  %v2930 = vunpack.c.h.b16 %v2838
  %v2931 = vunpack.c.l.b16 %v2839
  %v2932 = vunpack.c.h.b16 %v2839
  %v2933 = vunpack.c.l.b16 %v2840
  %v2934 = vunpack.c.h.b16 %v2840
  %v2935 = vunpack.c.l.b16 %v2841
  %v2936 = vunpack.c.h.b16 %v2841
  %v2937 = vunpack.c.l.b16 %v2842
  %v2938 = vunpack.c.h.b16 %v2842
  %v2939 = vpack.c.b16 %v2879, %v2875
  %v2940 = vpack.c.b16 %v2880, %v2876
  %v2941 = vpack.c.b16 %v2881, %v2877
  %v2942 = vpack.c.b16 %v2882, %v2878
  %v2943 = vpack.c.b16 %v2887, %v2883
  %v2944 = vpack.c.b16 %v2888, %v2884
  %v2945 = vpack.c.b16 %v2889, %v2885
  %v2946 = vpack.c.b16 %v2890, %v2886
  %v2947 = vpack.c.b16 %v2895, %v2891
  %v2948 = vpack.c.b16 %v2896, %v2892
  %v2949 = vpack.c.b16 %v2897, %v2893
  %v2950 = vpack.c.b16 %v2898, %v2894
  %v2951 = vpack.c.b16 %v2903, %v2899
  %v2952 = vpack.c.b16 %v2904, %v2900
  %v2953 = vpack.c.b16 %v2905, %v2901
  %v2954 = vpack.c.b16 %v2906, %v2902
  %v2955 = vpack.c.b16 %v2911, %v2907
  %v2956 = vpack.c.b16 %v2912, %v2908
  %v2957 = vpack.c.b16 %v2913, %v2909
  %v2958 = vpack.c.b16 %v2914, %v2910
  %v2959 = vpack.c.b16 %v2919, %v2915
  %v2960 = vpack.c.b16 %v2920, %v2916
  %v2961 = vpack.c.b16 %v2921, %v2917
  %v2962 = vpack.c.b16 %v2922, %v2918
  %v2963 = vpack.c.b16 %v2927, %v2923
  %v2964 = vpack.c.b16 %v2928, %v2924
  %v2965 = vpack.c.b16 %v2929, %v2925
  %v2966 = vpack.c.b16 %v2930, %v2926
  %v2967 = vpack.c.b16 %v2935, %v2931
  %v2968 = vpack.c.b16 %v2936, %v2932
  %v2969 = vpack.c.b16 %v2937, %v2933
  %v2970 = vpack.c.b16 %v2938, %v2934
  %3003 = vmatprep.subr.bf16.mxu0 %v2940
  %3004 = vmatpush1.bf16.msra.mxu0 %v2939
  %3005 = vmatprep.subr.bf16.mxu0 %v2944
  %3006 = vmatpush1.bf16.msra.mxu0 %v2943
  %3007 = vmatprep.subr.bf16.mxu0 %v2948
  %3008 = vmatpush1.bf16.msra.mxu0 %v2947
  %3009 = vmatprep.subr.bf16.mxu0 %v2952
  %3010 = vmatpush1.bf16.msra.mxu0 %v2951
  %3011 = vmatprep.subr.bf16.mxu0 %v2956
  %3012 = vmatpush1.bf16.msra.mxu0 %v2955
  %3013 = vmatprep.subr.bf16.mxu0 %v2960
  %3014 = vmatpush1.bf16.msra.mxu0 %v2959
  %3015 = vmatprep.subr.bf16.mxu0 %v2964
  %3016 = vmatpush1.bf16.msra.mxu0 %v2963
  %3017 = vmatprep.subr.bf16.mxu0 %v2968
  %3018 = vmatpush1.bf16.msra.mxu0 %v2967
  %3019 = vmatprep.subr.bf16.mxu0 0
  %3020 = vmatpush1.bf16.msra.mxu0 0
  %3021 = vmatprep.subr.bf16.mxu0 0
  %3022 = vmatpush1.bf16.msra.mxu0 0
  %3023 = vmatprep.subr.bf16.mxu0 0
  %3024 = vmatpush1.bf16.msra.mxu0 0
  %3025 = vmatprep.subr.bf16.mxu0 0
  %3026 = vmatpush1.bf16.msra.mxu0 0
  %3027 = vmatprep.subr.bf16.mxu0 0
  %3028 = vmatpush1.bf16.msra.mxu0 0
  %3029 = vmatprep.subr.bf16.mxu0 0
  %3030 = vmatpush1.bf16.msra.mxu0 0
  %3031 = vmatprep.subr.bf16.mxu0 0
  %3032 = vmatpush1.bf16.msra.mxu0 0
  %3033 = vmatprep.subr.bf16.mxu0 0
  %3034 = vmatpush1.bf16.msra.mxu0 0
  %3035 = vmatprep.mubr.bf16.mxu0 0
  %3036 = vmatmul.mubr.bf16.gmra.mrb[0].mxu0 %v2810
  %v3037 = vpop.f32.mrb[0].mxu0
  %v3038 = vadd.f32 0.0, %v3037
  %v3039 = vpop.f32.mrb[0].mxu0
  %v3040 = vadd.f32 0.0, %v3039
  %v3041 = vpop.f32.mrb[0].mxu0
  %v3042 = vpop.f32.mrb[0].mxu0
  %3043 = vdwg.mxu0
  %3044 = vmatprep.subr.bf16.mxu0 %v2942
  %3045 = vmatpush1.bf16.msra.mxu0 %v2941
  %3046 = vmatprep.subr.bf16.mxu0 %v2946
  %3047 = vmatpush1.bf16.msra.mxu0 %v2945
  %3048 = vmatprep.subr.bf16.mxu0 %v2950
  %3049 = vmatpush1.bf16.msra.mxu0 %v2949
  %3050 = vmatprep.subr.bf16.mxu0 %v2954
  %3051 = vmatpush1.bf16.msra.mxu0 %v2953
  %3052 = vmatprep.subr.bf16.mxu0 %v2958
  %3053 = vmatpush1.bf16.msra.mxu0 %v2957
  %3054 = vmatprep.subr.bf16.mxu0 %v2962
  %3055 = vmatpush1.bf16.msra.mxu0 %v2961
  %3056 = vmatprep.subr.bf16.mxu0 %v2966
  %3057 = vmatpush1.bf16.msra.mxu0 %v2965
  %3058 = vmatprep.subr.bf16.mxu0 %v2970
  %3059 = vmatpush1.bf16.msra.mxu0 %v2969
  %3060 = vmatprep.subr.bf16.mxu0 0
  %3061 = vmatpush1.bf16.msra.mxu0 0
  %3062 = vmatprep.subr.bf16.mxu0 0
  %3063 = vmatpush1.bf16.msra.mxu0 0
  %3064 = vmatprep.subr.bf16.mxu0 0
  %3065 = vmatpush1.bf16.msra.mxu0 0
  %3066 = vmatprep.subr.bf16.mxu0 0
  %3067 = vmatpush1.bf16.msra.mxu0 0
  %3068 = vmatprep.subr.bf16.mxu0 0
  %3069 = vmatpush1.bf16.msra.mxu0 0
  %3070 = vmatprep.subr.bf16.mxu0 0
  %3071 = vmatpush1.bf16.msra.mxu0 0
  %3072 = vmatprep.subr.bf16.mxu0 0
  %3073 = vmatpush1.bf16.msra.mxu0 0
  %3074 = vmatprep.subr.bf16.mxu0 0
  %3075 = vmatpush1.bf16.msra.mxu0 0
  %3076 = vmatprep.mubr.bf16.mxu0 0
  %3077 = vmatmul.mubr.bf16.gmra.mrb[0].mxu0 %v2810
  %v3078 = vpop.f32.mrb[0].mxu0
  %v3079 = vadd.f32 0.0, %v3078
  %v3080 = vpop.f32.mrb[0].mxu0
  %v3081 = vadd.f32 0.0, %v3080
  %v3082 = vpop.f32.mrb[0].mxu0
  %v3083 = vpop.f32.mrb[0].mxu0
  %3084 = vdwg.mxu0
  %v3085 = vadd.f32 %v2806, %v3038
  %v3086 = vadd.f32 %v2807, %v3040
  %v3087 = vadd.f32 %v2808, %v3079
  %v3088 = vadd.f32 %v2809, %v3081
  %v3089 = vxor.u32 %v3085, 2147483648
  %v3090 = vxor.u32 %v3086, 2147483648
  %v3091 = vxor.u32 %v3087, 2147483648
  %v3092 = vmul.f32 %v3089, 1.442695
  %v3093 = vpow.pop %v3092
  %v3094 = vmul.f32 %v3090, 1.442695
  %v3095 = vpow.pop %v3094
  %v3096 = vmul.f32 %v3091, 1.442695
  %v3097 = vpow.pop %v3096
  %v3098 = vadd.f32 %v3093, 1.0
  %v3099 = vadd.f32 %v3095, 1.0
  %v3100 = vadd.f32 %v3097, 1.0
  %v3101 = vrcp.pop %v3098
  %v3102 = vmul.f32 1.0, %v3101
  %v3103 = vrcp.pop %v3099
  %v3104 = vmul.f32 1.0, %v3103
  %v3105 = vrcp.pop %v3100
  %v3106 = vmul.f32 1.0, %v3105
  %v3107 = vtanh.pop %v3088
  %v3108 = vmul.f32 %v3104, %v2798
  %v3109 = vmul.f32 %v3102, %v3107
  %v3110 = vadd.f32 %v3108, %v3109
  %v3111 = vtanh.pop %v3110
  %v3112 = vmul.f32 %v3106, %v3111
  %s3113 = scalar_lea.vmem [#allocation3], 48
  %3114 = vst [vmem:[%s3113] sm:$0xff] %v3112
  %s3115 = smul.u32 7, 4
  %s3116 = smul.addr %s3115, 8
  %s3117 = scalar_lea.vmem [#allocation2], %s3116
  %v3118 = vld [vmem:[%s3117] sm:$0xff]
  %v3119 = vld [vmem:[%s3117 + $0x8] sm:$0xff]
  %v3120 = vld [vmem:[%s3117 + $0x10] sm:$0xff]
  %v3121 = vld [vmem:[%s3117 + $0x18] sm:$0xff]
  %v3122 = vpack.c.bf16 %v3112, %v3112
  %v3123 = vld [vmem:[%s11] sm:$0xff]
  %v3124 = vld [vmem:[%s11 + $0x8] sm:$0xff]
  %v3125 = vld [vmem:[%s11 + $0x10] sm:$0xff]
  %v3126 = vld [vmem:[%s11 + $0x18] sm:$0xff]
  %v3127 = vld [vmem:[%s11 + $0x20] sm:$0xff]
  %v3128 = vld [vmem:[%s11 + $0x28] sm:$0xff]
  %v3129 = vld [vmem:[%s11 + $0x30] sm:$0xff]
  %v3130 = vld [vmem:[%s11 + $0x38] sm:$0xff]
  %v3131 = vld [vmem:[%s11 + $0x40] sm:$0xff]
  %v3132 = vld [vmem:[%s11 + $0x48] sm:$0xff]
  %v3133 = vld [vmem:[%s11 + $0x50] sm:$0xff]
  %v3134 = vld [vmem:[%s11 + $0x58] sm:$0xff]
  %v3135 = vld [vmem:[%s11 + $0x60] sm:$0xff]
  %v3136 = vld [vmem:[%s11 + $0x68] sm:$0xff]
  %v3137 = vld [vmem:[%s11 + $0x70] sm:$0xff]
  %v3138 = vld [vmem:[%s11 + $0x78] sm:$0xff]
  %v3139 = vld [vmem:[%s11 + $0x80] sm:$0xff]
  %v3140 = vld [vmem:[%s11 + $0x88] sm:$0xff]
  %v3141 = vld [vmem:[%s11 + $0x90] sm:$0xff]
  %v3142 = vld [vmem:[%s11 + $0x98] sm:$0xff]
  %v3143 = vld [vmem:[%s11 + $0xa0] sm:$0xff]
  %v3144 = vld [vmem:[%s11 + $0xa8] sm:$0xff]
  %v3145 = vld [vmem:[%s11 + $0xb0] sm:$0xff]
  %v3146 = vld [vmem:[%s11 + $0xb8] sm:$0xff]
  %v3147 = vld [vmem:[%s11 + $0xc0] sm:$0xff]
  %v3148 = vld [vmem:[%s11 + $0xc8] sm:$0xff]
  %v3149 = vld [vmem:[%s11 + $0xd0] sm:$0xff]
  %v3150 = vld [vmem:[%s11 + $0xd8] sm:$0xff]
  %v3151 = vld [vmem:[%s11 + $0xe0] sm:$0xff]
  %v3152 = vld [vmem:[%s11 + $0xe8] sm:$0xff]
  %v3153 = vld [vmem:[%s11 + $0xf0] sm:$0xff]
  %v3154 = vld [vmem:[%s11 + $0xf8] sm:$0xff]
  %v3187 = vunpack.c.l.b16 %v3123
  %v3188 = vunpack.c.h.b16 %v3123
  %v3189 = vunpack.c.l.b16 %v3124
  %v3190 = vunpack.c.h.b16 %v3124
  %v3191 = vunpack.c.l.b16 %v3125
  %v3192 = vunpack.c.h.b16 %v3125
  %v3193 = vunpack.c.l.b16 %v3126
  %v3194 = vunpack.c.h.b16 %v3126
  %v3195 = vunpack.c.l.b16 %v3127
  %v3196 = vunpack.c.h.b16 %v3127
  %v3197 = vunpack.c.l.b16 %v3128
  %v3198 = vunpack.c.h.b16 %v3128
  %v3199 = vunpack.c.l.b16 %v3129
  %v3200 = vunpack.c.h.b16 %v3129
  %v3201 = vunpack.c.l.b16 %v3130
  %v3202 = vunpack.c.h.b16 %v3130
  %v3203 = vunpack.c.l.b16 %v3131
  %v3204 = vunpack.c.h.b16 %v3131
  %v3205 = vunpack.c.l.b16 %v3132
  %v3206 = vunpack.c.h.b16 %v3132
  %v3207 = vunpack.c.l.b16 %v3133
  %v3208 = vunpack.c.h.b16 %v3133
  %v3209 = vunpack.c.l.b16 %v3134
  %v3210 = vunpack.c.h.b16 %v3134
  %v3211 = vunpack.c.l.b16 %v3135
  %v3212 = vunpack.c.h.b16 %v3135
  %v3213 = vunpack.c.l.b16 %v3136
  %v3214 = vunpack.c.h.b16 %v3136
  %v3215 = vunpack.c.l.b16 %v3137
  %v3216 = vunpack.c.h.b16 %v3137
  %v3217 = vunpack.c.l.b16 %v3138
  %v3218 = vunpack.c.h.b16 %v3138
  %v3219 = vunpack.c.l.b16 %v3139
  %v3220 = vunpack.c.h.b16 %v3139
  %v3221 = vunpack.c.l.b16 %v3140
  %v3222 = vunpack.c.h.b16 %v3140
  %v3223 = vunpack.c.l.b16 %v3141
  %v3224 = vunpack.c.h.b16 %v3141
  %v3225 = vunpack.c.l.b16 %v3142
  %v3226 = vunpack.c.h.b16 %v3142
  %v3227 = vunpack.c.l.b16 %v3143
  %v3228 = vunpack.c.h.b16 %v3143
  %v3229 = vunpack.c.l.b16 %v3144
  %v3230 = vunpack.c.h.b16 %v3144
  %v3231 = vunpack.c.l.b16 %v3145
  %v3232 = vunpack.c.h.b16 %v3145
  %v3233 = vunpack.c.l.b16 %v3146
  %v3234 = vunpack.c.h.b16 %v3146
  %v3235 = vunpack.c.l.b16 %v3147
  %v3236 = vunpack.c.h.b16 %v3147
  %v3237 = vunpack.c.l.b16 %v3148
  %v3238 = vunpack.c.h.b16 %v3148
  %v3239 = vunpack.c.l.b16 %v3149
  %v3240 = vunpack.c.h.b16 %v3149
  %v3241 = vunpack.c.l.b16 %v3150
  %v3242 = vunpack.c.h.b16 %v3150
  %v3243 = vunpack.c.l.b16 %v3151
  %v3244 = vunpack.c.h.b16 %v3151
  %v3245 = vunpack.c.l.b16 %v3152
  %v3246 = vunpack.c.h.b16 %v3152
  %v3247 = vunpack.c.l.b16 %v3153
  %v3248 = vunpack.c.h.b16 %v3153
  %v3249 = vunpack.c.l.b16 %v3154
  %v3250 = vunpack.c.h.b16 %v3154
  %v3251 = vpack.c.b16 %v3191, %v3187
  %v3252 = vpack.c.b16 %v3192, %v3188
  %v3253 = vpack.c.b16 %v3193, %v3189
  %v3254 = vpack.c.b16 %v3194, %v3190
  %v3255 = vpack.c.b16 %v3199, %v3195
  %v3256 = vpack.c.b16 %v3200, %v3196
  %v3257 = vpack.c.b16 %v3201, %v3197
  %v3258 = vpack.c.b16 %v3202, %v3198
  %v3259 = vpack.c.b16 %v3207, %v3203
  %v3260 = vpack.c.b16 %v3208, %v3204
  %v3261 = vpack.c.b16 %v3209, %v3205
  %v3262 = vpack.c.b16 %v3210, %v3206
  %v3263 = vpack.c.b16 %v3215, %v3211
  %v3264 = vpack.c.b16 %v3216, %v3212
  %v3265 = vpack.c.b16 %v3217, %v3213
  %v3266 = vpack.c.b16 %v3218, %v3214
  %v3267 = vpack.c.b16 %v3223, %v3219
  %v3268 = vpack.c.b16 %v3224, %v3220
  %v3269 = vpack.c.b16 %v3225, %v3221
  %v3270 = vpack.c.b16 %v3226, %v3222
  %v3271 = vpack.c.b16 %v3231, %v3227
  %v3272 = vpack.c.b16 %v3232, %v3228
  %v3273 = vpack.c.b16 %v3233, %v3229
  %v3274 = vpack.c.b16 %v3234, %v3230
  %v3275 = vpack.c.b16 %v3239, %v3235
  %v3276 = vpack.c.b16 %v3240, %v3236
  %v3277 = vpack.c.b16 %v3241, %v3237
  %v3278 = vpack.c.b16 %v3242, %v3238
  %v3279 = vpack.c.b16 %v3247, %v3243
  %v3280 = vpack.c.b16 %v3248, %v3244
  %v3281 = vpack.c.b16 %v3249, %v3245
  %v3282 = vpack.c.b16 %v3250, %v3246
  %3315 = vmatprep.subr.bf16.mxu0 %v3252
  %3316 = vmatpush1.bf16.msra.mxu0 %v3251
  %3317 = vmatprep.subr.bf16.mxu0 %v3256
  %3318 = vmatpush1.bf16.msra.mxu0 %v3255
  %3319 = vmatprep.subr.bf16.mxu0 %v3260
  %3320 = vmatpush1.bf16.msra.mxu0 %v3259
  %3321 = vmatprep.subr.bf16.mxu0 %v3264
  %3322 = vmatpush1.bf16.msra.mxu0 %v3263
  %3323 = vmatprep.subr.bf16.mxu0 %v3268
  %3324 = vmatpush1.bf16.msra.mxu0 %v3267
  %3325 = vmatprep.subr.bf16.mxu0 %v3272
  %3326 = vmatpush1.bf16.msra.mxu0 %v3271
  %3327 = vmatprep.subr.bf16.mxu0 %v3276
  %3328 = vmatpush1.bf16.msra.mxu0 %v3275
  %3329 = vmatprep.subr.bf16.mxu0 %v3280
  %3330 = vmatpush1.bf16.msra.mxu0 %v3279
  %3331 = vmatprep.subr.bf16.mxu0 0
  %3332 = vmatpush1.bf16.msra.mxu0 0
  %3333 = vmatprep.subr.bf16.mxu0 0
  %3334 = vmatpush1.bf16.msra.mxu0 0
  %3335 = vmatprep.subr.bf16.mxu0 0
  %3336 = vmatpush1.bf16.msra.mxu0 0
  %3337 = vmatprep.subr.bf16.mxu0 0
  %3338 = vmatpush1.bf16.msra.mxu0 0
  %3339 = vmatprep.subr.bf16.mxu0 0
  %3340 = vmatpush1.bf16.msra.mxu0 0
  %3341 = vmatprep.subr.bf16.mxu0 0
  %3342 = vmatpush1.bf16.msra.mxu0 0
  %3343 = vmatprep.subr.bf16.mxu0 0
  %3344 = vmatpush1.bf16.msra.mxu0 0
  %3345 = vmatprep.subr.bf16.mxu0 0
  %3346 = vmatpush1.bf16.msra.mxu0 0
  %3347 = vmatprep.mubr.bf16.mxu0 0
  %3348 = vmatmul.mubr.bf16.gmra.mrb[0].mxu0 %v3122
  %v3349 = vpop.f32.mrb[0].mxu0
  %v3350 = vadd.f32 0.0, %v3349
  %v3351 = vpop.f32.mrb[0].mxu0
  %v3352 = vadd.f32 0.0, %v3351
  %v3353 = vpop.f32.mrb[0].mxu0
  %v3354 = vpop.f32.mrb[0].mxu0
  %3355 = vdwg.mxu0
  %3356 = vmatprep.subr.bf16.mxu0 %v3254
  %3357 = vmatpush1.bf16.msra.mxu0 %v3253
  %3358 = vmatprep.subr.bf16.mxu0 %v3258
  %3359 = vmatpush1.bf16.msra.mxu0 %v3257
  %3360 = vmatprep.subr.bf16.mxu0 %v3262
  %3361 = vmatpush1.bf16.msra.mxu0 %v3261
  %3362 = vmatprep.subr.bf16.mxu0 %v3266
  %3363 = vmatpush1.bf16.msra.mxu0 %v3265
  %3364 = vmatprep.subr.bf16.mxu0 %v3270
  %3365 = vmatpush1.bf16.msra.mxu0 %v3269
  %3366 = vmatprep.subr.bf16.mxu0 %v3274
  %3367 = vmatpush1.bf16.msra.mxu0 %v3273
  %3368 = vmatprep.subr.bf16.mxu0 %v3278
  %3369 = vmatpush1.bf16.msra.mxu0 %v3277
  %3370 = vmatprep.subr.bf16.mxu0 %v3282
  %3371 = vmatpush1.bf16.msra.mxu0 %v3281
  %3372 = vmatprep.subr.bf16.mxu0 0
  %3373 = vmatpush1.bf16.msra.mxu0 0
  %3374 = vmatprep.subr.bf16.mxu0 0
  %3375 = vmatpush1.bf16.msra.mxu0 0
  %3376 = vmatprep.subr.bf16.mxu0 0
  %3377 = vmatpush1.bf16.msra.mxu0 0
  %3378 = vmatprep.subr.bf16.mxu0 0
  %3379 = vmatpush1.bf16.msra.mxu0 0
  %3380 = vmatprep.subr.bf16.mxu0 0
  %3381 = vmatpush1.bf16.msra.mxu0 0
  %3382 = vmatprep.subr.bf16.mxu0 0
  %3383 = vmatpush1.bf16.msra.mxu0 0
  %3384 = vmatprep.subr.bf16.mxu0 0
  %3385 = vmatpush1.bf16.msra.mxu0 0
  %3386 = vmatprep.subr.bf16.mxu0 0
  %3387 = vmatpush1.bf16.msra.mxu0 0
  %3388 = vmatprep.mubr.bf16.mxu0 0
  %3389 = vmatmul.mubr.bf16.gmra.mrb[0].mxu0 %v3122
  %v3390 = vpop.f32.mrb[0].mxu0
  %v3391 = vadd.f32 0.0, %v3390
  %v3392 = vpop.f32.mrb[0].mxu0
  %v3393 = vadd.f32 0.0, %v3392
  %v3394 = vpop.f32.mrb[0].mxu0
  %v3395 = vpop.f32.mrb[0].mxu0
  %3396 = vdwg.mxu0
  %v3397 = vadd.f32 %v3118, %v3350
  %v3398 = vadd.f32 %v3119, %v3352
  %v3399 = vadd.f32 %v3120, %v3391
  %v3400 = vadd.f32 %v3121, %v3393
  %v3401 = vxor.u32 %v3397, 2147483648
  %v3402 = vxor.u32 %v3398, 2147483648
  %v3403 = vxor.u32 %v3399, 2147483648
  %v3404 = vmul.f32 %v3401, 1.442695
  %v3405 = vpow.pop %v3404
  %v3406 = vmul.f32 %v3402, 1.442695
  %v3407 = vpow.pop %v3406
  %v3408 = vmul.f32 %v3403, 1.442695
  %v3409 = vpow.pop %v3408
  %v3410 = vadd.f32 %v3405, 1.0
  %v3411 = vadd.f32 %v3407, 1.0
  %v3412 = vadd.f32 %v3409, 1.0
  %v3413 = vrcp.pop %v3410
  %v3414 = vmul.f32 1.0, %v3413
  %v3415 = vrcp.pop %v3411
  %v3416 = vmul.f32 1.0, %v3415
  %v3417 = vrcp.pop %v3412
  %v3418 = vmul.f32 1.0, %v3417
  %v3419 = vtanh.pop %v3400
  %v3420 = vmul.f32 %v3416, %v3110
  %v3421 = vmul.f32 %v3414, %v3419
  %v3422 = vadd.f32 %v3420, %v3421
  %v3423 = vtanh.pop %v3422
  %v3424 = vmul.f32 %v3418, %v3423
  %s3425 = scalar_lea.vmem [#allocation3], 56
  %3426 = vst [vmem:[%s3425] sm:$0xff] %v3424
  %v3427 = vld [vmem:[#allocation3] sm:$0xff]
  %v3428 = vld [vmem:[#allocation3 + $0x8] sm:$0xff]
  %v3429 = vld [vmem:[#allocation3 + $0x10] sm:$0xff]
  %v3430 = vld [vmem:[#allocation3 + $0x18] sm:$0xff]
  %v3431 = vld [vmem:[#allocation3 + $0x20] sm:$0xff]
  %v3432 = vld [vmem:[#allocation3 + $0x28] sm:$0xff]
  %v3433 = vld [vmem:[#allocation3 + $0x30] sm:$0xff]
  %v3434 = vld [vmem:[#allocation3 + $0x38] sm:$0xff]
  %v3435 = vld [vmem:[%s0] sm:$0xff]
  %v3436 = vld [vmem:[%s0 + $0x8] sm:$0xff]
  %v3437 = vld [vmem:[%s0 + $0x10] sm:$0xff]
  %v3438 = vld [vmem:[%s0 + $0x18] sm:$0xff]
  %v3439 = vld [vmem:[%s0 + $0x20] sm:$0xff]
  %v3440 = vld [vmem:[%s0 + $0x28] sm:$0xff]
  %v3441 = vld [vmem:[%s0 + $0x30] sm:$0xff]
  %v3442 = vld [vmem:[%s0 + $0x38] sm:$0xff]
  %3444 = vset.pattern.permute.xlu0 0
  %3445 = vperm.xlu0 %3444, %v3435
  %v3446 = vpop.permute.xlu0 %3445
  %3449 = vset.pattern.permute.xlu0 0
  %3450 = vperm.xlu0 %3449, %v3436
  %v3451 = vpop.permute.xlu0 %3450
  %3454 = vset.pattern.permute.xlu0 0
  %3455 = vperm.xlu0 %3454, %v3437
  %v3456 = vpop.permute.xlu0 %3455
  %3459 = vset.pattern.permute.xlu0 0
  %3460 = vperm.xlu0 %3459, %v3438
  %v3461 = vpop.permute.xlu0 %3460
  %3464 = vset.pattern.permute.xlu0 0
  %3465 = vperm.xlu0 %3464, %v3439
  %v3466 = vpop.permute.xlu0 %3465
  %3469 = vset.pattern.permute.xlu0 0
  %3470 = vperm.xlu0 %3469, %v3440
  %v3471 = vpop.permute.xlu0 %3470
  %3474 = vset.pattern.permute.xlu0 0
  %3475 = vperm.xlu0 %3474, %v3441
  %v3476 = vpop.permute.xlu0 %3475
  %3479 = vset.pattern.permute.xlu0 0
  %3480 = vperm.xlu0 %3479, %v3442
  %v3481 = vpop.permute.xlu0 %3480
  %v3483 = vmul.f32 %v3427, %v3446
  %v3484 = vmul.f32 %v3428, %v3451
  %v3485 = vmul.f32 %v3429, %v3456
  %v3486 = vmul.f32 %v3430, %v3461
  %v3487 = vmul.f32 %v3431, %v3466
  %v3488 = vmul.f32 %v3432, %v3471
  %v3489 = vmul.f32 %v3433, %v3476
  %v3490 = vmul.f32 %v3434, %v3481
  %v3491 = vld [vmem:[%s13] sm:$0x1]
  %v3492 = vld [vmem:[%s14] sm:$0x1]
  %vm3493 = vcmask 523264
  %v3494 = vsel %vm3493, %v3483, 0.0
  %3495 = vadd.xlane.f32.xlu0 %v3494
  %v3496 = vpop.xlane.xlu0 %3495
  %v3497 = vsel %vm3493, %v3484, 0.0
  %3498 = vadd.xlane.f32.xlu0 %v3497
  %v3499 = vpop.xlane.xlu0 %3498
  %v3500 = vsel %vm3493, %v3485, 0.0
  %3501 = vadd.xlane.f32.xlu0 %v3500
  %v3502 = vpop.xlane.xlu0 %3501
  %v3503 = vsel %vm3493, %v3486, 0.0
  %3504 = vadd.xlane.f32.xlu0 %v3503
  %v3505 = vpop.xlane.xlu0 %3504
  %v3506 = vsel %vm3493, %v3487, 0.0
  %3507 = vadd.xlane.f32.xlu0 %v3506
  %v3508 = vpop.xlane.xlu0 %3507
  %v3509 = vsel %vm3493, %v3488, 0.0
  %3510 = vadd.xlane.f32.xlu0 %v3509
  %v3511 = vpop.xlane.xlu0 %3510
  %v3512 = vsel %vm3493, %v3489, 0.0
  %3513 = vadd.xlane.f32.xlu0 %v3512
  %v3514 = vpop.xlane.xlu0 %3513
  %v3515 = vsel %vm3493, %v3490, 0.0
  %3516 = vadd.xlane.f32.xlu0 %v3515
  %v3517 = vpop.xlane.xlu0 %3516
  %v3518 = vrcp.pop 64.0
  %v3519 = vmul.f32 %v3496, %v3518
  %v3520 = vmul.f32 %v3499, %v3518
  %v3521 = vmul.f32 %v3502, %v3518
  %v3522 = vmul.f32 %v3505, %v3518
  %v3523 = vmul.f32 %v3508, %v3518
  %v3524 = vmul.f32 %v3511, %v3518
  %v3525 = vmul.f32 %v3514, %v3518
  %v3526 = vmul.f32 %v3517, %v3518
  %v3527 = vsub.f32 %v3483, %v3519
  %v3528 = vsub.f32 %v3484, %v3520
  %v3529 = vsub.f32 %v3485, %v3521
  %v3530 = vsub.f32 %v3486, %v3522
  %v3531 = vsub.f32 %v3487, %v3523
  %v3532 = vsub.f32 %v3488, %v3524
  %v3533 = vsub.f32 %v3489, %v3525
  %v3534 = vsub.f32 %v3490, %v3526
  %v3535 = vmul.f32 %v3527, %v3527
  %v3536 = vmul.f32 %v3528, %v3528
  %v3537 = vmul.f32 %v3529, %v3529
  %v3538 = vmul.f32 %v3530, %v3530
  %v3539 = vmul.f32 %v3531, %v3531
  %v3540 = vmul.f32 %v3532, %v3532
  %v3541 = vmul.f32 %v3533, %v3533
  %v3542 = vmul.f32 %v3534, %v3534
  %v3543 = vsel %vm3493, %v3535, 0.0
  %3544 = vadd.xlane.f32.xlu0 %v3543
  %v3545 = vpop.xlane.xlu0 %3544
  %v3546 = vsel %vm3493, %v3536, 0.0
  %3547 = vadd.xlane.f32.xlu0 %v3546
  %v3548 = vpop.xlane.xlu0 %3547
  %v3549 = vsel %vm3493, %v3537, 0.0
  %3550 = vadd.xlane.f32.xlu0 %v3549
  %v3551 = vpop.xlane.xlu0 %3550
  %v3552 = vsel %vm3493, %v3538, 0.0
  %3553 = vadd.xlane.f32.xlu0 %v3552
  %v3554 = vpop.xlane.xlu0 %3553
  %v3555 = vsel %vm3493, %v3539, 0.0
  %3556 = vadd.xlane.f32.xlu0 %v3555
  %v3557 = vpop.xlane.xlu0 %3556
  %v3558 = vsel %vm3493, %v3540, 0.0
  %3559 = vadd.xlane.f32.xlu0 %v3558
  %v3560 = vpop.xlane.xlu0 %3559
  %v3561 = vsel %vm3493, %v3541, 0.0
  %3562 = vadd.xlane.f32.xlu0 %v3561
  %v3563 = vpop.xlane.xlu0 %3562
  %v3564 = vsel %vm3493, %v3542, 0.0
  %3565 = vadd.xlane.f32.xlu0 %v3564
  %v3566 = vpop.xlane.xlu0 %3565
  %v3567 = vmul.f32 %v3545, %v3518
  %v3568 = vmul.f32 %v3548, %v3518
  %v3569 = vmul.f32 %v3551, %v3518
  %v3570 = vmul.f32 %v3554, %v3518
  %v3571 = vmul.f32 %v3557, %v3518
  %v3572 = vmul.f32 %v3560, %v3518
  %v3573 = vmul.f32 %v3563, %v3518
  %v3574 = vmul.f32 %v3566, %v3518
  %v3575 = vadd.f32 %v3567, 1e-05
  %v3576 = vadd.f32 %v3568, 1e-05
  %v3577 = vadd.f32 %v3569, 1e-05
  %v3578 = vadd.f32 %v3570, 1e-05
  %v3579 = vadd.f32 %v3571, 1e-05
  %v3580 = vadd.f32 %v3572, 1e-05
  %v3581 = vadd.f32 %v3573, 1e-05
  %v3582 = vadd.f32 %v3574, 1e-05
  %v3583 = vrsqrt.pop %v3575
  %v3584 = vrsqrt.pop %v3576
  %v3585 = vrsqrt.pop %v3577
  %v3586 = vrsqrt.pop %v3578
  %v3587 = vrsqrt.pop %v3579
  %v3588 = vrsqrt.pop %v3580
  %v3589 = vrsqrt.pop %v3581
  %v3590 = vrsqrt.pop %v3582
  %v3591 = vmul.f32 %v3527, %v3583
  %v3592 = vmul.f32 %v3528, %v3584
  %v3593 = vmul.f32 %v3529, %v3585
  %v3594 = vmul.f32 %v3530, %v3586
  %v3595 = vmul.f32 %v3531, %v3587
  %v3596 = vmul.f32 %v3532, %v3588
  %v3597 = vmul.f32 %v3533, %v3589
  %v3598 = vmul.f32 %v3534, %v3590
  %v3600 = vlaneseq
  %v3601 = vshrl.u32 %v3600, 7
  %v3602 = vsub.s32 0, %v3601
  %v3603 = vrot.slane %v3491, %v3602
  %v3605 = vmul.f32 %v3591, %v3603
  %v3606 = vmul.f32 %v3592, %v3603
  %v3607 = vmul.f32 %v3593, %v3603
  %v3608 = vmul.f32 %v3594, %v3603
  %v3609 = vmul.f32 %v3595, %v3603
  %v3610 = vmul.f32 %v3596, %v3603
  %v3611 = vmul.f32 %v3597, %v3603
  %v3612 = vmul.f32 %v3598, %v3603
  %v3614 = vlaneseq
  %v3615 = vshrl.u32 %v3614, 7
  %v3616 = vsub.s32 0, %v3615
  %v3617 = vrot.slane %v3492, %v3616
  %v3619 = vadd.f32 %v3605, %v3617
  %v3620 = vadd.f32 %v3606, %v3617
  %v3621 = vadd.f32 %v3607, %v3617
  %v3622 = vadd.f32 %v3608, %v3617
  %v3623 = vadd.f32 %v3609, %v3617
  %v3624 = vadd.f32 %v3610, %v3617
  %v3625 = vadd.f32 %v3611, %v3617
  %v3626 = vadd.f32 %v3612, %v3617
  %v3627 = vxor.u32 %v3619, 2147483648
  %v3628 = vxor.u32 %v3620, 2147483648
  %v3629 = vxor.u32 %v3621, 2147483648
  %v3630 = vxor.u32 %v3622, 2147483648
  %v3631 = vxor.u32 %v3623, 2147483648
  %v3632 = vxor.u32 %v3624, 2147483648
  %v3633 = vxor.u32 %v3625, 2147483648
  %v3634 = vxor.u32 %v3626, 2147483648
  %v3635 = vmul.f32 %v3627, 1.442695
  %v3636 = vpow.pop %v3635
  %v3637 = vmul.f32 %v3628, 1.442695
  %v3638 = vpow.pop %v3637
  %v3639 = vmul.f32 %v3629, 1.442695
  %v3640 = vpow.pop %v3639
  %v3641 = vmul.f32 %v3630, 1.442695
  %v3642 = vpow.pop %v3641
  %v3643 = vmul.f32 %v3631, 1.442695
  %v3644 = vpow.pop %v3643
  %v3645 = vmul.f32 %v3632, 1.442695
  %v3646 = vpow.pop %v3645
  %v3647 = vmul.f32 %v3633, 1.442695
  %v3648 = vpow.pop %v3647
  %v3649 = vmul.f32 %v3634, 1.442695
  %v3650 = vpow.pop %v3649
  %v3651 = vadd.f32 %v3636, 1.0
  %v3652 = vadd.f32 %v3638, 1.0
  %v3653 = vadd.f32 %v3640, 1.0
  %v3654 = vadd.f32 %v3642, 1.0
  %v3655 = vadd.f32 %v3644, 1.0
  %v3656 = vadd.f32 %v3646, 1.0
  %v3657 = vadd.f32 %v3648, 1.0
  %v3658 = vadd.f32 %v3650, 1.0
  %v3659 = vrcp.pop %v3651
  %v3660 = vmul.f32 1.0, %v3659
  %v3661 = vrcp.pop %v3652
  %v3662 = vmul.f32 1.0, %v3661
  %v3663 = vrcp.pop %v3653
  %v3664 = vmul.f32 1.0, %v3663
  %v3665 = vrcp.pop %v3654
  %v3666 = vmul.f32 1.0, %v3665
  %v3667 = vrcp.pop %v3655
  %v3668 = vmul.f32 1.0, %v3667
  %v3669 = vrcp.pop %v3656
  %v3670 = vmul.f32 1.0, %v3669
  %v3671 = vrcp.pop %v3657
  %v3672 = vmul.f32 1.0, %v3671
  %v3673 = vrcp.pop %v3658
  %v3674 = vmul.f32 1.0, %v3673
  %v3675 = vmul.f32 %v3619, %v3660
  %v3676 = vmul.f32 %v3620, %v3662
  %v3677 = vmul.f32 %v3621, %v3664
  %v3678 = vmul.f32 %v3622, %v3666
  %v3679 = vmul.f32 %v3623, %v3668
  %v3680 = vmul.f32 %v3624, %v3670
  %v3681 = vmul.f32 %v3625, %v3672
  %v3682 = vmul.f32 %v3626, %v3674
  %v3683 = vpack.c.bf16 %v3676, %v3675
  %v3684 = vpack.c.bf16 %v3678, %v3677
  %v3685 = vpack.c.bf16 %v3680, %v3679
  %v3686 = vpack.c.bf16 %v3682, %v3681
  %v3687 = vld [vmem:[%s15] sm:$0xf]
  %v3688 = vld [vmem:[%s15 + $0x4] sm:$0xf]
  %v3689 = vld [vmem:[%s15 + $0x8] sm:$0xf]
  %v3690 = vld [vmem:[%s15 + $0xc] sm:$0xf]
  %v3691 = vld [vmem:[%s15 + $0x10] sm:$0xf]
  %v3692 = vld [vmem:[%s15 + $0x14] sm:$0xf]
  %v3693 = vld [vmem:[%s15 + $0x18] sm:$0xf]
  %v3694 = vld [vmem:[%s15 + $0x1c] sm:$0xf]
  %v3695 = vld [vmem:[%s16] sm:$0x1]
  %v3697 = vlaneseq
  %v3698 = vshrl.u32 %v3697, 7
  %v3699 = vsub.s32 0, %v3698
  %v3700 = vrot.slane %v3695, %v3699
  %v3710 = vunpack.c.l.b16 %v3687
  %v3711 = vunpack.c.l.b16 %v3688
  %v3712 = vunpack.c.l.b16 %v3689
  %v3713 = vunpack.c.l.b16 %v3690
  %v3714 = vunpack.c.l.b16 %v3691
  %v3715 = vunpack.c.l.b16 %v3692
  %v3716 = vunpack.c.l.b16 %v3693
  %v3717 = vunpack.c.l.b16 %v3694
  %v3718 = vpack.c.b16 %v3711, %v3710
  %v3719 = vpack.c.b16 %v3713, %v3712
  %v3720 = vpack.c.b16 %v3715, %v3714
  %v3721 = vpack.c.b16 %v3717, %v3716
  %v3727 = vsel %vm3493, %v3683, 0
  %v3730 = vsel %vm3493, %v3684, 0
  %v3733 = vsel %vm3493, %v3685, 0
  %v3736 = vsel %vm3493, %v3686, 0
  %3738 = vmatprep.subr.bf16.mxu0 0
  %3739 = vmatpush1.bf16.msra.mxu0 %v3718
  %3740 = vmatprep.subr.bf16.mxu0 0
  %3741 = vmatpush1.bf16.msra.mxu0 %v3719
  %3742 = vmatprep.subr.bf16.mxu0 0
  %3743 = vmatpush1.bf16.msra.mxu0 %v3720
  %3744 = vmatprep.subr.bf16.mxu0 0
  %3745 = vmatpush1.bf16.msra.mxu0 %v3721
  %3746 = vmatprep.subr.bf16.mxu0 0
  %3747 = vmatpush1.bf16.msra.mxu0 0
  %3748 = vmatprep.subr.bf16.mxu0 0
  %3749 = vmatpush1.bf16.msra.mxu0 0
  %3750 = vmatprep.subr.bf16.mxu0 0
  %3751 = vmatpush1.bf16.msra.mxu0 0
  %3752 = vmatprep.subr.bf16.mxu0 0
  %3753 = vmatpush1.bf16.msra.mxu0 0
  %3754 = vmatprep.subr.bf16.mxu0 0
  %3755 = vmatpush1.bf16.msra.mxu0 0
  %3756 = vmatprep.subr.bf16.mxu0 0
  %3757 = vmatpush1.bf16.msra.mxu0 0
  %3758 = vmatprep.subr.bf16.mxu0 0
  %3759 = vmatpush1.bf16.msra.mxu0 0
  %3760 = vmatprep.subr.bf16.mxu0 0
  %3761 = vmatpush1.bf16.msra.mxu0 0
  %3762 = vmatprep.subr.bf16.mxu0 0
  %3763 = vmatpush1.bf16.msra.mxu0 0
  %3764 = vmatprep.subr.bf16.mxu0 0
  %3765 = vmatpush1.bf16.msra.mxu0 0
  %3766 = vmatprep.subr.bf16.mxu0 0
  %3767 = vmatpush1.bf16.msra.mxu0 0
  %3768 = vmatprep.subr.bf16.mxu0 0
  %3769 = vmatpush1.bf16.msra.mxu0 0
  %3770 = vmatprep.mubr.bf16.mxu0 0
  %3771 = vmatmul.mubr.bf16.gmra.mrb[0].mxu0 %v3727
  %v3772 = vpop.f32.mrb[0].mxu0
  %v3773 = vadd.f32 %v3700, %v3772
  %v3774 = vpop.f32.mrb[0].mxu0
  %v3775 = vpop.f32.mrb[0].mxu0
  %v3776 = vadd.f32 %v3700, %v3775
  %v3777 = vpop.f32.mrb[0].mxu0
  %3778 = vmatprep.mubr.bf16.mxu0 0
  %3779 = vmatmul.mubr.bf16.gmra.mrb[0].mxu0 %v3730
  %v3780 = vpop.f32.mrb[0].mxu0
  %v3781 = vadd.f32 %v3700, %v3780
  %v3782 = vpop.f32.mrb[0].mxu0
  %v3783 = vpop.f32.mrb[0].mxu0
  %v3784 = vadd.f32 %v3700, %v3783
  %v3785 = vpop.f32.mrb[0].mxu0
  %3786 = vmatprep.mubr.bf16.mxu0 0
  %3787 = vmatmul.mubr.bf16.gmra.mrb[0].mxu0 %v3733
  %v3788 = vpop.f32.mrb[0].mxu0
  %v3789 = vadd.f32 %v3700, %v3788
  %v3790 = vpop.f32.mrb[0].mxu0
  %v3791 = vpop.f32.mrb[0].mxu0
  %v3792 = vadd.f32 %v3700, %v3791
  %v3793 = vpop.f32.mrb[0].mxu0
  %3794 = vmatprep.mubr.bf16.mxu0 0
  %3795 = vmatmul.mubr.bf16.gmra.mrb[0].mxu0 %v3736
  %v3796 = vpop.f32.mrb[0].mxu0
  %v3797 = vadd.f32 %v3700, %v3796
  %v3798 = vpop.f32.mrb[0].mxu0
  %v3799 = vpop.f32.mrb[0].mxu0
  %v3800 = vadd.f32 %v3700, %v3799
  %v3801 = vpop.f32.mrb[0].mxu0
  %3802 = vdwg.mxu0
  %v3803 = vld [vmem:[%s17] sm:$0x1]
  %v3804 = vld [vmem:[%s18] sm:$0x1]
  %v3805 = vsel %vm479, %v3773, 0.0
  %3806 = vadd.xlane.f32.xlu0 %v3805
  %v3807 = vpop.xlane.xlu0 %3806
  %v3808 = vsel %vm479, %v3776, 0.0
  %3809 = vadd.xlane.f32.xlu0 %v3808
  %v3810 = vpop.xlane.xlu0 %3809
  %v3811 = vsel %vm479, %v3781, 0.0
  %3812 = vadd.xlane.f32.xlu0 %v3811
  %v3813 = vpop.xlane.xlu0 %3812
  %v3814 = vsel %vm479, %v3784, 0.0
  %3815 = vadd.xlane.f32.xlu0 %v3814
  %v3816 = vpop.xlane.xlu0 %3815
  %v3817 = vsel %vm479, %v3789, 0.0
  %3818 = vadd.xlane.f32.xlu0 %v3817
  %v3819 = vpop.xlane.xlu0 %3818
  %v3820 = vsel %vm479, %v3792, 0.0
  %3821 = vadd.xlane.f32.xlu0 %v3820
  %v3822 = vpop.xlane.xlu0 %3821
  %v3823 = vsel %vm479, %v3797, 0.0
  %3824 = vadd.xlane.f32.xlu0 %v3823
  %v3825 = vpop.xlane.xlu0 %3824
  %v3826 = vsel %vm479, %v3800, 0.0
  %3827 = vadd.xlane.f32.xlu0 %v3826
  %v3828 = vpop.xlane.xlu0 %3827
  %v3829 = vmul.f32 %v3807, %v504
  %v3830 = vmul.f32 %v3810, %v504
  %v3831 = vmul.f32 %v3813, %v504
  %v3832 = vmul.f32 %v3816, %v504
  %v3833 = vmul.f32 %v3819, %v504
  %v3834 = vmul.f32 %v3822, %v504
  %v3835 = vmul.f32 %v3825, %v504
  %v3836 = vmul.f32 %v3828, %v504
  %v3837 = vsub.f32 %v3773, %v3829
  %v3838 = vsub.f32 %v3776, %v3830
  %v3839 = vsub.f32 %v3781, %v3831
  %v3840 = vsub.f32 %v3784, %v3832
  %v3841 = vsub.f32 %v3789, %v3833
  %v3842 = vsub.f32 %v3792, %v3834
  %v3843 = vsub.f32 %v3797, %v3835
  %v3844 = vsub.f32 %v3800, %v3836
  %v3845 = vmul.f32 %v3837, %v3837
  %v3846 = vmul.f32 %v3838, %v3838
  %v3847 = vmul.f32 %v3839, %v3839
  %v3848 = vmul.f32 %v3840, %v3840
  %v3849 = vmul.f32 %v3841, %v3841
  %v3850 = vmul.f32 %v3842, %v3842
  %v3851 = vmul.f32 %v3843, %v3843
  %v3852 = vmul.f32 %v3844, %v3844
  %v3853 = vsel %vm479, %v3845, 0.0
  %3854 = vadd.xlane.f32.xlu0 %v3853
  %v3855 = vpop.xlane.xlu0 %3854
  %v3856 = vsel %vm479, %v3846, 0.0
  %3857 = vadd.xlane.f32.xlu0 %v3856
  %v3858 = vpop.xlane.xlu0 %3857
  %v3859 = vsel %vm479, %v3847, 0.0
  %3860 = vadd.xlane.f32.xlu0 %v3859
  %v3861 = vpop.xlane.xlu0 %3860
  %v3862 = vsel %vm479, %v3848, 0.0
  %3863 = vadd.xlane.f32.xlu0 %v3862
  %v3864 = vpop.xlane.xlu0 %3863
  %v3865 = vsel %vm479, %v3849, 0.0
  %3866 = vadd.xlane.f32.xlu0 %v3865
  %v3867 = vpop.xlane.xlu0 %3866
  %v3868 = vsel %vm479, %v3850, 0.0
  %3869 = vadd.xlane.f32.xlu0 %v3868
  %v3870 = vpop.xlane.xlu0 %3869
  %v3871 = vsel %vm479, %v3851, 0.0
  %3872 = vadd.xlane.f32.xlu0 %v3871
  %v3873 = vpop.xlane.xlu0 %3872
  %v3874 = vsel %vm479, %v3852, 0.0
  %3875 = vadd.xlane.f32.xlu0 %v3874
  %v3876 = vpop.xlane.xlu0 %3875
  %v3877 = vmul.f32 %v3855, %v504
  %v3878 = vmul.f32 %v3858, %v504
  %v3879 = vmul.f32 %v3861, %v504
  %v3880 = vmul.f32 %v3864, %v504
  %v3881 = vmul.f32 %v3867, %v504
  %v3882 = vmul.f32 %v3870, %v504
  %v3883 = vmul.f32 %v3873, %v504
  %v3884 = vmul.f32 %v3876, %v504
  %v3885 = vadd.f32 %v3877, 1e-05
  %v3886 = vadd.f32 %v3878, 1e-05
  %v3887 = vadd.f32 %v3879, 1e-05
  %v3888 = vadd.f32 %v3880, 1e-05
  %v3889 = vadd.f32 %v3881, 1e-05
  %v3890 = vadd.f32 %v3882, 1e-05
  %v3891 = vadd.f32 %v3883, 1e-05
  %v3892 = vadd.f32 %v3884, 1e-05
  %v3893 = vrsqrt.pop %v3885
  %v3894 = vrsqrt.pop %v3886
  %v3895 = vrsqrt.pop %v3887
  %v3896 = vrsqrt.pop %v3888
  %v3897 = vrsqrt.pop %v3889
  %v3898 = vrsqrt.pop %v3890
  %v3899 = vrsqrt.pop %v3891
  %v3900 = vrsqrt.pop %v3892
  %v3901 = vmul.f32 %v3837, %v3893
  %v3902 = vmul.f32 %v3838, %v3894
  %v3903 = vmul.f32 %v3839, %v3895
  %v3904 = vmul.f32 %v3840, %v3896
  %v3905 = vmul.f32 %v3841, %v3897
  %v3906 = vmul.f32 %v3842, %v3898
  %v3907 = vmul.f32 %v3843, %v3899
  %v3908 = vmul.f32 %v3844, %v3900
  %v3910 = vlaneseq
  %v3911 = vshrl.u32 %v3910, 7
  %v3912 = vsub.s32 0, %v3911
  %v3913 = vrot.slane %v3803, %v3912
  %v3915 = vmul.f32 %v3901, %v3913
  %v3916 = vmul.f32 %v3902, %v3913
  %v3917 = vmul.f32 %v3903, %v3913
  %v3918 = vmul.f32 %v3904, %v3913
  %v3919 = vmul.f32 %v3905, %v3913
  %v3920 = vmul.f32 %v3906, %v3913
  %v3921 = vmul.f32 %v3907, %v3913
  %v3922 = vmul.f32 %v3908, %v3913
  %v3924 = vlaneseq
  %v3925 = vshrl.u32 %v3924, 7
  %v3926 = vsub.s32 0, %v3925
  %v3927 = vrot.slane %v3804, %v3926
  %v3929 = vadd.f32 %v3915, %v3927
  %v3930 = vadd.f32 %v3916, %v3927
  %v3931 = vadd.f32 %v3917, %v3927
  %v3932 = vadd.f32 %v3918, %v3927
  %v3933 = vadd.f32 %v3919, %v3927
  %v3934 = vadd.f32 %v3920, %v3927
  %v3935 = vadd.f32 %v3921, %v3927
  %v3936 = vadd.f32 %v3922, %v3927
  %v3937 = vxor.u32 %v3929, 2147483648
  %v3938 = vxor.u32 %v3930, 2147483648
  %v3939 = vxor.u32 %v3931, 2147483648
  %v3940 = vxor.u32 %v3932, 2147483648
  %v3941 = vxor.u32 %v3933, 2147483648
  %v3942 = vxor.u32 %v3934, 2147483648
  %v3943 = vxor.u32 %v3935, 2147483648
  %v3944 = vxor.u32 %v3936, 2147483648
  %v3945 = vmul.f32 %v3937, 1.442695
  %v3946 = vpow.pop %v3945
  %v3947 = vmul.f32 %v3938, 1.442695
  %v3948 = vpow.pop %v3947
  %v3949 = vmul.f32 %v3939, 1.442695
  %v3950 = vpow.pop %v3949
  %v3951 = vmul.f32 %v3940, 1.442695
  %v3952 = vpow.pop %v3951
  %v3953 = vmul.f32 %v3941, 1.442695
  %v3954 = vpow.pop %v3953
  %v3955 = vmul.f32 %v3942, 1.442695
  %v3956 = vpow.pop %v3955
  %v3957 = vmul.f32 %v3943, 1.442695
  %v3958 = vpow.pop %v3957
  %v3959 = vmul.f32 %v3944, 1.442695
  %v3960 = vpow.pop %v3959
  %v3961 = vadd.f32 %v3946, 1.0
  %v3962 = vadd.f32 %v3948, 1.0
  %v3963 = vadd.f32 %v3950, 1.0
  %v3964 = vadd.f32 %v3952, 1.0
  %v3965 = vadd.f32 %v3954, 1.0
  %v3966 = vadd.f32 %v3956, 1.0
  %v3967 = vadd.f32 %v3958, 1.0
  %v3968 = vadd.f32 %v3960, 1.0
  %v3969 = vrcp.pop %v3961
  %v3970 = vmul.f32 1.0, %v3969
  %v3971 = vrcp.pop %v3962
  %v3972 = vmul.f32 1.0, %v3971
  %v3973 = vrcp.pop %v3963
  %v3974 = vmul.f32 1.0, %v3973
  %v3975 = vrcp.pop %v3964
  %v3976 = vmul.f32 1.0, %v3975
  %v3977 = vrcp.pop %v3965
  %v3978 = vmul.f32 1.0, %v3977
  %v3979 = vrcp.pop %v3966
  %v3980 = vmul.f32 1.0, %v3979
  %v3981 = vrcp.pop %v3967
  %v3982 = vmul.f32 1.0, %v3981
  %v3983 = vrcp.pop %v3968
  %v3984 = vmul.f32 1.0, %v3983
  %v3985 = vmul.f32 %v3929, %v3970
  %v3986 = vmul.f32 %v3930, %v3972
  %v3987 = vmul.f32 %v3931, %v3974
  %v3988 = vmul.f32 %v3932, %v3976
  %v3989 = vmul.f32 %v3933, %v3978
  %v3990 = vmul.f32 %v3934, %v3980
  %v3991 = vmul.f32 %v3935, %v3982
  %v3992 = vmul.f32 %v3936, %v3984
  %v3993 = vpack.c.bf16 %v3986, %v3985
  %v3994 = vpack.c.bf16 %v3988, %v3987
  %v3995 = vpack.c.bf16 %v3990, %v3989
  %v3996 = vpack.c.bf16 %v3992, %v3991
  %v3997 = vld [vmem:[%s19] sm:$0xf]
  %v3998 = vld [vmem:[%s19 + $0x4] sm:$0xf]
  %v3999 = vld [vmem:[%s19 + $0x8] sm:$0xf]
  %v4000 = vld [vmem:[%s19 + $0xc] sm:$0xf]
  %v4001 = vld [vmem:[%s20] sm:$0x1]
  %v4003 = vlaneseq
  %v4004 = vshrl.u32 %v4003, 7
  %v4005 = vsub.s32 0, %v4004
  %v4006 = vrot.slane %v4001, %v4005
  %v4012 = vunpack.c.l.b16 %v3997
  %v4013 = vunpack.c.l.b16 %v3998
  %v4014 = vunpack.c.l.b16 %v3999
  %v4015 = vunpack.c.l.b16 %v4000
  %v4016 = vpack.c.b16 %v4013, %v4012
  %v4017 = vpack.c.b16 %v4015, %v4014
  %v4021 = vsel %vm479, %v3993, 0
  %v4024 = vsel %vm479, %v3994, 0
  %v4027 = vsel %vm479, %v3995, 0
  %v4030 = vsel %vm479, %v3996, 0
  %4032 = vmatprep.subr.bf16.mxu0 0
  %4033 = vmatpush1.bf16.msra.mxu0 %v4016
  %4034 = vmatprep.subr.bf16.mxu0 0
  %4035 = vmatpush1.bf16.msra.mxu0 %v4017
  %4036 = vmatprep.subr.bf16.mxu0 0
  %4037 = vmatpush1.bf16.msra.mxu0 0
  %4038 = vmatprep.subr.bf16.mxu0 0
  %4039 = vmatpush1.bf16.msra.mxu0 0
  %4040 = vmatprep.subr.bf16.mxu0 0
  %4041 = vmatpush1.bf16.msra.mxu0 0
  %4042 = vmatprep.subr.bf16.mxu0 0
  %4043 = vmatpush1.bf16.msra.mxu0 0
  %4044 = vmatprep.subr.bf16.mxu0 0
  %4045 = vmatpush1.bf16.msra.mxu0 0
  %4046 = vmatprep.subr.bf16.mxu0 0
  %4047 = vmatpush1.bf16.msra.mxu0 0
  %4048 = vmatprep.subr.bf16.mxu0 0
  %4049 = vmatpush1.bf16.msra.mxu0 0
  %4050 = vmatprep.subr.bf16.mxu0 0
  %4051 = vmatpush1.bf16.msra.mxu0 0
  %4052 = vmatprep.subr.bf16.mxu0 0
  %4053 = vmatpush1.bf16.msra.mxu0 0
  %4054 = vmatprep.subr.bf16.mxu0 0
  %4055 = vmatpush1.bf16.msra.mxu0 0
  %4056 = vmatprep.subr.bf16.mxu0 0
  %4057 = vmatpush1.bf16.msra.mxu0 0
  %4058 = vmatprep.subr.bf16.mxu0 0
  %4059 = vmatpush1.bf16.msra.mxu0 0
  %4060 = vmatprep.subr.bf16.mxu0 0
  %4061 = vmatpush1.bf16.msra.mxu0 0
  %4062 = vmatprep.subr.bf16.mxu0 0
  %4063 = vmatpush1.bf16.msra.mxu0 0
  %4064 = vmatprep.mubr.bf16.mxu0 0
  %4065 = vmatmul.mubr.bf16.gmra.mrb[0].mxu0 %v4021
  %v4066 = vpop.f32.mrb[0].mxu0
  %v4067 = vadd.f32 %v4006, %v4066
  %v4068 = vpop.f32.mrb[0].mxu0
  %v4069 = vpop.f32.mrb[0].mxu0
  %v4070 = vadd.f32 %v4006, %v4069
  %v4071 = vpop.f32.mrb[0].mxu0
  %4072 = vmatprep.mubr.bf16.mxu0 0
  %4073 = vmatmul.mubr.bf16.gmra.mrb[0].mxu0 %v4024
  %v4074 = vpop.f32.mrb[0].mxu0
  %v4075 = vadd.f32 %v4006, %v4074
  %v4076 = vpop.f32.mrb[0].mxu0
  %v4077 = vpop.f32.mrb[0].mxu0
  %v4078 = vadd.f32 %v4006, %v4077
  %v4079 = vpop.f32.mrb[0].mxu0
  %4080 = vmatprep.mubr.bf16.mxu0 0
  %4081 = vmatmul.mubr.bf16.gmra.mrb[0].mxu0 %v4027
  %v4082 = vpop.f32.mrb[0].mxu0
  %v4083 = vadd.f32 %v4006, %v4082
  %v4084 = vpop.f32.mrb[0].mxu0
  %v4085 = vpop.f32.mrb[0].mxu0
  %v4086 = vadd.f32 %v4006, %v4085
  %v4087 = vpop.f32.mrb[0].mxu0
  %4088 = vmatprep.mubr.bf16.mxu0 0
  %4089 = vmatmul.mubr.bf16.gmra.mrb[0].mxu0 %v4030
  %v4090 = vpop.f32.mrb[0].mxu0
  %v4091 = vadd.f32 %v4006, %v4090
  %v4092 = vpop.f32.mrb[0].mxu0
  %v4093 = vpop.f32.mrb[0].mxu0
  %v4094 = vadd.f32 %v4006, %v4093
  %v4095 = vpop.f32.mrb[0].mxu0
  %4096 = vdwg.mxu0
  %4097 = vst [vmem:[%s21] sm:$0xff] %v4067
  %4098 = vst [vmem:[%s21 + $0x8] sm:$0xff] %v4070
  %4099 = vst [vmem:[%s21 + $0x10] sm:$0xff] %v4075
  %4100 = vst [vmem:[%s21 + $0x18] sm:$0xff] %v4078
  %4101 = vst [vmem:[%s21 + $0x20] sm:$0xff] %v4083
  %4102 = vst [vmem:[%s21 + $0x28] sm:$0xff] %v4086
  %4103 = vst [vmem:[%s21 + $0x30] sm:$0xff] %v4091
  %4104 = vst [vmem:[%s21 + $0x38] sm:$0xff] %v4094
  // Predicated region
  $region86: #{self_supervised_forward.1} parent=0 // pred_check
    _
  $region87: #{self_supervised_forward.1} parent=0 // pred_check_branch
    %4106 = sbr.rel (0) target = $region89
  $region88: #{self_supervised_forward.1} parent=0 // pred_region
    _
  $region89: #{self_supervised_forward.1} parent=0 // pred_fallthru
    _
  // Predicated region
  $region90: #{self_supervised_forward.1} parent=0 // pred_check
    _
  $region91: #{self_supervised_forward.1} parent=0 // pred_check_branch
    %4108 = sbr.rel (0) target = $region93
  $region92: #{self_supervised_forward.1} parent=0 // pred_region
    _
  $region93: #{self_supervised_forward.1} parent=0 // pred_fallthru
    _

</llo_original>
